<compile_context>
chip_gen: v5e
topology: v5e:2x2
jax: 0.10.0
libtpu: 0.0.40
codegen_flags: <defaults>
</compile_context>

<pallas_src>
import numpy as np
import jax
import jax.numpy as jnp
from jax import lax
from jax.experimental import pallas as pl
from jax.experimental.pallas import tpu as pltpu

DIMENSION = 4   # dim of the chemical state x
HIDDEN = 50     # hidden width used by both sub-networks
LANES = 128     # lane width used for all padded slabs / activations


# ---------------------------------------------------------------------------
# elementwise / matmul helpers
# ---------------------------------------------------------------------------
def _sp(z):  # numerically-stable softplus (matches nn.Softplus)
    return jnp.maximum(z, 0.0) + jnp.log1p(jnp.exp(-jnp.abs(z)))


def _sig(z):  # softplus'
    return 1.0 / (1.0 + jnp.exp(-z))


def _mm(a, b):  # kernel matmul: default precision (single-pass bf16 MXU, f32 accum)
    return jnp.dot(a, b, preferred_element_type=jnp.float32)


def _mm_hi(a, b):  # reference-only matmul: full f32 precision
    return jnp.dot(a, b, preferred_element_type=jnp.float32,
                   precision=lax.Precision.HIGHEST)


def _round_up(n, m):
    return ((n + m - 1) // m) * m


# ---------------------------------------------------------------------------
# Pallas kernel: whole GradientDynamics forward in one VMEM-resident kernel.
# Every activation is a (TILE_B, 128) f32 slab; padded lanes of any value that can carry
# garbage (softplus of 0) only ever hit zero rows of the weight slabs, and every gradient
# slab has exact zeros in its padded lanes, so the padding is mathematically inert.
# ---------------------------------------------------------------------------
def _make_kernel(off):
    def w(pref, name):                       # point-of-use weight-slab load
        r, n = off[name]
        return pref[r:r + n, :]

    def b(pref, name):                       # (1, 128) bias row
        r, _ = off[name]
        return pref[r:r + 1, :]

    def kernel(x_ref, p_ref, o_ref):
        xa = x_ref[...]                      # (TB, 128): lanes 0..3 = x, rest 0

        # ---------------- EntropyNetwork forward ----------------
        z = _mm(xa, w(p_ref, "S_e_in")) + b(p_ref, "b_e_in")
        zs = [z]
        h = -_sp(z)
        for k in range(1, 5):
            z = (_mm(jnp.concatenate([h, xa], axis=1), w(p_ref, f"S_e{k}"))
                 + b(p_ref, f"b_e{k}"))      # prop + lateral + both biases, one matmul
            zs.append(z)
            h = -_sp(z)
        z6 = (_mm(jnp.concatenate([h, xa], axis=1), w(p_ref, "S_e_out"))
              + b(p_ref, "b_e_out"))[:, 0:1]             # (TB, 1)

        # ---------------- x_star = d(sum S)/dx (manual backprop) ----------------
        eh = w(p_ref, "bw_e_heads")          # row0 = e_out_w.T, row1 = e_lout_w.T
        g6 = -_sig(z6)                       # (TB, 1)
        gh = g6 * eh[0:1, :]                 # grad wrt h5, lanes 0..49
        gx = g6 * eh[1:2, :]                 # grad wrt x,  lanes 0..3
        for k in range(4, 0, -1):
            g = gh * (-_sig(zs[k]))
            gx = gx + _mm(g, w(p_ref, f"BL_e{k}"))        # pre-transposed lateral
            gh = _mm(g, w(p_ref, f"BP_e{k}"))             # pre-transposed prop
        g = gh * (-_sig(zs[0]))
        xs = gx + _mm(g, w(p_ref, "B_e_in"))              # x_star in lanes 0..3 (rest = 0)

        # ---------------- DissipationNetwork (PICNN) forward ----------------
        u1 = _mm(xa, w(p_ref, "D_clinm")) + b(p_ref, "b_clinm")
        zy = (_mm(jnp.concatenate([xa, xs * u1], axis=1), w(p_ref, "D_y1"))
              + b(p_ref, "b_xl1"))
        zys, ss, ts = [zy], [], []
        y = _sp(zy)
        h = _sp(_mm(xa, w(p_ref, "D_xin")) + b(p_ref, "b_xin"))
        for k in range(1, 5):
            s_k = _sp(_mm(h, w(p_ref, f"D_cpm{k}")) + b(p_ref, f"b_cpm{k}"))
            t_k = _mm(h, w(p_ref, f"D_clm{k}")) + b(p_ref, f"b_clm{k}")
            zy = (_mm(jnp.concatenate([h, y * s_k, xs * t_k], axis=1),
                      w(p_ref, f"D_zy{k}"))               # xl + cp + cl fused (K = 384)
                  + b(p_ref, f"b_xl{k + 1}"))
            y = _sp(zy)
            h = _sp(_mm(h, w(p_ref, f"D_xp{k}")) + b(p_ref, f"b_xp{k}"))
            zys.append(zy); ss.append(s_k); ts.append(t_k)
        s_o = _sp(_mm(h, w(p_ref, "D_cpmo")) + b(p_ref, "b_cpmo"))
        t_o = _mm(h, w(p_ref, "D_clmo")) + b(p_ref, "b_clmo")
        z_out = (_mm(jnp.concatenate([h, y * s_o, xs * t_o], axis=1),
                     w(p_ref, "D_out"))
                 + b(p_ref, "b_xlo"))[:, 0:1]             # (TB, 1)
        xi = _sp(z_out)

        # ---------------- x_dot = d(sum Xi)/dx_star (manual backprop) ----------------
        dh = w(p_ref, "bw_d_heads")          # row0 = d_cpo_w.T, row1 = d_clo_w.T
        go = _sig(z_out)
        gxs = (go * dh[1:2, :]) * t_o
        g_y = (go * dh[0:1, :]) * s_o
        for k in range(4, 0, -1):
            g_zy = g_y * _sig(zys[k])
            gxs = gxs + _mm(g_zy, w(p_ref, f"BT_cl{k}")) * ts[k - 1]
            g_y = _mm(g_zy, w(p_ref, f"BT_cp{k}")) * ss[k - 1]
        g_zy = g_y * _sig(zys[0])
        gxs = gxs + _mm(g_zy, w(p_ref, "BT_clin")) * u1   # x_dot in lanes 0..3

        # lane-dense output slab: lanes 0..3 = x_dot, lane 4 = Xi, lanes 5..127 = 0
        lane = lax.broadcasted_iota(jnp.int32, gxs.shape, 1)
        o_ref[...] = gxs + jnp.where(lane == 4, xi, 0.0)

    return kernel


# ---------------------------------------------------------------------------
# wrapper: batch grid, single packed-parameter input, lane-dense in/out blocks
# ---------------------------------------------------------------------------
def gradient_dynamics(packed, offsets, x, *, max_tile_b=256):
    # max_tile_b = 256 keeps params (~4 MiB) + saved activations well under v7x's 64 MiB
    # VMEM; it can be raised on v5e/v6e (128 MiB) for very large batches.
    B = x.shape[0]
    assert x.shape[1] == DIMENSION
    tb = min(max_tile_b, _round_up(B, 8))
    Bp = _round_up(B, tb)
    xa = jnp.zeros((Bp, LANES), jnp.float32).at[:B, :DIMENSION].set(
        x.astype(jnp.float32))
    n_rows = packed.shape[0]

    out = pl.pallas_call(
        _make_kernel(offsets),
        out_shape=jax.ShapeDtypeStruct((Bp, LANES), jnp.float32),
        grid=(Bp // tb,),
        in_specs=[
            pl.BlockSpec((tb, LANES), lambda i: (i, 0)),        # x tile (lane-dense)
            pl.BlockSpec((n_rows, LANES), lambda i: (0, 0)),    # packed params, resident
        ],
        out_specs=pl.BlockSpec((tb, LANES), lambda i: (i, 0)),  # lane-dense output slab
        compiler_params=pltpu.CompilerParams(
            dimension_semantics=("parallel",),                  # shard batch over TCs (v7x)
            vmem_limit_bytes=48 * 1024 * 1024),
    )(xa, packed)

    x_dot = out[:B, :DIMENSION]
    # torch returns Xi with shape (B, 1, 1) because the input is stacked along dim=1.
    xi = out[:B, 4:5].reshape(B, 1, 1)
    return [xi, x_dot]


# ---------------------------------------------------------------------------
# host-side packing of every parameter into one (rows, 128) zero-padded f32 buffer
# ---------------------------------------------------------------------------
def pack_params(params):
    p = {k: np.asarray(v, np.float32) for k, v in params.items()}
    slabs, offsets, row = [], {}, [0]

    def add(name, placements, nrows):
        slab = np.zeros((nrows, LANES), np.float32)
        for mat, ro, co in placements:
            r, c = mat.shape
            slab[ro:ro + r, co:co + c] = mat
        offsets[name] = (row[0], nrows)
        slabs.append(slab)
        row[0] += nrows

    # ---- EntropyNetwork forward ----
    add("S_e_in", [(p["e_win_w"], 0, 0)], 128)
    add("b_e_in", [(p["e_win_b"], 0, 0)], 8)
    for k in range(1, 5):
        add(f"S_e{k}", [(p[f"e_p{k}_w"], 0, 0), (p[f"e_l{k}_w"], 128, 0)], 256)
        add(f"b_e{k}", [(p[f"e_p{k}_b"] + p[f"e_l{k}_b"], 0, 0)], 8)
    add("S_e_out", [(p["e_out_w"], 0, 0), (p["e_lout_w"], 128, 0)], 256)
    add("b_e_out", [(p["e_out_b"] + p["e_lout_b"], 0, 0)], 8)
    # ---- EntropyNetwork backward (pre-transposed) ----
    add("bw_e_heads", [(p["e_out_w"].T, 0, 0), (p["e_lout_w"].T, 1, 0)], 8)
    for k in range(1, 5):
        add(f"BL_e{k}", [(p[f"e_l{k}_w"].T, 0, 0)], 128)
        add(f"BP_e{k}", [(p[f"e_p{k}_w"].T, 0, 0)], 128)
    add("B_e_in", [(p["e_win_w"].T, 0, 0)], 128)
    # ---- DissipationNetwork forward ----
    add("D_clinm", [(p["d_clinm_w"], 0, 0)], 128)
    add("b_clinm", [(p["d_clinm_b"], 0, 0)], 8)
    add("D_y1", [(p["d_xl1_w"], 0, 0), (p["d_clin_w"], 128, 0)], 256)
    add("b_xl1", [(p["d_xl1_b"], 0, 0)], 8)
    add("D_xin", [(p["d_xin_w"], 0, 0)], 128)
    add("b_xin", [(p["d_xin_b"], 0, 0)], 8)
    for k in range(1, 5):
        add(f"D_cpm{k}", [(p[f"d_cpm{k}_w"], 0, 0)], 128)
        add(f"b_cpm{k}", [(p[f"d_cpm{k}_b"], 0, 0)], 8)
        add(f"D_clm{k}", [(p[f"d_clm{k}_w"], 0, 0)], 128)
        add(f"b_clm{k}", [(p[f"d_clm{k}_b"], 0, 0)], 8)
        add(f"D_zy{k}", [(p[f"d_xl{k + 1}_w"], 0, 0),
                         (p[f"d_cp{k}_w"], 128, 0),
                         (p[f"d_cl{k}_w"], 256, 0)], 384)
        add(f"b_xl{k + 1}", [(p[f"d_xl{k + 1}_b"], 0, 0)], 8)
        add(f"D_xp{k}", [(p[f"d_xp{k}_w"], 0, 0)], 128)
        add(f"b_xp{k}", [(p[f"d_xp{k}_b"], 0, 0)], 8)
    add("D_cpmo", [(p["d_cpmo_w"], 0, 0)], 128)
    add("b_cpmo", [(p["d_cpmo_b"], 0, 0)], 8)
    add("D_clmo", [(p["d_clmo_w"], 0, 0)], 128)
    add("b_clmo", [(p["d_clmo_b"], 0, 0)], 8)
    add("D_out", [(p["d_xlo_w"], 0, 0), (p["d_cpo_w"], 128, 0),
                  (p["d_clo_w"], 256, 0)], 384)
    add("b_xlo", [(p["d_xlo_b"], 0, 0)], 8)
    # ---- DissipationNetwork backward (pre-transposed) ----
    add("bw_d_heads", [(p["d_cpo_w"].T, 0, 0), (p["d_clo_w"].T, 1, 0)], 8)
    for k in range(1, 5):
        add(f"BT_cl{k}", [(p[f"d_cl{k}_w"].T, 0, 0)], 128)
        add(f"BT_cp{k}", [(p[f"d_cp{k}_w"].T, 0, 0)], 128)
    add("BT_clin", [(p["d_clin_w"].T, 0, 0)], 128)

    packed = jnp.asarray(np.concatenate(slabs, axis=0))
    return packed, offsets


# ---------------------------------------------------------------------------
# deterministic parameter construction (torch nn.Linear default-style init)
# ---------------------------------------------------------------------------
def _linear(key, fan_in, fan_out, bias=True):
    bound = 1.0 / np.sqrt(fan_in)
    kw, kb = jax.random.split(key)
    w = jax.random.uniform(kw, (fan_in, fan_out), jnp.float32, -bound, bound)
    if bias:
        bvec = jax.random.uniform(kb, (1, fan_out), jnp.float32, -bound, bound)
        return w, bvec
    return (w,)


def make_params(key):
    D, H = DIMENSION, HIDDEN
    specs = {}
    # EntropyNetwork (layers actually used by forward)
    specs["e_win"] = (D, H, True)
    for k in range(1, 5):
        specs[f"e_p{k}"] = (H, H, True)
        specs[f"e_l{k}"] = (D, H, True)
    specs["e_out"] = (H, 1, True)
    specs["e_lout"] = (D, 1, True)
    # DissipationNetwork
    specs["d_xin"] = (D, H, True)
    for k in range(1, 5):
        specs[f"d_xp{k}"] = (H, H, True)
    specs["d_xl1"] = (D, H, True)
    for k in range(2, 6):
        specs[f"d_xl{k}"] = (H, H, True)
    specs["d_xlo"] = (H, 1, True)
    for k in range(1, 5):
        specs[f"d_cp{k}"] = (H, H, False)
        specs[f"d_cpm{k}"] = (H, H, True)
        specs[f"d_cl{k}"] = (D, H, False)
        specs[f"d_clm{k}"] = (H, D, True)
    specs["d_cpo"] = (H, 1, False)
    specs["d_cpmo"] = (H, H, True)
    specs["d_clin"] = (D, H, False)
    specs["d_clo"] = (D, 1, False)
    specs["d_clinm"] = (D, D, True)
    specs["d_clmo"] = (H, D, True)

    params = {}
    for i, (name, (fi, fo, bias)) in enumerate(sorted(specs.items())):
        sub = jax.random.fold_in(key, i)
        out = _linear(sub, fi, fo, bias)
        params[name + "_w"] = out[0]
        if bias:
            params[name + "_b"] = out[1]
    return params


# ---------------------------------------------------------------------------
# pure-JAX float32 reference (reproduces the torch autograd.grad semantics)
# ---------------------------------------------------------------------------
def entropy_value_ref(p, x):
    z = _mm_hi(x, p["e_win_w"]) + p["e_win_b"]
    h = -_sp(z)
    for k in range(1, 5):
        z = (_mm_hi(h, p[f"e_p{k}_w"]) + p[f"e_p{k}_b"]
             + _mm_hi(x, p[f"e_l{k}_w"]) + p[f"e_l{k}_b"])
        h = -_sp(z)
    z6 = (_mm_hi(h, p["e_out_w"]) + p["e_out_b"]
          + _mm_hi(x, p["e_lout_w"]) + p["e_lout_b"])
    return -_sp(z6)


def xi_value_ref(p, x, xs):
    u1 = _mm_hi(x, p["d_clinm_w"]) + p["d_clinm_b"]
    zy = _mm_hi(x, p["d_xl1_w"]) + p["d_xl1_b"] + _mm_hi(xs * u1, p["d_clin_w"])
    y = _sp(zy)
    h = _sp(_mm_hi(x, p["d_xin_w"]) + p["d_xin_b"])
    for k in range(1, 5):
        s_k = _sp(_mm_hi(h, p[f"d_cpm{k}_w"]) + p[f"d_cpm{k}_b"])
        t_k = _mm_hi(h, p[f"d_clm{k}_w"]) + p[f"d_clm{k}_b"]
        zy = (_mm_hi(h, p[f"d_xl{k + 1}_w"]) + p[f"d_xl{k + 1}_b"]
              + _mm_hi(y * s_k, p[f"d_cp{k}_w"])
              + _mm_hi(xs * t_k, p[f"d_cl{k}_w"]))
        y = _sp(zy)
        h = _sp(_mm_hi(h, p[f"d_xp{k}_w"]) + p[f"d_xp{k}_b"])
    s_o = _sp(_mm_hi(h, p["d_cpmo_w"]) + p["d_cpmo_b"])
    t_o = _mm_hi(h, p["d_clmo_w"]) + p["d_clmo_b"]
    z_out = (_mm_hi(h, p["d_xlo_w"]) + p["d_xlo_b"]
             + _mm_hi(y * s_o, p["d_cpo_w"])
             + _mm_hi(xs * t_o, p["d_clo_w"]))
    return _sp(z_out)


# ---------------------------------------------------------------------------
if __name__ == "__main__":
    B = 8
    key = jax.random.PRNGKey(0)
    params = make_params(key)
    x = jax.random.uniform(jax.random.fold_in(key, 10_000),
                           (B, DIMENSION), jnp.float32, 0.1, 1.0)

    packed, offsets = pack_params(params)
    xi, x_dot = gradient_dynamics(packed, offsets, x)
    jax.block_until_ready((xi, x_dot))

    # float32 reference reproducing the torch autograd.grad semantics
    x_star_ref = jax.grad(lambda xx: jnp.sum(entropy_value_ref(params, xx)))(x)
    xi_ref = xi_value_ref(params, x, x_star_ref)
    x_dot_ref = jax.grad(lambda xs_: jnp.sum(xi_value_ref(params, x, xs_)))(x_star_ref)

    # Tolerance sized for single-pass-bf16 MXU matmuls (Precision.DEFAULT) inside the
    # kernel vs. a Precision.HIGHEST f32 reference, propagated through 12 stacked layers
    # and two manual backprops; genuine structural/packing errors would be orders of
    # magnitude larger than this.
    np.testing.assert_allclose(np.asarray(xi).reshape(B, 1), np.asarray(xi_ref),
                               rtol=3e-2, atol=2e-2)
    np.testing.assert_allclose(np.asarray(x_dot), np.asarray(x_dot_ref),
                               rtol=3e-2, atol=2e-2)
    print("KERNEL_OK")
</pallas_src>

<mosaic_0001>
module attributes {stable_mosaic.version = 11 : i64} {
  func.func @kernel(%arg0: i32, %arg1: memref<8x128xf32, #tpu.memory_space<vmem>>, %arg2: memref<8176x128xf32, #tpu.memory_space<vmem>>, %arg3: memref<8x128xf32, #tpu.memory_space<vmem>>) attributes {dimension_semantics = [#tpu.dimension_semantics<parallel>], iteration_bounds = array<i64: 1>, scalar_prefetch = 0 : i64, scratch_operands = 0 : i64, tpu.core_type = #tpu.core_type<tc>, window_params = [{transform_indices = @transform_0, window_bounds = array<i64: 8, 128>}, {pipeline_mode = #tpu.pipeline_mode<synchronous>, transform_indices = @transform_1, window_bounds = array<i64: 8176, 128>}, {transform_indices = @transform_2, window_bounds = array<i64: 8, 128>}]} {
    %c0 = arith.constant 0 : index
    %c0_0 = arith.constant 0 : index
    %0 = vector.load %arg1[%c0, %c0_0] : memref<8x128xf32, #tpu.memory_space<vmem>>, vector<8x128xf32>
    %c0_1 = arith.constant 0 : index
    %c0_2 = arith.constant 0 : index
    %1 = vector.load %arg2[%c0_1, %c0_2] : memref<8176x128xf32, #tpu.memory_space<vmem>>, vector<128x128xf32>
    %cst = arith.constant dense<0.000000e+00> : vector<8x128xf32>
    %2 = tpu.matmul %0, %1, %cst {dimension_numbers = #tpu.dot_dimension_numbers<[1], [0], [0], [1], [0, 0, 1, 1], [], []>} : vector<8x128xf32>, vector<128x128xf32>, vector<8x128xf32> -> vector<8x128xf32>
    %c128 = arith.constant 128 : index
    %c0_3 = arith.constant 0 : index
    %3 = vector.load %arg2[%c128, %c0_3] : memref<8176x128xf32, #tpu.memory_space<vmem>>, vector<1x128xf32>
    %4 = vector.broadcast %3 : vector<1x128xf32> to vector<8x128xf32>
    %5 = arith.addf %2, %4 : vector<8x128xf32>
    %cst_4 = arith.constant 0.000000e+00 : f32
    %6 = vector.broadcast %cst_4 : f32 to vector<8x128xf32>
    %7 = arith.maximumf %5, %6 : vector<8x128xf32>
    %8 = math.absf %5 : vector<8x128xf32>
    %cst_5 = arith.constant 0.000000e+00 : f32
    %9 = vector.broadcast %cst_5 : f32 to vector<8x128xf32>
    %10 = arith.subf %9, %8 : vector<8x128xf32>
    %11 = math.exp %10 : vector<8x128xf32>
    %12 = math.log1p %11 : vector<8x128xf32>
    %13 = arith.addf %7, %12 : vector<8x128xf32>
    %cst_6 = arith.constant 0.000000e+00 : f32
    %14 = vector.broadcast %cst_6 : f32 to vector<8x128xf32>
    %15 = arith.subf %14, %13 : vector<8x128xf32>
    %16 = tpu.concatenate %15, %0 in 1 : vector<8x128xf32>, vector<8x128xf32> -> vector<8x256xf32>
    %c136 = arith.constant 136 : index
    %c0_7 = arith.constant 0 : index
    %17 = vector.load %arg2[%c136, %c0_7] : memref<8176x128xf32, #tpu.memory_space<vmem>>, vector<256x128xf32>
    %cst_8 = arith.constant dense<0.000000e+00> : vector<8x128xf32>
    %18 = tpu.matmul %16, %17, %cst_8 {dimension_numbers = #tpu.dot_dimension_numbers<[1], [0], [0], [1], [0, 0, 1, 1], [], []>} : vector<8x256xf32>, vector<256x128xf32>, vector<8x128xf32> -> vector<8x128xf32>
    %c392 = arith.constant 392 : index
    %c0_9 = arith.constant 0 : index
    %19 = vector.load %arg2[%c392, %c0_9] : memref<8176x128xf32, #tpu.memory_space<vmem>>, vector<1x128xf32>
    %20 = vector.broadcast %19 : vector<1x128xf32> to vector<8x128xf32>
    %21 = arith.addf %18, %20 : vector<8x128xf32>
    %cst_10 = arith.constant 0.000000e+00 : f32
    %22 = vector.broadcast %cst_10 : f32 to vector<8x128xf32>
    %23 = arith.maximumf %21, %22 : vector<8x128xf32>
    %24 = math.absf %21 : vector<8x128xf32>
    %cst_11 = arith.constant 0.000000e+00 : f32
    %25 = vector.broadcast %cst_11 : f32 to vector<8x128xf32>
    %26 = arith.subf %25, %24 : vector<8x128xf32>
    %27 = math.exp %26 : vector<8x128xf32>
    %28 = math.log1p %27 : vector<8x128xf32>
    %29 = arith.addf %23, %28 : vector<8x128xf32>
    %cst_12 = arith.constant 0.000000e+00 : f32
    %30 = vector.broadcast %cst_12 : f32 to vector<8x128xf32>
    %31 = arith.subf %30, %29 : vector<8x128xf32>
    %32 = tpu.concatenate %31, %0 in 1 : vector<8x128xf32>, vector<8x128xf32> -> vector<8x256xf32>
    %c400 = arith.constant 400 : index
    %c0_13 = arith.constant 0 : index
    %33 = vector.load %arg2[%c400, %c0_13] : memref<8176x128xf32, #tpu.memory_space<vmem>>, vector<256x128xf32>
    %cst_14 = arith.constant dense<0.000000e+00> : vector<8x128xf32>
    %34 = tpu.matmul %32, %33, %cst_14 {dimension_numbers = #tpu.dot_dimension_numbers<[1], [0], [0], [1], [0, 0, 1, 1], [], []>} : vector<8x256xf32>, vector<256x128xf32>, vector<8x128xf32> -> vector<8x128xf32>
    %c656 = arith.constant 656 : index
    %c0_15 = arith.constant 0 : index
    %35 = vector.load %arg2[%c656, %c0_15] : memref<8176x128xf32, #tpu.memory_space<vmem>>, vector<1x128xf32>
    %36 = vector.broadcast %35 : vector<1x128xf32> to vector<8x128xf32>
    %37 = arith.addf %34, %36 : vector<8x128xf32>
    %cst_16 = arith.constant 0.000000e+00 : f32
    %38 = vector.broadcast %cst_16 : f32 to vector<8x128xf32>
    %39 = arith.maximumf %37, %38 : vector<8x128xf32>
    %40 = math.absf %37 : vector<8x128xf32>
    %cst_17 = arith.constant 0.000000e+00 : f32
    %41 = vector.broadcast %cst_17 : f32 to vector<8x128xf32>
    %42 = arith.subf %41, %40 : vector<8x128xf32>
    %43 = math.exp %42 : vector<8x128xf32>
    %44 = math.log1p %43 : vector<8x128xf32>
    %45 = arith.addf %39, %44 : vector<8x128xf32>
    %cst_18 = arith.constant 0.000000e+00 : f32
    %46 = vector.broadcast %cst_18 : f32 to vector<8x128xf32>
    %47 = arith.subf %46, %45 : vector<8x128xf32>
    %48 = tpu.concatenate %47, %0 in 1 : vector<8x128xf32>, vector<8x128xf32> -> vector<8x256xf32>
    %c664 = arith.constant 664 : index
    %c0_19 = arith.constant 0 : index
    %49 = vector.load %arg2[%c664, %c0_19] : memref<8176x128xf32, #tpu.memory_space<vmem>>, vector<256x128xf32>
    %cst_20 = arith.constant dense<0.000000e+00> : vector<8x128xf32>
    %50 = tpu.matmul %48, %49, %cst_20 {dimension_numbers = #tpu.dot_dimension_numbers<[1], [0], [0], [1], [0, 0, 1, 1], [], []>} : vector<8x256xf32>, vector<256x128xf32>, vector<8x128xf32> -> vector<8x128xf32>
    %c920 = arith.constant 920 : index
    %c0_21 = arith.constant 0 : index
    %51 = vector.load %arg2[%c920, %c0_21] : memref<8176x128xf32, #tpu.memory_space<vmem>>, vector<1x128xf32>
    %52 = vector.broadcast %51 : vector<1x128xf32> to vector<8x128xf32>
    %53 = arith.addf %50, %52 : vector<8x128xf32>
    %cst_22 = arith.constant 0.000000e+00 : f32
    %54 = vector.broadcast %cst_22 : f32 to vector<8x128xf32>
    %55 = arith.maximumf %53, %54 : vector<8x128xf32>
    %56 = math.absf %53 : vector<8x128xf32>
    %cst_23 = arith.constant 0.000000e+00 : f32
    %57 = vector.broadcast %cst_23 : f32 to vector<8x128xf32>
    %58 = arith.subf %57, %56 : vector<8x128xf32>
    %59 = math.exp %58 : vector<8x128xf32>
    %60 = math.log1p %59 : vector<8x128xf32>
    %61 = arith.addf %55, %60 : vector<8x128xf32>
    %cst_24 = arith.constant 0.000000e+00 : f32
    %62 = vector.broadcast %cst_24 : f32 to vector<8x128xf32>
    %63 = arith.subf %62, %61 : vector<8x128xf32>
    %64 = tpu.concatenate %63, %0 in 1 : vector<8x128xf32>, vector<8x128xf32> -> vector<8x256xf32>
    %c928 = arith.constant 928 : index
    %c0_25 = arith.constant 0 : index
    %65 = vector.load %arg2[%c928, %c0_25] : memref<8176x128xf32, #tpu.memory_space<vmem>>, vector<256x128xf32>
    %cst_26 = arith.constant dense<0.000000e+00> : vector<8x128xf32>
    %66 = tpu.matmul %64, %65, %cst_26 {dimension_numbers = #tpu.dot_dimension_numbers<[1], [0], [0], [1], [0, 0, 1, 1], [], []>} : vector<8x256xf32>, vector<256x128xf32>, vector<8x128xf32> -> vector<8x128xf32>
    %c1184 = arith.constant 1184 : index
    %c0_27 = arith.constant 0 : index
    %67 = vector.load %arg2[%c1184, %c0_27] : memref<8176x128xf32, #tpu.memory_space<vmem>>, vector<1x128xf32>
    %68 = vector.broadcast %67 : vector<1x128xf32> to vector<8x128xf32>
    %69 = arith.addf %66, %68 : vector<8x128xf32>
    %cst_28 = arith.constant 0.000000e+00 : f32
    %70 = vector.broadcast %cst_28 : f32 to vector<8x128xf32>
    %71 = arith.maximumf %69, %70 : vector<8x128xf32>
    %72 = math.absf %69 : vector<8x128xf32>
    %cst_29 = arith.constant 0.000000e+00 : f32
    %73 = vector.broadcast %cst_29 : f32 to vector<8x128xf32>
    %74 = arith.subf %73, %72 : vector<8x128xf32>
    %75 = math.exp %74 : vector<8x128xf32>
    %76 = math.log1p %75 : vector<8x128xf32>
    %77 = arith.addf %71, %76 : vector<8x128xf32>
    %cst_30 = arith.constant 0.000000e+00 : f32
    %78 = vector.broadcast %cst_30 : f32 to vector<8x128xf32>
    %79 = arith.subf %78, %77 : vector<8x128xf32>
    %80 = tpu.concatenate %79, %0 in 1 : vector<8x128xf32>, vector<8x128xf32> -> vector<8x256xf32>
    %c1192 = arith.constant 1192 : index
    %c0_31 = arith.constant 0 : index
    %81 = vector.load %arg2[%c1192, %c0_31] : memref<8176x128xf32, #tpu.memory_space<vmem>>, vector<256x128xf32>
    %cst_32 = arith.constant dense<0.000000e+00> : vector<8x128xf32>
    %82 = tpu.matmul %80, %81, %cst_32 {dimension_numbers = #tpu.dot_dimension_numbers<[1], [0], [0], [1], [0, 0, 1, 1], [], []>} : vector<8x256xf32>, vector<256x128xf32>, vector<8x128xf32> -> vector<8x128xf32>
    %c1448 = arith.constant 1448 : index
    %c0_33 = arith.constant 0 : index
    %83 = vector.load %arg2[%c1448, %c0_33] : memref<8176x128xf32, #tpu.memory_space<vmem>>, vector<1x128xf32>
    %84 = vector.broadcast %83 : vector<1x128xf32> to vector<8x128xf32>
    %85 = arith.addf %82, %84 : vector<8x128xf32>
    %86 = vector.extract_strided_slice %85 {offsets = [0, 0], sizes = [8, 1], strides = [1, 1]} : vector<8x128xf32> to vector<8x1xf32>
    %c1456 = arith.constant 1456 : index
    %c0_34 = arith.constant 0 : index
    %87 = vector.load %arg2[%c1456, %c0_34] : memref<8176x128xf32, #tpu.memory_space<vmem>>, vector<8x128xf32>
    %cst_35 = arith.constant 0.000000e+00 : f32
    %88 = vector.broadcast %cst_35 : f32 to vector<8x1xf32>
    %89 = arith.subf %88, %86 : vector<8x1xf32>
    %90 = math.exp %89 : vector<8x1xf32>
    %cst_36 = arith.constant 1.000000e+00 : f32
    %91 = vector.broadcast %cst_36 : f32 to vector<8x1xf32>
    %92 = arith.addf %91, %90 : vector<8x1xf32>
    %cst_37 = arith.constant 1.000000e+00 : f32
    %93 = vector.broadcast %cst_37 : f32 to vector<8x1xf32>
    %94 = arith.divf %93, %92 : vector<8x1xf32>
    %cst_38 = arith.constant 0.000000e+00 : f32
    %95 = vector.broadcast %cst_38 : f32 to vector<8x1xf32>
    %96 = arith.subf %95, %94 : vector<8x1xf32>
    %97 = vector.extract_strided_slice %87 {offsets = [0, 0], sizes = [1, 128], strides = [1, 1]} : vector<8x128xf32> to vector<1x128xf32>
    %98 = vector.broadcast %96 : vector<8x1xf32> to vector<8x128xf32>
    %99 = vector.broadcast %97 : vector<1x128xf32> to vector<8x128xf32>
    %100 = arith.mulf %98, %99 : vector<8x128xf32>
    %101 = vector.extract_strided_slice %87 {offsets = [1, 0], sizes = [1, 128], strides = [1, 1]} : vector<8x128xf32> to vector<1x128xf32>
    %102 = vector.broadcast %96 : vector<8x1xf32> to vector<8x128xf32>
    %103 = vector.broadcast %101 : vector<1x128xf32> to vector<8x128xf32>
    %104 = arith.mulf %102, %103 : vector<8x128xf32>
    %cst_39 = arith.constant 0.000000e+00 : f32
    %105 = vector.broadcast %cst_39 : f32 to vector<8x128xf32>
    %106 = arith.subf %105, %69 : vector<8x128xf32>
    %107 = math.exp %106 : vector<8x128xf32>
    %cst_40 = arith.constant 1.000000e+00 : f32
    %108 = vector.broadcast %cst_40 : f32 to vector<8x128xf32>
    %109 = arith.addf %108, %107 : vector<8x128xf32>
    %cst_41 = arith.constant 1.000000e+00 : f32
    %110 = vector.broadcast %cst_41 : f32 to vector<8x128xf32>
    %111 = arith.divf %110, %109 : vector<8x128xf32>
    %cst_42 = arith.constant 0.000000e+00 : f32
    %112 = vector.broadcast %cst_42 : f32 to vector<8x128xf32>
    %113 = arith.subf %112, %111 : vector<8x128xf32>
    %114 = arith.mulf %100, %113 : vector<8x128xf32>
    %c2232 = arith.constant 2232 : index
    %c0_43 = arith.constant 0 : index
    %115 = vector.load %arg2[%c2232, %c0_43] : memref<8176x128xf32, #tpu.memory_space<vmem>>, vector<128x128xf32>
    %cst_44 = arith.constant dense<0.000000e+00> : vector<8x128xf32>
    %116 = tpu.matmul %114, %115, %cst_44 {dimension_numbers = #tpu.dot_dimension_numbers<[1], [0], [0], [1], [0, 0, 1, 1], [], []>} : vector<8x128xf32>, vector<128x128xf32>, vector<8x128xf32> -> vector<8x128xf32>
    %117 = arith.addf %104, %116 : vector<8x128xf32>
    %c2360 = arith.constant 2360 : index
    %c0_45 = arith.constant 0 : index
    %118 = vector.load %arg2[%c2360, %c0_45] : memref<8176x128xf32, #tpu.memory_space<vmem>>, vector<128x128xf32>
    %cst_46 = arith.constant dense<0.000000e+00> : vector<8x128xf32>
    %119 = tpu.matmul %114, %118, %cst_46 {dimension_numbers = #tpu.dot_dimension_numbers<[1], [0], [0], [1], [0, 0, 1, 1], [], []>} : vector<8x128xf32>, vector<128x128xf32>, vector<8x128xf32> -> vector<8x128xf32>
    %cst_47 = arith.constant 0.000000e+00 : f32
    %120 = vector.broadcast %cst_47 : f32 to vector<8x128xf32>
    %121 = arith.subf %120, %53 : vector<8x128xf32>
    %122 = math.exp %121 : vector<8x128xf32>
    %cst_48 = arith.constant 1.000000e+00 : f32
    %123 = vector.broadcast %cst_48 : f32 to vector<8x128xf32>
    %124 = arith.addf %123, %122 : vector<8x128xf32>
    %cst_49 = arith.constant 1.000000e+00 : f32
    %125 = vector.broadcast %cst_49 : f32 to vector<8x128xf32>
    %126 = arith.divf %125, %124 : vector<8x128xf32>
    %cst_50 = arith.constant 0.000000e+00 : f32
    %127 = vector.broadcast %cst_50 : f32 to vector<8x128xf32>
    %128 = arith.subf %127, %126 : vector<8x128xf32>
    %129 = arith.mulf %119, %128 : vector<8x128xf32>
    %c1976 = arith.constant 1976 : index
    %c0_51 = arith.constant 0 : index
    %130 = vector.load %arg2[%c1976, %c0_51] : memref<8176x128xf32, #tpu.memory_space<vmem>>, vector<128x128xf32>
    %cst_52 = arith.constant dense<0.000000e+00> : vector<8x128xf32>
    %131 = tpu.matmul %129, %130, %cst_52 {dimension_numbers = #tpu.dot_dimension_numbers<[1], [0], [0], [1], [0, 0, 1, 1], [], []>} : vector<8x128xf32>, vector<128x128xf32>, vector<8x128xf32> -> vector<8x128xf32>
    %132 = arith.addf %117, %131 : vector<8x128xf32>
    %c2104 = arith.constant 2104 : index
    %c0_53 = arith.constant 0 : index
    %133 = vector.load %arg2[%c2104, %c0_53] : memref<8176x128xf32, #tpu.memory_space<vmem>>, vector<128x128xf32>
    %cst_54 = arith.constant dense<0.000000e+00> : vector<8x128xf32>
    %134 = tpu.matmul %129, %133, %cst_54 {dimension_numbers = #tpu.dot_dimension_numbers<[1], [0], [0], [1], [0, 0, 1, 1], [], []>} : vector<8x128xf32>, vector<128x128xf32>, vector<8x128xf32> -> vector<8x128xf32>
    %cst_55 = arith.constant 0.000000e+00 : f32
    %135 = vector.broadcast %cst_55 : f32 to vector<8x128xf32>
    %136 = arith.subf %135, %37 : vector<8x128xf32>
    %137 = math.exp %136 : vector<8x128xf32>
    %cst_56 = arith.constant 1.000000e+00 : f32
    %138 = vector.broadcast %cst_56 : f32 to vector<8x128xf32>
    %139 = arith.addf %138, %137 : vector<8x128xf32>
    %cst_57 = arith.constant 1.000000e+00 : f32
    %140 = vector.broadcast %cst_57 : f32 to vector<8x128xf32>
    %141 = arith.divf %140, %139 : vector<8x128xf32>
    %cst_58 = arith.constant 0.000000e+00 : f32
    %142 = vector.broadcast %cst_58 : f32 to vector<8x128xf32>
    %143 = arith.subf %142, %141 : vector<8x128xf32>
    %144 = arith.mulf %134, %143 : vector<8x128xf32>
    %c1720 = arith.constant 1720 : index
    %c0_59 = arith.constant 0 : index
    %145 = vector.load %arg2[%c1720, %c0_59] : memref<8176x128xf32, #tpu.memory_space<vmem>>, vector<128x128xf32>
    %cst_60 = arith.constant dense<0.000000e+00> : vector<8x128xf32>
    %146 = tpu.matmul %144, %145, %cst_60 {dimension_numbers = #tpu.dot_dimension_numbers<[1], [0], [0], [1], [0, 0, 1, 1], [], []>} : vector<8x128xf32>, vector<128x128xf32>, vector<8x128xf32> -> vector<8x128xf32>
    %147 = arith.addf %132, %146 : vector<8x128xf32>
    %c1848 = arith.constant 1848 : index
    %c0_61 = arith.constant 0 : index
    %148 = vector.load %arg2[%c1848, %c0_61] : memref<8176x128xf32, #tpu.memory_space<vmem>>, vector<128x128xf32>
    %cst_62 = arith.constant dense<0.000000e+00> : vector<8x128xf32>
    %149 = tpu.matmul %144, %148, %cst_62 {dimension_numbers = #tpu.dot_dimension_numbers<[1], [0], [0], [1], [0, 0, 1, 1], [], []>} : vector<8x128xf32>, vector<128x128xf32>, vector<8x128xf32> -> vector<8x128xf32>
    %cst_63 = arith.constant 0.000000e+00 : f32
    %150 = vector.broadcast %cst_63 : f32 to vector<8x128xf32>
    %151 = arith.subf %150, %21 : vector<8x128xf32>
    %152 = math.exp %151 : vector<8x128xf32>
    %cst_64 = arith.constant 1.000000e+00 : f32
    %153 = vector.broadcast %cst_64 : f32 to vector<8x128xf32>
    %154 = arith.addf %153, %152 : vector<8x128xf32>
    %cst_65 = arith.constant 1.000000e+00 : f32
    %155 = vector.broadcast %cst_65 : f32 to vector<8x128xf32>
    %156 = arith.divf %155, %154 : vector<8x128xf32>
    %cst_66 = arith.constant 0.000000e+00 : f32
    %157 = vector.broadcast %cst_66 : f32 to vector<8x128xf32>
    %158 = arith.subf %157, %156 : vector<8x128xf32>
    %159 = arith.mulf %149, %158 : vector<8x128xf32>
    %c1464 = arith.constant 1464 : index
    %c0_67 = arith.constant 0 : index
    %160 = vector.load %arg2[%c1464, %c0_67] : memref<8176x128xf32, #tpu.memory_space<vmem>>, vector<128x128xf32>
    %cst_68 = arith.constant dense<0.000000e+00> : vector<8x128xf32>
    %161 = tpu.matmul %159, %160, %cst_68 {dimension_numbers = #tpu.dot_dimension_numbers<[1], [0], [0], [1], [0, 0, 1, 1], [], []>} : vector<8x128xf32>, vector<128x128xf32>, vector<8x128xf32> -> vector<8x128xf32>
    %162 = arith.addf %147, %161 : vector<8x128xf32>
    %c1592 = arith.constant 1592 : index
    %c0_69 = arith.constant 0 : index
    %163 = vector.load %arg2[%c1592, %c0_69] : memref<8176x128xf32, #tpu.memory_space<vmem>>, vector<128x128xf32>
    %cst_70 = arith.constant dense<0.000000e+00> : vector<8x128xf32>
    %164 = tpu.matmul %159, %163, %cst_70 {dimension_numbers = #tpu.dot_dimension_numbers<[1], [0], [0], [1], [0, 0, 1, 1], [], []>} : vector<8x128xf32>, vector<128x128xf32>, vector<8x128xf32> -> vector<8x128xf32>
    %cst_71 = arith.constant 0.000000e+00 : f32
    %165 = vector.broadcast %cst_71 : f32 to vector<8x128xf32>
    %166 = arith.subf %165, %5 : vector<8x128xf32>
    %167 = math.exp %166 : vector<8x128xf32>
    %cst_72 = arith.constant 1.000000e+00 : f32
    %168 = vector.broadcast %cst_72 : f32 to vector<8x128xf32>
    %169 = arith.addf %168, %167 : vector<8x128xf32>
    %cst_73 = arith.constant 1.000000e+00 : f32
    %170 = vector.broadcast %cst_73 : f32 to vector<8x128xf32>
    %171 = arith.divf %170, %169 : vector<8x128xf32>
    %cst_74 = arith.constant 0.000000e+00 : f32
    %172 = vector.broadcast %cst_74 : f32 to vector<8x128xf32>
    %173 = arith.subf %172, %171 : vector<8x128xf32>
    %174 = arith.mulf %164, %173 : vector<8x128xf32>
    %c2488 = arith.constant 2488 : index
    %c0_75 = arith.constant 0 : index
    %175 = vector.load %arg2[%c2488, %c0_75] : memref<8176x128xf32, #tpu.memory_space<vmem>>, vector<128x128xf32>
    %cst_76 = arith.constant dense<0.000000e+00> : vector<8x128xf32>
    %176 = tpu.matmul %174, %175, %cst_76 {dimension_numbers = #tpu.dot_dimension_numbers<[1], [0], [0], [1], [0, 0, 1, 1], [], []>} : vector<8x128xf32>, vector<128x128xf32>, vector<8x128xf32> -> vector<8x128xf32>
    %177 = arith.addf %162, %176 : vector<8x128xf32>
    %c2616 = arith.constant 2616 : index
    %c0_77 = arith.constant 0 : index
    %178 = vector.load %arg2[%c2616, %c0_77] : memref<8176x128xf32, #tpu.memory_space<vmem>>, vector<128x128xf32>
    %cst_78 = arith.constant dense<0.000000e+00> : vector<8x128xf32>
    %179 = tpu.matmul %0, %178, %cst_78 {dimension_numbers = #tpu.dot_dimension_numbers<[1], [0], [0], [1], [0, 0, 1, 1], [], []>} : vector<8x128xf32>, vector<128x128xf32>, vector<8x128xf32> -> vector<8x128xf32>
    %c2744 = arith.constant 2744 : index
    %c0_79 = arith.constant 0 : index
    %180 = vector.load %arg2[%c2744, %c0_79] : memref<8176x128xf32, #tpu.memory_space<vmem>>, vector<1x128xf32>
    %181 = vector.broadcast %180 : vector<1x128xf32> to vector<8x128xf32>
    %182 = arith.addf %179, %181 : vector<8x128xf32>
    %183 = arith.mulf %177, %182 : vector<8x128xf32>
    %184 = tpu.concatenate %0, %183 in 1 : vector<8x128xf32>, vector<8x128xf32> -> vector<8x256xf32>
    %c2752 = arith.constant 2752 : index
    %c0_80 = arith.constant 0 : index
    %185 = vector.load %arg2[%c2752, %c0_80] : memref<8176x128xf32, #tpu.memory_space<vmem>>, vector<256x128xf32>
    %cst_81 = arith.constant dense<0.000000e+00> : vector<8x128xf32>
    %186 = tpu.matmul %184, %185, %cst_81 {dimension_numbers = #tpu.dot_dimension_numbers<[1], [0], [0], [1], [0, 0, 1, 1], [], []>} : vector<8x256xf32>, vector<256x128xf32>, vector<8x128xf32> -> vector<8x128xf32>
    %c3008 = arith.constant 3008 : index
    %c0_82 = arith.constant 0 : index
    %187 = vector.load %arg2[%c3008, %c0_82] : memref<8176x128xf32, #tpu.memory_space<vmem>>, vector<1x128xf32>
    %188 = vector.broadcast %187 : vector<1x128xf32> to vector<8x128xf32>
    %189 = arith.addf %186, %188 : vector<8x128xf32>
    %cst_83 = arith.constant 0.000000e+00 : f32
    %190 = vector.broadcast %cst_83 : f32 to vector<8x128xf32>
    %191 = arith.maximumf %189, %190 : vector<8x128xf32>
    %192 = math.absf %189 : vector<8x128xf32>
    %cst_84 = arith.constant 0.000000e+00 : f32
    %193 = vector.broadcast %cst_84 : f32 to vector<8x128xf32>
    %194 = arith.subf %193, %192 : vector<8x128xf32>
    %195 = math.exp %194 : vector<8x128xf32>
    %196 = math.log1p %195 : vector<8x128xf32>
    %197 = arith.addf %191, %196 : vector<8x128xf32>
    %c3016 = arith.constant 3016 : index
    %c0_85 = arith.constant 0 : index
    %198 = vector.load %arg2[%c3016, %c0_85] : memref<8176x128xf32, #tpu.memory_space<vmem>>, vector<128x128xf32>
    %cst_86 = arith.constant dense<0.000000e+00> : vector<8x128xf32>
    %199 = tpu.matmul %0, %198, %cst_86 {dimension_numbers = #tpu.dot_dimension_numbers<[1], [0], [0], [1], [0, 0, 1, 1], [], []>} : vector<8x128xf32>, vector<128x128xf32>, vector<8x128xf32> -> vector<8x128xf32>
    %c3144 = arith.constant 3144 : index
    %c0_87 = arith.constant 0 : index
    %200 = vector.load %arg2[%c3144, %c0_87] : memref<8176x128xf32, #tpu.memory_space<vmem>>, vector<1x128xf32>
    %201 = vector.broadcast %200 : vector<1x128xf32> to vector<8x128xf32>
    %202 = arith.addf %199, %201 : vector<8x128xf32>
    %cst_88 = arith.constant 0.000000e+00 : f32
    %203 = vector.broadcast %cst_88 : f32 to vector<8x128xf32>
    %204 = arith.maximumf %202, %203 : vector<8x128xf32>
    %205 = math.absf %202 : vector<8x128xf32>
    %cst_89 = arith.constant 0.000000e+00 : f32
    %206 = vector.broadcast %cst_89 : f32 to vector<8x128xf32>
    %207 = arith.subf %206, %205 : vector<8x128xf32>
    %208 = math.exp %207 : vector<8x128xf32>
    %209 = math.log1p %208 : vector<8x128xf32>
    %210 = arith.addf %204, %209 : vector<8x128xf32>
    %c3152 = arith.constant 3152 : index
    %c0_90 = arith.constant 0 : index
    %211 = vector.load %arg2[%c3152, %c0_90] : memref<8176x128xf32, #tpu.memory_space<vmem>>, vector<128x128xf32>
    %cst_91 = arith.constant dense<0.000000e+00> : vector<8x128xf32>
    %212 = tpu.matmul %210, %211, %cst_91 {dimension_numbers = #tpu.dot_dimension_numbers<[1], [0], [0], [1], [0, 0, 1, 1], [], []>} : vector<8x128xf32>, vector<128x128xf32>, vector<8x128xf32> -> vector<8x128xf32>
    %c3280 = arith.constant 3280 : index
    %c0_92 = arith.constant 0 : index
    %213 = vector.load %arg2[%c3280, %c0_92] : memref<8176x128xf32, #tpu.memory_space<vmem>>, vector<1x128xf32>
    %214 = vector.broadcast %213 : vector<1x128xf32> to vector<8x128xf32>
    %215 = arith.addf %212, %214 : vector<8x128xf32>
    %cst_93 = arith.constant 0.000000e+00 : f32
    %216 = vector.broadcast %cst_93 : f32 to vector<8x128xf32>
    %217 = arith.maximumf %215, %216 : vector<8x128xf32>
    %218 = math.absf %215 : vector<8x128xf32>
    %cst_94 = arith.constant 0.000000e+00 : f32
    %219 = vector.broadcast %cst_94 : f32 to vector<8x128xf32>
    %220 = arith.subf %219, %218 : vector<8x128xf32>
    %221 = math.exp %220 : vector<8x128xf32>
    %222 = math.log1p %221 : vector<8x128xf32>
    %223 = arith.addf %217, %222 : vector<8x128xf32>
    %c3288 = arith.constant 3288 : index
    %c0_95 = arith.constant 0 : index
    %224 = vector.load %arg2[%c3288, %c0_95] : memref<8176x128xf32, #tpu.memory_space<vmem>>, vector<128x128xf32>
    %cst_96 = arith.constant dense<0.000000e+00> : vector<8x128xf32>
    %225 = tpu.matmul %210, %224, %cst_96 {dimension_numbers = #tpu.dot_dimension_numbers<[1], [0], [0], [1], [0, 0, 1, 1], [], []>} : vector<8x128xf32>, vector<128x128xf32>, vector<8x128xf32> -> vector<8x128xf32>
    %c3416 = arith.constant 3416 : index
    %c0_97 = arith.constant 0 : index
    %226 = vector.load %arg2[%c3416, %c0_97] : memref<8176x128xf32, #tpu.memory_space<vmem>>, vector<1x128xf32>
    %227 = vector.broadcast %226 : vector<1x128xf32> to vector<8x128xf32>
    %228 = arith.addf %225, %227 : vector<8x128xf32>
    %229 = arith.mulf %197, %223 : vector<8x128xf32>
    %230 = arith.mulf %177, %228 : vector<8x128xf32>
    %231 = tpu.concatenate %210, %229, %230 in 1 : vector<8x128xf32>, vector<8x128xf32>, vector<8x128xf32> -> vector<8x384xf32>
    %c3424 = arith.constant 3424 : index
    %c0_98 = arith.constant 0 : index
    %232 = vector.load %arg2[%c3424, %c0_98] : memref<8176x128xf32, #tpu.memory_space<vmem>>, vector<384x128xf32>
    %cst_99 = arith.constant dense<0.000000e+00> : vector<8x128xf32>
    %233 = tpu.matmul %231, %232, %cst_99 {dimension_numbers = #tpu.dot_dimension_numbers<[1], [0], [0], [1], [0, 0, 1, 1], [], []>} : vector<8x384xf32>, vector<384x128xf32>, vector<8x128xf32> -> vector<8x128xf32>
    %c3808 = arith.constant 3808 : index
    %c0_100 = arith.constant 0 : index
    %234 = vector.load %arg2[%c3808, %c0_100] : memref<8176x128xf32, #tpu.memory_space<vmem>>, vector<1x128xf32>
    %235 = vector.broadcast %234 : vector<1x128xf32> to vector<8x128xf32>
    %236 = arith.addf %233, %235 : vector<8x128xf32>
    %cst_101 = arith.constant 0.000000e+00 : f32
    %237 = vector.broadcast %cst_101 : f32 to vector<8x128xf32>
    %238 = arith.maximumf %236, %237 : vector<8x128xf32>
    %239 = math.absf %236 : vector<8x128xf32>
    %cst_102 = arith.constant 0.000000e+00 : f32
    %240 = vector.broadcast %cst_102 : f32 to vector<8x128xf32>
    %241 = arith.subf %240, %239 : vector<8x128xf32>
    %242 = math.exp %241 : vector<8x128xf32>
    %243 = math.log1p %242 : vector<8x128xf32>
    %244 = arith.addf %238, %243 : vector<8x128xf32>
    %c3816 = arith.constant 3816 : index
    %c0_103 = arith.constant 0 : index
    %245 = vector.load %arg2[%c3816, %c0_103] : memref<8176x128xf32, #tpu.memory_space<vmem>>, vector<128x128xf32>
    %cst_104 = arith.constant dense<0.000000e+00> : vector<8x128xf32>
    %246 = tpu.matmul %210, %245, %cst_104 {dimension_numbers = #tpu.dot_dimension_numbers<[1], [0], [0], [1], [0, 0, 1, 1], [], []>} : vector<8x128xf32>, vector<128x128xf32>, vector<8x128xf32> -> vector<8x128xf32>
    %c3944 = arith.constant 3944 : index
    %c0_105 = arith.constant 0 : index
    %247 = vector.load %arg2[%c3944, %c0_105] : memref<8176x128xf32, #tpu.memory_space<vmem>>, vector<1x128xf32>
    %248 = vector.broadcast %247 : vector<1x128xf32> to vector<8x128xf32>
    %249 = arith.addf %246, %248 : vector<8x128xf32>
    %cst_106 = arith.constant 0.000000e+00 : f32
    %250 = vector.broadcast %cst_106 : f32 to vector<8x128xf32>
    %251 = arith.maximumf %249, %250 : vector<8x128xf32>
    %252 = math.absf %249 : vector<8x128xf32>
    %cst_107 = arith.constant 0.000000e+00 : f32
    %253 = vector.broadcast %cst_107 : f32 to vector<8x128xf32>
    %254 = arith.subf %253, %252 : vector<8x128xf32>
    %255 = math.exp %254 : vector<8x128xf32>
    %256 = math.log1p %255 : vector<8x128xf32>
    %257 = arith.addf %251, %256 : vector<8x128xf32>
    %c3952 = arith.constant 3952 : index
    %c0_108 = arith.constant 0 : index
    %258 = vector.load %arg2[%c3952, %c0_108] : memref<8176x128xf32, #tpu.memory_space<vmem>>, vector<128x128xf32>
    %cst_109 = arith.constant dense<0.000000e+00> : vector<8x128xf32>
    %259 = tpu.matmul %257, %258, %cst_109 {dimension_numbers = #tpu.dot_dimension_numbers<[1], [0], [0], [1], [0, 0, 1, 1], [], []>} : vector<8x128xf32>, vector<128x128xf32>, vector<8x128xf32> -> vector<8x128xf32>
    %c4080 = arith.constant 4080 : index
    %c0_110 = arith.constant 0 : index
    %260 = vector.load %arg2[%c4080, %c0_110] : memref<8176x128xf32, #tpu.memory_space<vmem>>, vector<1x128xf32>
    %261 = vector.broadcast %260 : vector<1x128xf32> to vector<8x128xf32>
    %262 = arith.addf %259, %261 : vector<8x128xf32>
    %cst_111 = arith.constant 0.000000e+00 : f32
    %263 = vector.broadcast %cst_111 : f32 to vector<8x128xf32>
    %264 = arith.maximumf %262, %263 : vector<8x128xf32>
    %265 = math.absf %262 : vector<8x128xf32>
    %cst_112 = arith.constant 0.000000e+00 : f32
    %266 = vector.broadcast %cst_112 : f32 to vector<8x128xf32>
    %267 = arith.subf %266, %265 : vector<8x128xf32>
    %268 = math.exp %267 : vector<8x128xf32>
    %269 = math.log1p %268 : vector<8x128xf32>
    %270 = arith.addf %264, %269 : vector<8x128xf32>
    %c4088 = arith.constant 4088 : index
    %c0_113 = arith.constant 0 : index
    %271 = vector.load %arg2[%c4088, %c0_113] : memref<8176x128xf32, #tpu.memory_space<vmem>>, vector<128x128xf32>
    %cst_114 = arith.constant dense<0.000000e+00> : vector<8x128xf32>
    %272 = tpu.matmul %257, %271, %cst_114 {dimension_numbers = #tpu.dot_dimension_numbers<[1], [0], [0], [1], [0, 0, 1, 1], [], []>} : vector<8x128xf32>, vector<128x128xf32>, vector<8x128xf32> -> vector<8x128xf32>
    %c4216 = arith.constant 4216 : index
    %c0_115 = arith.constant 0 : index
    %273 = vector.load %arg2[%c4216, %c0_115] : memref<8176x128xf32, #tpu.memory_space<vmem>>, vector<1x128xf32>
    %274 = vector.broadcast %273 : vector<1x128xf32> to vector<8x128xf32>
    %275 = arith.addf %272, %274 : vector<8x128xf32>
    %276 = arith.mulf %244, %270 : vector<8x128xf32>
    %277 = arith.mulf %177, %275 : vector<8x128xf32>
    %278 = tpu.concatenate %257, %276, %277 in 1 : vector<8x128xf32>, vector<8x128xf32>, vector<8x128xf32> -> vector<8x384xf32>
    %c4224 = arith.constant 4224 : index
    %c0_116 = arith.constant 0 : index
    %279 = vector.load %arg2[%c4224, %c0_116] : memref<8176x128xf32, #tpu.memory_space<vmem>>, vector<384x128xf32>
    %cst_117 = arith.constant dense<0.000000e+00> : vector<8x128xf32>
    %280 = tpu.matmul %278, %279, %cst_117 {dimension_numbers = #tpu.dot_dimension_numbers<[1], [0], [0], [1], [0, 0, 1, 1], [], []>} : vector<8x384xf32>, vector<384x128xf32>, vector<8x128xf32> -> vector<8x128xf32>
    %c4608 = arith.constant 4608 : index
    %c0_118 = arith.constant 0 : index
    %281 = vector.load %arg2[%c4608, %c0_118] : memref<8176x128xf32, #tpu.memory_space<vmem>>, vector<1x128xf32>
    %282 = vector.broadcast %281 : vector<1x128xf32> to vector<8x128xf32>
    %283 = arith.addf %280, %282 : vector<8x128xf32>
    %cst_119 = arith.constant 0.000000e+00 : f32
    %284 = vector.broadcast %cst_119 : f32 to vector<8x128xf32>
    %285 = arith.maximumf %283, %284 : vector<8x128xf32>
    %286 = math.absf %283 : vector<8x128xf32>
    %cst_120 = arith.constant 0.000000e+00 : f32
    %287 = vector.broadcast %cst_120 : f32 to vector<8x128xf32>
    %288 = arith.subf %287, %286 : vector<8x128xf32>
    %289 = math.exp %288 : vector<8x128xf32>
    %290 = math.log1p %289 : vector<8x128xf32>
    %291 = arith.addf %285, %290 : vector<8x128xf32>
    %c4616 = arith.constant 4616 : index
    %c0_121 = arith.constant 0 : index
    %292 = vector.load %arg2[%c4616, %c0_121] : memref<8176x128xf32, #tpu.memory_space<vmem>>, vector<128x128xf32>
    %cst_122 = arith.constant dense<0.000000e+00> : vector<8x128xf32>
    %293 = tpu.matmul %257, %292, %cst_122 {dimension_numbers = #tpu.dot_dimension_numbers<[1], [0], [0], [1], [0, 0, 1, 1], [], []>} : vector<8x128xf32>, vector<128x128xf32>, vector<8x128xf32> -> vector<8x128xf32>
    %c4744 = arith.constant 4744 : index
    %c0_123 = arith.constant 0 : index
    %294 = vector.load %arg2[%c4744, %c0_123] : memref<8176x128xf32, #tpu.memory_space<vmem>>, vector<1x128xf32>
    %295 = vector.broadcast %294 : vector<1x128xf32> to vector<8x128xf32>
    %296 = arith.addf %293, %295 : vector<8x128xf32>
    %cst_124 = arith.constant 0.000000e+00 : f32
    %297 = vector.broadcast %cst_124 : f32 to vector<8x128xf32>
    %298 = arith.maximumf %296, %297 : vector<8x128xf32>
    %299 = math.absf %296 : vector<8x128xf32>
    %cst_125 = arith.constant 0.000000e+00 : f32
    %300 = vector.broadcast %cst_125 : f32 to vector<8x128xf32>
    %301 = arith.subf %300, %299 : vector<8x128xf32>
    %302 = math.exp %301 : vector<8x128xf32>
    %303 = math.log1p %302 : vector<8x128xf32>
    %304 = arith.addf %298, %303 : vector<8x128xf32>
    %c4752 = arith.constant 4752 : index
    %c0_126 = arith.constant 0 : index
    %305 = vector.load %arg2[%c4752, %c0_126] : memref<8176x128xf32, #tpu.memory_space<vmem>>, vector<128x128xf32>
    %cst_127 = arith.constant dense<0.000000e+00> : vector<8x128xf32>
    %306 = tpu.matmul %304, %305, %cst_127 {dimension_numbers = #tpu.dot_dimension_numbers<[1], [0], [0], [1], [0, 0, 1, 1], [], []>} : vector<8x128xf32>, vector<128x128xf32>, vector<8x128xf32> -> vector<8x128xf32>
    %c4880 = arith.constant 4880 : index
    %c0_128 = arith.constant 0 : index
    %307 = vector.load %arg2[%c4880, %c0_128] : memref<8176x128xf32, #tpu.memory_space<vmem>>, vector<1x128xf32>
    %308 = vector.broadcast %307 : vector<1x128xf32> to vector<8x128xf32>
    %309 = arith.addf %306, %308 : vector<8x128xf32>
    %cst_129 = arith.constant 0.000000e+00 : f32
    %310 = vector.broadcast %cst_129 : f32 to vector<8x128xf32>
    %311 = arith.maximumf %309, %310 : vector<8x128xf32>
    %312 = math.absf %309 : vector<8x128xf32>
    %cst_130 = arith.constant 0.000000e+00 : f32
    %313 = vector.broadcast %cst_130 : f32 to vector<8x128xf32>
    %314 = arith.subf %313, %312 : vector<8x128xf32>
    %315 = math.exp %314 : vector<8x128xf32>
    %316 = math.log1p %315 : vector<8x128xf32>
    %317 = arith.addf %311, %316 : vector<8x128xf32>
    %c4888 = arith.constant 4888 : index
    %c0_131 = arith.constant 0 : index
    %318 = vector.load %arg2[%c4888, %c0_131] : memref<8176x128xf32, #tpu.memory_space<vmem>>, vector<128x128xf32>
    %cst_132 = arith.constant dense<0.000000e+00> : vector<8x128xf32>
    %319 = tpu.matmul %304, %318, %cst_132 {dimension_numbers = #tpu.dot_dimension_numbers<[1], [0], [0], [1], [0, 0, 1, 1], [], []>} : vector<8x128xf32>, vector<128x128xf32>, vector<8x128xf32> -> vector<8x128xf32>
    %c5016 = arith.constant 5016 : index
    %c0_133 = arith.constant 0 : index
    %320 = vector.load %arg2[%c5016, %c0_133] : memref<8176x128xf32, #tpu.memory_space<vmem>>, vector<1x128xf32>
    %321 = vector.broadcast %320 : vector<1x128xf32> to vector<8x128xf32>
    %322 = arith.addf %319, %321 : vector<8x128xf32>
    %323 = arith.mulf %291, %317 : vector<8x128xf32>
    %324 = arith.mulf %177, %322 : vector<8x128xf32>
    %325 = tpu.concatenate %304, %323, %324 in 1 : vector<8x128xf32>, vector<8x128xf32>, vector<8x128xf32> -> vector<8x384xf32>
    %c5024 = arith.constant 5024 : index
    %c0_134 = arith.constant 0 : index
    %326 = vector.load %arg2[%c5024, %c0_134] : memref<8176x128xf32, #tpu.memory_space<vmem>>, vector<384x128xf32>
    %cst_135 = arith.constant dense<0.000000e+00> : vector<8x128xf32>
    %327 = tpu.matmul %325, %326, %cst_135 {dimension_numbers = #tpu.dot_dimension_numbers<[1], [0], [0], [1], [0, 0, 1, 1], [], []>} : vector<8x384xf32>, vector<384x128xf32>, vector<8x128xf32> -> vector<8x128xf32>
    %c5408 = arith.constant 5408 : index
    %c0_136 = arith.constant 0 : index
    %328 = vector.load %arg2[%c5408, %c0_136] : memref<8176x128xf32, #tpu.memory_space<vmem>>, vector<1x128xf32>
    %329 = vector.broadcast %328 : vector<1x128xf32> to vector<8x128xf32>
    %330 = arith.addf %327, %329 : vector<8x128xf32>
    %cst_137 = arith.constant 0.000000e+00 : f32
    %331 = vector.broadcast %cst_137 : f32 to vector<8x128xf32>
    %332 = arith.maximumf %330, %331 : vector<8x128xf32>
    %333 = math.absf %330 : vector<8x128xf32>
    %cst_138 = arith.constant 0.000000e+00 : f32
    %334 = vector.broadcast %cst_138 : f32 to vector<8x128xf32>
    %335 = arith.subf %334, %333 : vector<8x128xf32>
    %336 = math.exp %335 : vector<8x128xf32>
    %337 = math.log1p %336 : vector<8x128xf32>
    %338 = arith.addf %332, %337 : vector<8x128xf32>
    %c5416 = arith.constant 5416 : index
    %c0_139 = arith.constant 0 : index
    %339 = vector.load %arg2[%c5416, %c0_139] : memref<8176x128xf32, #tpu.memory_space<vmem>>, vector<128x128xf32>
    %cst_140 = arith.constant dense<0.000000e+00> : vector<8x128xf32>
    %340 = tpu.matmul %304, %339, %cst_140 {dimension_numbers = #tpu.dot_dimension_numbers<[1], [0], [0], [1], [0, 0, 1, 1], [], []>} : vector<8x128xf32>, vector<128x128xf32>, vector<8x128xf32> -> vector<8x128xf32>
    %c5544 = arith.constant 5544 : index
    %c0_141 = arith.constant 0 : index
    %341 = vector.load %arg2[%c5544, %c0_141] : memref<8176x128xf32, #tpu.memory_space<vmem>>, vector<1x128xf32>
    %342 = vector.broadcast %341 : vector<1x128xf32> to vector<8x128xf32>
    %343 = arith.addf %340, %342 : vector<8x128xf32>
    %cst_142 = arith.constant 0.000000e+00 : f32
    %344 = vector.broadcast %cst_142 : f32 to vector<8x128xf32>
    %345 = arith.maximumf %343, %344 : vector<8x128xf32>
    %346 = math.absf %343 : vector<8x128xf32>
    %cst_143 = arith.constant 0.000000e+00 : f32
    %347 = vector.broadcast %cst_143 : f32 to vector<8x128xf32>
    %348 = arith.subf %347, %346 : vector<8x128xf32>
    %349 = math.exp %348 : vector<8x128xf32>
    %350 = math.log1p %349 : vector<8x128xf32>
    %351 = arith.addf %345, %350 : vector<8x128xf32>
    %c5552 = arith.constant 5552 : index
    %c0_144 = arith.constant 0 : index
    %352 = vector.load %arg2[%c5552, %c0_144] : memref<8176x128xf32, #tpu.memory_space<vmem>>, vector<128x128xf32>
    %cst_145 = arith.constant dense<0.000000e+00> : vector<8x128xf32>
    %353 = tpu.matmul %351, %352, %cst_145 {dimension_numbers = #tpu.dot_dimension_numbers<[1], [0], [0], [1], [0, 0, 1, 1], [], []>} : vector<8x128xf32>, vector<128x128xf32>, vector<8x128xf32> -> vector<8x128xf32>
    %c5680 = arith.constant 5680 : index
    %c0_146 = arith.constant 0 : index
    %354 = vector.load %arg2[%c5680, %c0_146] : memref<8176x128xf32, #tpu.memory_space<vmem>>, vector<1x128xf32>
    %355 = vector.broadcast %354 : vector<1x128xf32> to vector<8x128xf32>
    %356 = arith.addf %353, %355 : vector<8x128xf32>
    %cst_147 = arith.constant 0.000000e+00 : f32
    %357 = vector.broadcast %cst_147 : f32 to vector<8x128xf32>
    %358 = arith.maximumf %356, %357 : vector<8x128xf32>
    %359 = math.absf %356 : vector<8x128xf32>
    %cst_148 = arith.constant 0.000000e+00 : f32
    %360 = vector.broadcast %cst_148 : f32 to vector<8x128xf32>
    %361 = arith.subf %360, %359 : vector<8x128xf32>
    %362 = math.exp %361 : vector<8x128xf32>
    %363 = math.log1p %362 : vector<8x128xf32>
    %364 = arith.addf %358, %363 : vector<8x128xf32>
    %c5688 = arith.constant 5688 : index
    %c0_149 = arith.constant 0 : index
    %365 = vector.load %arg2[%c5688, %c0_149] : memref<8176x128xf32, #tpu.memory_space<vmem>>, vector<128x128xf32>
    %cst_150 = arith.constant dense<0.000000e+00> : vector<8x128xf32>
    %366 = tpu.matmul %351, %365, %cst_150 {dimension_numbers = #tpu.dot_dimension_numbers<[1], [0], [0], [1], [0, 0, 1, 1], [], []>} : vector<8x128xf32>, vector<128x128xf32>, vector<8x128xf32> -> vector<8x128xf32>
    %c5816 = arith.constant 5816 : index
    %c0_151 = arith.constant 0 : index
    %367 = vector.load %arg2[%c5816, %c0_151] : memref<8176x128xf32, #tpu.memory_space<vmem>>, vector<1x128xf32>
    %368 = vector.broadcast %367 : vector<1x128xf32> to vector<8x128xf32>
    %369 = arith.addf %366, %368 : vector<8x128xf32>
    %370 = arith.mulf %338, %364 : vector<8x128xf32>
    %371 = arith.mulf %177, %369 : vector<8x128xf32>
    %372 = tpu.concatenate %351, %370, %371 in 1 : vector<8x128xf32>, vector<8x128xf32>, vector<8x128xf32> -> vector<8x384xf32>
    %c5824 = arith.constant 5824 : index
    %c0_152 = arith.constant 0 : index
    %373 = vector.load %arg2[%c5824, %c0_152] : memref<8176x128xf32, #tpu.memory_space<vmem>>, vector<384x128xf32>
    %cst_153 = arith.constant dense<0.000000e+00> : vector<8x128xf32>
    %374 = tpu.matmul %372, %373, %cst_153 {dimension_numbers = #tpu.dot_dimension_numbers<[1], [0], [0], [1], [0, 0, 1, 1], [], []>} : vector<8x384xf32>, vector<384x128xf32>, vector<8x128xf32> -> vector<8x128xf32>
    %c6208 = arith.constant 6208 : index
    %c0_154 = arith.constant 0 : index
    %375 = vector.load %arg2[%c6208, %c0_154] : memref<8176x128xf32, #tpu.memory_space<vmem>>, vector<1x128xf32>
    %376 = vector.broadcast %375 : vector<1x128xf32> to vector<8x128xf32>
    %377 = arith.addf %374, %376 : vector<8x128xf32>
    %cst_155 = arith.constant 0.000000e+00 : f32
    %378 = vector.broadcast %cst_155 : f32 to vector<8x128xf32>
    %379 = arith.maximumf %377, %378 : vector<8x128xf32>
    %380 = math.absf %377 : vector<8x128xf32>
    %cst_156 = arith.constant 0.000000e+00 : f32
    %381 = vector.broadcast %cst_156 : f32 to vector<8x128xf32>
    %382 = arith.subf %381, %380 : vector<8x128xf32>
    %383 = math.exp %382 : vector<8x128xf32>
    %384 = math.log1p %383 : vector<8x128xf32>
    %385 = arith.addf %379, %384 : vector<8x128xf32>
    %c6216 = arith.constant 6216 : index
    %c0_157 = arith.constant 0 : index
    %386 = vector.load %arg2[%c6216, %c0_157] : memref<8176x128xf32, #tpu.memory_space<vmem>>, vector<128x128xf32>
    %cst_158 = arith.constant dense<0.000000e+00> : vector<8x128xf32>
    %387 = tpu.matmul %351, %386, %cst_158 {dimension_numbers = #tpu.dot_dimension_numbers<[1], [0], [0], [1], [0, 0, 1, 1], [], []>} : vector<8x128xf32>, vector<128x128xf32>, vector<8x128xf32> -> vector<8x128xf32>
    %c6344 = arith.constant 6344 : index
    %c0_159 = arith.constant 0 : index
    %388 = vector.load %arg2[%c6344, %c0_159] : memref<8176x128xf32, #tpu.memory_space<vmem>>, vector<1x128xf32>
    %389 = vector.broadcast %388 : vector<1x128xf32> to vector<8x128xf32>
    %390 = arith.addf %387, %389 : vector<8x128xf32>
    %cst_160 = arith.constant 0.000000e+00 : f32
    %391 = vector.broadcast %cst_160 : f32 to vector<8x128xf32>
    %392 = arith.maximumf %390, %391 : vector<8x128xf32>
    %393 = math.absf %390 : vector<8x128xf32>
    %cst_161 = arith.constant 0.000000e+00 : f32
    %394 = vector.broadcast %cst_161 : f32 to vector<8x128xf32>
    %395 = arith.subf %394, %393 : vector<8x128xf32>
    %396 = math.exp %395 : vector<8x128xf32>
    %397 = math.log1p %396 : vector<8x128xf32>
    %398 = arith.addf %392, %397 : vector<8x128xf32>
    %c6352 = arith.constant 6352 : index
    %c0_162 = arith.constant 0 : index
    %399 = vector.load %arg2[%c6352, %c0_162] : memref<8176x128xf32, #tpu.memory_space<vmem>>, vector<128x128xf32>
    %cst_163 = arith.constant dense<0.000000e+00> : vector<8x128xf32>
    %400 = tpu.matmul %398, %399, %cst_163 {dimension_numbers = #tpu.dot_dimension_numbers<[1], [0], [0], [1], [0, 0, 1, 1], [], []>} : vector<8x128xf32>, vector<128x128xf32>, vector<8x128xf32> -> vector<8x128xf32>
    %c6480 = arith.constant 6480 : index
    %c0_164 = arith.constant 0 : index
    %401 = vector.load %arg2[%c6480, %c0_164] : memref<8176x128xf32, #tpu.memory_space<vmem>>, vector<1x128xf32>
    %402 = vector.broadcast %401 : vector<1x128xf32> to vector<8x128xf32>
    %403 = arith.addf %400, %402 : vector<8x128xf32>
    %cst_165 = arith.constant 0.000000e+00 : f32
    %404 = vector.broadcast %cst_165 : f32 to vector<8x128xf32>
    %405 = arith.maximumf %403, %404 : vector<8x128xf32>
    %406 = math.absf %403 : vector<8x128xf32>
    %cst_166 = arith.constant 0.000000e+00 : f32
    %407 = vector.broadcast %cst_166 : f32 to vector<8x128xf32>
    %408 = arith.subf %407, %406 : vector<8x128xf32>
    %409 = math.exp %408 : vector<8x128xf32>
    %410 = math.log1p %409 : vector<8x128xf32>
    %411 = arith.addf %405, %410 : vector<8x128xf32>
    %c6488 = arith.constant 6488 : index
    %c0_167 = arith.constant 0 : index
    %412 = vector.load %arg2[%c6488, %c0_167] : memref<8176x128xf32, #tpu.memory_space<vmem>>, vector<128x128xf32>
    %cst_168 = arith.constant dense<0.000000e+00> : vector<8x128xf32>
    %413 = tpu.matmul %398, %412, %cst_168 {dimension_numbers = #tpu.dot_dimension_numbers<[1], [0], [0], [1], [0, 0, 1, 1], [], []>} : vector<8x128xf32>, vector<128x128xf32>, vector<8x128xf32> -> vector<8x128xf32>
    %c6616 = arith.constant 6616 : index
    %c0_169 = arith.constant 0 : index
    %414 = vector.load %arg2[%c6616, %c0_169] : memref<8176x128xf32, #tpu.memory_space<vmem>>, vector<1x128xf32>
    %415 = vector.broadcast %414 : vector<1x128xf32> to vector<8x128xf32>
    %416 = arith.addf %413, %415 : vector<8x128xf32>
    %417 = arith.mulf %385, %411 : vector<8x128xf32>
    %418 = arith.mulf %177, %416 : vector<8x128xf32>
    %419 = tpu.concatenate %398, %417, %418 in 1 : vector<8x128xf32>, vector<8x128xf32>, vector<8x128xf32> -> vector<8x384xf32>
    %c6624 = arith.constant 6624 : index
    %c0_170 = arith.constant 0 : index
    %420 = vector.load %arg2[%c6624, %c0_170] : memref<8176x128xf32, #tpu.memory_space<vmem>>, vector<384x128xf32>
    %cst_171 = arith.constant dense<0.000000e+00> : vector<8x128xf32>
    %421 = tpu.matmul %419, %420, %cst_171 {dimension_numbers = #tpu.dot_dimension_numbers<[1], [0], [0], [1], [0, 0, 1, 1], [], []>} : vector<8x384xf32>, vector<384x128xf32>, vector<8x128xf32> -> vector<8x128xf32>
    %c7008 = arith.constant 7008 : index
    %c0_172 = arith.constant 0 : index
    %422 = vector.load %arg2[%c7008, %c0_172] : memref<8176x128xf32, #tpu.memory_space<vmem>>, vector<1x128xf32>
    %423 = vector.broadcast %422 : vector<1x128xf32> to vector<8x128xf32>
    %424 = arith.addf %421, %423 : vector<8x128xf32>
    %425 = vector.extract_strided_slice %424 {offsets = [0, 0], sizes = [8, 1], strides = [1, 1]} : vector<8x128xf32> to vector<8x1xf32>
    %cst_173 = arith.constant 0.000000e+00 : f32
    %426 = vector.broadcast %cst_173 : f32 to vector<8x1xf32>
    %427 = arith.maximumf %425, %426 : vector<8x1xf32>
    %428 = math.absf %425 : vector<8x1xf32>
    %cst_174 = arith.constant 0.000000e+00 : f32
    %429 = vector.broadcast %cst_174 : f32 to vector<8x1xf32>
    %430 = arith.subf %429, %428 : vector<8x1xf32>
    %431 = math.exp %430 : vector<8x1xf32>
    %432 = math.log1p %431 : vector<8x1xf32>
    %433 = arith.addf %427, %432 : vector<8x1xf32>
    %c7016 = arith.constant 7016 : index
    %c0_175 = arith.constant 0 : index
    %434 = vector.load %arg2[%c7016, %c0_175] : memref<8176x128xf32, #tpu.memory_space<vmem>>, vector<8x128xf32>
    %cst_176 = arith.constant 0.000000e+00 : f32
    %435 = vector.broadcast %cst_176 : f32 to vector<8x1xf32>
    %436 = arith.subf %435, %425 : vector<8x1xf32>
    %437 = math.exp %436 : vector<8x1xf32>
    %cst_177 = arith.constant 1.000000e+00 : f32
    %438 = vector.broadcast %cst_177 : f32 to vector<8x1xf32>
    %439 = arith.addf %438, %437 : vector<8x1xf32>
    %cst_178 = arith.constant 1.000000e+00 : f32
    %440 = vector.broadcast %cst_178 : f32 to vector<8x1xf32>
    %441 = arith.divf %440, %439 : vector<8x1xf32>
    %442 = vector.extract_strided_slice %434 {offsets = [1, 0], sizes = [1, 128], strides = [1, 1]} : vector<8x128xf32> to vector<1x128xf32>
    %443 = vector.broadcast %441 : vector<8x1xf32> to vector<8x128xf32>
    %444 = vector.broadcast %442 : vector<1x128xf32> to vector<8x128xf32>
    %445 = arith.mulf %443, %444 : vector<8x128xf32>
    %446 = arith.mulf %445, %416 : vector<8x128xf32>
    %447 = vector.extract_strided_slice %434 {offsets = [0, 0], sizes = [1, 128], strides = [1, 1]} : vector<8x128xf32> to vector<1x128xf32>
    %448 = vector.broadcast %441 : vector<8x1xf32> to vector<8x128xf32>
    %449 = vector.broadcast %447 : vector<1x128xf32> to vector<8x128xf32>
    %450 = arith.mulf %448, %449 : vector<8x128xf32>
    %451 = arith.mulf %450, %411 : vector<8x128xf32>
    %cst_179 = arith.constant 0.000000e+00 : f32
    %452 = vector.broadcast %cst_179 : f32 to vector<8x128xf32>
    %453 = arith.subf %452, %377 : vector<8x128xf32>
    %454 = math.exp %453 : vector<8x128xf32>
    %cst_180 = arith.constant 1.000000e+00 : f32
    %455 = vector.broadcast %cst_180 : f32 to vector<8x128xf32>
    %456 = arith.addf %455, %454 : vector<8x128xf32>
    %cst_181 = arith.constant 1.000000e+00 : f32
    %457 = vector.broadcast %cst_181 : f32 to vector<8x128xf32>
    %458 = arith.divf %457, %456 : vector<8x128xf32>
    %459 = arith.mulf %451, %458 : vector<8x128xf32>
    %c7792 = arith.constant 7792 : index
    %c0_182 = arith.constant 0 : index
    %460 = vector.load %arg2[%c7792, %c0_182] : memref<8176x128xf32, #tpu.memory_space<vmem>>, vector<128x128xf32>
    %cst_183 = arith.constant dense<0.000000e+00> : vector<8x128xf32>
    %461 = tpu.matmul %459, %460, %cst_183 {dimension_numbers = #tpu.dot_dimension_numbers<[1], [0], [0], [1], [0, 0, 1, 1], [], []>} : vector<8x128xf32>, vector<128x128xf32>, vector<8x128xf32> -> vector<8x128xf32>
    %462 = arith.mulf %461, %369 : vector<8x128xf32>
    %463 = arith.addf %446, %462 : vector<8x128xf32>
    %c7920 = arith.constant 7920 : index
    %c0_184 = arith.constant 0 : index
    %464 = vector.load %arg2[%c7920, %c0_184] : memref<8176x128xf32, #tpu.memory_space<vmem>>, vector<128x128xf32>
    %cst_185 = arith.constant dense<0.000000e+00> : vector<8x128xf32>
    %465 = tpu.matmul %459, %464, %cst_185 {dimension_numbers = #tpu.dot_dimension_numbers<[1], [0], [0], [1], [0, 0, 1, 1], [], []>} : vector<8x128xf32>, vector<128x128xf32>, vector<8x128xf32> -> vector<8x128xf32>
    %466 = arith.mulf %465, %364 : vector<8x128xf32>
    %cst_186 = arith.constant 0.000000e+00 : f32
    %467 = vector.broadcast %cst_186 : f32 to vector<8x128xf32>
    %468 = arith.subf %467, %330 : vector<8x128xf32>
    %469 = math.exp %468 : vector<8x128xf32>
    %cst_187 = arith.constant 1.000000e+00 : f32
    %470 = vector.broadcast %cst_187 : f32 to vector<8x128xf32>
    %471 = arith.addf %470, %469 : vector<8x128xf32>
    %cst_188 = arith.constant 1.000000e+00 : f32
    %472 = vector.broadcast %cst_188 : f32 to vector<8x128xf32>
    %473 = arith.divf %472, %471 : vector<8x128xf32>
    %474 = arith.mulf %466, %473 : vector<8x128xf32>
    %c7536 = arith.constant 7536 : index
    %c0_189 = arith.constant 0 : index
    %475 = vector.load %arg2[%c7536, %c0_189] : memref<8176x128xf32, #tpu.memory_space<vmem>>, vector<128x128xf32>
    %cst_190 = arith.constant dense<0.000000e+00> : vector<8x128xf32>
    %476 = tpu.matmul %474, %475, %cst_190 {dimension_numbers = #tpu.dot_dimension_numbers<[1], [0], [0], [1], [0, 0, 1, 1], [], []>} : vector<8x128xf32>, vector<128x128xf32>, vector<8x128xf32> -> vector<8x128xf32>
    %477 = arith.mulf %476, %322 : vector<8x128xf32>
    %478 = arith.addf %463, %477 : vector<8x128xf32>
    %c7664 = arith.constant 7664 : index
    %c0_191 = arith.constant 0 : index
    %479 = vector.load %arg2[%c7664, %c0_191] : memref<8176x128xf32, #tpu.memory_space<vmem>>, vector<128x128xf32>
    %cst_192 = arith.constant dense<0.000000e+00> : vector<8x128xf32>
    %480 = tpu.matmul %474, %479, %cst_192 {dimension_numbers = #tpu.dot_dimension_numbers<[1], [0], [0], [1], [0, 0, 1, 1], [], []>} : vector<8x128xf32>, vector<128x128xf32>, vector<8x128xf32> -> vector<8x128xf32>
    %481 = arith.mulf %480, %317 : vector<8x128xf32>
    %cst_193 = arith.constant 0.000000e+00 : f32
    %482 = vector.broadcast %cst_193 : f32 to vector<8x128xf32>
    %483 = arith.subf %482, %283 : vector<8x128xf32>
    %484 = math.exp %483 : vector<8x128xf32>
    %cst_194 = arith.constant 1.000000e+00 : f32
    %485 = vector.broadcast %cst_194 : f32 to vector<8x128xf32>
    %486 = arith.addf %485, %484 : vector<8x128xf32>
    %cst_195 = arith.constant 1.000000e+00 : f32
    %487 = vector.broadcast %cst_195 : f32 to vector<8x128xf32>
    %488 = arith.divf %487, %486 : vector<8x128xf32>
    %489 = arith.mulf %481, %488 : vector<8x128xf32>
    %c7280 = arith.constant 7280 : index
    %c0_196 = arith.constant 0 : index
    %490 = vector.load %arg2[%c7280, %c0_196] : memref<8176x128xf32, #tpu.memory_space<vmem>>, vector<128x128xf32>
    %cst_197 = arith.constant dense<0.000000e+00> : vector<8x128xf32>
    %491 = tpu.matmul %489, %490, %cst_197 {dimension_numbers = #tpu.dot_dimension_numbers<[1], [0], [0], [1], [0, 0, 1, 1], [], []>} : vector<8x128xf32>, vector<128x128xf32>, vector<8x128xf32> -> vector<8x128xf32>
    %492 = arith.mulf %491, %275 : vector<8x128xf32>
    %493 = arith.addf %478, %492 : vector<8x128xf32>
    %c7408 = arith.constant 7408 : index
    %c0_198 = arith.constant 0 : index
    %494 = vector.load %arg2[%c7408, %c0_198] : memref<8176x128xf32, #tpu.memory_space<vmem>>, vector<128x128xf32>
    %cst_199 = arith.constant dense<0.000000e+00> : vector<8x128xf32>
    %495 = tpu.matmul %489, %494, %cst_199 {dimension_numbers = #tpu.dot_dimension_numbers<[1], [0], [0], [1], [0, 0, 1, 1], [], []>} : vector<8x128xf32>, vector<128x128xf32>, vector<8x128xf32> -> vector<8x128xf32>
    %496 = arith.mulf %495, %270 : vector<8x128xf32>
    %cst_200 = arith.constant 0.000000e+00 : f32
    %497 = vector.broadcast %cst_200 : f32 to vector<8x128xf32>
    %498 = arith.subf %497, %236 : vector<8x128xf32>
    %499 = math.exp %498 : vector<8x128xf32>
    %cst_201 = arith.constant 1.000000e+00 : f32
    %500 = vector.broadcast %cst_201 : f32 to vector<8x128xf32>
    %501 = arith.addf %500, %499 : vector<8x128xf32>
    %cst_202 = arith.constant 1.000000e+00 : f32
    %502 = vector.broadcast %cst_202 : f32 to vector<8x128xf32>
    %503 = arith.divf %502, %501 : vector<8x128xf32>
    %504 = arith.mulf %496, %503 : vector<8x128xf32>
    %c7024 = arith.constant 7024 : index
    %c0_203 = arith.constant 0 : index
    %505 = vector.load %arg2[%c7024, %c0_203] : memref<8176x128xf32, #tpu.memory_space<vmem>>, vector<128x128xf32>
    %cst_204 = arith.constant dense<0.000000e+00> : vector<8x128xf32>
    %506 = tpu.matmul %504, %505, %cst_204 {dimension_numbers = #tpu.dot_dimension_numbers<[1], [0], [0], [1], [0, 0, 1, 1], [], []>} : vector<8x128xf32>, vector<128x128xf32>, vector<8x128xf32> -> vector<8x128xf32>
    %507 = arith.mulf %506, %228 : vector<8x128xf32>
    %508 = arith.addf %493, %507 : vector<8x128xf32>
    %c7152 = arith.constant 7152 : index
    %c0_205 = arith.constant 0 : index
    %509 = vector.load %arg2[%c7152, %c0_205] : memref<8176x128xf32, #tpu.memory_space<vmem>>, vector<128x128xf32>
    %cst_206 = arith.constant dense<0.000000e+00> : vector<8x128xf32>
    %510 = tpu.matmul %504, %509, %cst_206 {dimension_numbers = #tpu.dot_dimension_numbers<[1], [0], [0], [1], [0, 0, 1, 1], [], []>} : vector<8x128xf32>, vector<128x128xf32>, vector<8x128xf32> -> vector<8x128xf32>
    %511 = arith.mulf %510, %223 : vector<8x128xf32>
    %cst_207 = arith.constant 0.000000e+00 : f32
    %512 = vector.broadcast %cst_207 : f32 to vector<8x128xf32>
    %513 = arith.subf %512, %189 : vector<8x128xf32>
    %514 = math.exp %513 : vector<8x128xf32>
    %cst_208 = arith.constant 1.000000e+00 : f32
    %515 = vector.broadcast %cst_208 : f32 to vector<8x128xf32>
    %516 = arith.addf %515, %514 : vector<8x128xf32>
    %cst_209 = arith.constant 1.000000e+00 : f32
    %517 = vector.broadcast %cst_209 : f32 to vector<8x128xf32>
    %518 = arith.divf %517, %516 : vector<8x128xf32>
    %519 = arith.mulf %511, %518 : vector<8x128xf32>
    %c8048 = arith.constant 8048 : index
    %c0_210 = arith.constant 0 : index
    %520 = vector.load %arg2[%c8048, %c0_210] : memref<8176x128xf32, #tpu.memory_space<vmem>>, vector<128x128xf32>
    %cst_211 = arith.constant dense<0.000000e+00> : vector<8x128xf32>
    %521 = tpu.matmul %519, %520, %cst_211 {dimension_numbers = #tpu.dot_dimension_numbers<[1], [0], [0], [1], [0, 0, 1, 1], [], []>} : vector<8x128xf32>, vector<128x128xf32>, vector<8x128xf32> -> vector<8x128xf32>
    %522 = arith.mulf %521, %182 : vector<8x128xf32>
    %523 = arith.addf %508, %522 : vector<8x128xf32>
    %524 = tpu.iota {dimensions = array<i32: 1>} : vector<8x128xi32>
    %c4_i32 = arith.constant 4 : i32
    %525 = vector.broadcast %c4_i32 : i32 to vector<8x128xi32>
    %526 = arith.cmpi eq, %524, %525 : vector<8x128xi32>
    %cst_212 = arith.constant 0.000000e+00 : f32
    %527 = vector.shape_cast %433 : vector<8x1xf32> to vector<8x1xf32>
    %528 = vector.broadcast %527 : vector<8x1xf32> to vector<8x128xf32>
    %529 = vector.broadcast %cst_212 : f32 to vector<8x128xf32>
    %530 = arith.select %526, %528, %529 : vector<8x128xi1>, vector<8x128xf32>
    %531 = arith.addf %523, %530 : vector<8x128xf32>
    %c0_213 = arith.constant 0 : index
    %c0_214 = arith.constant 0 : index
    %532 = vector.load %arg3[%c0_213, %c0_214] : memref<8x128xf32, #tpu.memory_space<vmem>>, vector<8x128xf32>
    tpu.vector_store %arg3[%c0_213, %c0_214], %531 {strides = array<i32>} : memref<8x128xf32, #tpu.memory_space<vmem>>, vector<8x128xf32>,
    return
  }
  func.func @transform_0(%arg0: i32) -> (i32, i32) {
    %c0_i32 = arith.constant 0 : i32
    %c0_i32_0 = arith.constant 0 : i32
    return %arg0, %c0_i32 : i32, i32
  }
  func.func @transform_1(%arg0: i32) -> (i32, i32) {
    %c0_i32 = arith.constant 0 : i32
    %c0_i32_0 = arith.constant 0 : i32
    %c0_i32_1 = arith.constant 0 : i32
    return %c0_i32, %c0_i32_0 : i32, i32
  }
  func.func @transform_2(%arg0: i32) -> (i32, i32) {
    %c0_i32 = arith.constant 0 : i32
    %c0_i32_0 = arith.constant 0 : i32
    return %arg0, %c0_i32 : i32, i32
  }
}

</mosaic_0001>

<llo_original>
// kernel: tpu_custom_call.1
$region0: #{tpu_custom_call.1}
  #allocation0 [shape = 'u32[]', space=smem, size = 0x4, offset = 0x4, fixed_abs, tag = 'smem constant byte address 0x4 - core index']
  #allocation1 [shape = 'u32[72,128]{1,0:T(1,128)}', space=vmem, size = 0x9000, scoped, tag = 'internal scratch']
  %s0 = inlined_call_operand.hbm [shape: f32[8,128], index: 0, kind: input, shape index: {}]
  %s1 = inlined_call_operand.hbm [shape: f32[8176,128], index: 1, kind: input, shape index: {}]
  %s2 = inlined_call_operand.hbm [shape: f32[8,128], index: 2, kind: output, shape index: {}]
  %s3 = sld [smem:[#allocation0]]
  $region26: #{tpu_custom_call.1} parent=0
    _
  %s5 = ssub.s32 1, %s3
  %s6 = scalar_select 0, %s5, %s3
  $region1: #{tpu_custom_call.1} parent=0
    #allocation2 [shape = 'u8[4096]{0}', space=vmem, size = 0x1000, scoped, tag = 'input window, operand 0, single buffered']
    #allocation3 [shape = 's32[1]{0}', space=sflag, size = 0x4, scoped, tag = 'scoped memory for tpu_custom_call.1']
    #allocation4 [shape = 's32[1]{0}', space=sflag, size = 0x4, scoped, tag = 'scoped memory for tpu_custom_call.1']
    #allocation5 [shape = 'u8[4186112]{0}', space=vmem, size = 0x3fe000, scoped, tag = 'input window, operand 1, single buffered']
    #allocation6 [shape = 's32[1]{0}', space=sflag, size = 0x4, scoped, tag = 'scoped memory for tpu_custom_call.1']
    #allocation7 [shape = 'u8[4096]{0}', space=vmem, size = 0x1000, scoped, tag = 'output window, operand 0, single buffered']
    %7 = vsyncpa [#allocation3], 0
    %8 = vsyncpa [#allocation6], 0
    %9 = vsyncpa [#allocation4], 0
    // Predicated region
    $region2: #{tpu_custom_call.1} parent=1 // pred_check
      _
    $region3: #{tpu_custom_call.1} parent=1 // pred_check_branch
      %11 = sbr.rel (0) target = $region5
    $region4: #{tpu_custom_call.1} parent=1 // pred_region
      %13 = vsyncadd [#allocation3], 0
      %s15 = sshll.u32 %s0, 4
      %s16 = int_to_ptr.hbm [resolvable:$true] %s15
      %s17 = sshll.u32 [#allocation2], 4
      %s18 = int_to_ptr.vmem [resolvable:$true] %s17
      %20 = dma.hbm_to_vmem [thread:$0]  %s16, 128, %s18, [#allocation3]
    $region5: #{tpu_custom_call.1} parent=1 // pred_fallthru
      _
    // Predicated region
    $region6: #{tpu_custom_call.1} parent=1 // pred_check
      _
    $region7: #{tpu_custom_call.1} parent=1 // pred_check_branch
      %22 = sbr.rel (0) target = $region9
    $region8: #{tpu_custom_call.1} parent=1 // pred_region
      %24 = vsyncadd [#allocation6], 0
      %s25 = sshll.u32 %s1, 4
      %s26 = int_to_ptr.hbm [resolvable:$true] %s25
      %s27 = sshll.u32 [#allocation5], 4
      %s28 = int_to_ptr.vmem [resolvable:$true] %s27
      %33 = dma.hbm_to_vmem [thread:$0]  %s26, 130816, %s28, [#allocation6], 128, 128, 8
    $region9: #{tpu_custom_call.1} parent=1 // pred_fallthru
      _
    // Predicated region
    $region10: #{tpu_custom_call.1} parent=1 // pred_check
      _
    $region11: #{tpu_custom_call.1} parent=1 // pred_check_branch
      %35 = sbr.rel (0) target = $region13
    $region12: #{tpu_custom_call.1} parent=1 // pred_region
      %37 = dma.done [#allocation3], 128
    $region13: #{tpu_custom_call.1} parent=1 // pred_fallthru
      _
    // Predicated region
    $region14: #{tpu_custom_call.1} parent=1 // pred_check
      _
    $region15: #{tpu_custom_call.1} parent=1 // pred_check_branch
      %39 = sbr.rel (0) target = $region17
    $region16: #{tpu_custom_call.1} parent=1 // pred_region
      %41 = dma.done [#allocation6], 130816
    $region17: #{tpu_custom_call.1} parent=1 // pred_fallthru
      _
    %v42 = vld [vmem:[#allocation2] sm:$0xff]
    %v43 = vld [vmem:[#allocation5] sm:$0xff]
    %v44 = vld [vmem:[#allocation5 + $0x8] sm:$0xff]
    %v45 = vld [vmem:[#allocation5 + $0x10] sm:$0xff]
    %v46 = vld [vmem:[#allocation5 + $0x18] sm:$0xff]
    %v47 = vld [vmem:[#allocation5 + $0x20] sm:$0xff]
    %v48 = vld [vmem:[#allocation5 + $0x28] sm:$0xff]
    %v49 = vld [vmem:[#allocation5 + $0x30] sm:$0xff]
    %v50 = vld [vmem:[#allocation5 + $0x38] sm:$0xff]
    %v51 = vld [vmem:[#allocation5 + $0x40] sm:$0xff]
    %v52 = vld [vmem:[#allocation5 + $0x48] sm:$0xff]
    %v53 = vld [vmem:[#allocation5 + $0x50] sm:$0xff]
    %v54 = vld [vmem:[#allocation5 + $0x58] sm:$0xff]
    %v55 = vld [vmem:[#allocation5 + $0x60] sm:$0xff]
    %v56 = vld [vmem:[#allocation5 + $0x68] sm:$0xff]
    %v57 = vld [vmem:[#allocation5 + $0x70] sm:$0xff]
    %v58 = vld [vmem:[#allocation5 + $0x78] sm:$0xff]
    %v59 = vld [vmem:[#allocation5 + $0x80] sm:$0x1]
    %v60 = vperm.slane %v59, 0
    %61 = vmatpush.msra.mxu0 %v58
    %62 = vmatpush.msra.mxu0 %v57
    %63 = vmatpush.msra.mxu0 %v56
    %64 = vmatpush.msra.mxu0 %v55
    %65 = vmatpush.msra.mxu0 %v54
    %66 = vmatpush.msra.mxu0 %v53
    %67 = vmatpush.msra.mxu0 %v52
    %68 = vmatpush.msra.mxu0 %v51
    %69 = vmatpush.msra.mxu0 %v50
    %70 = vmatpush.msra.mxu0 %v49
    %71 = vmatpush.msra.mxu0 %v48
    %72 = vmatpush.msra.mxu0 %v47
    %73 = vmatpush.msra.mxu0 %v46
    %74 = vmatpush.msra.mxu0 %v45
    %75 = vmatpush.msra.mxu0 %v44
    %76 = vmatpush.msra.mxu0 %v43
    %77 = vmatmul.f32.gmra.mxu0 %v42
    %v78 = vpop.f32.mrf.mxu0
    %v79 = vadd.f32 %v60, %v78
    %80 = vdwg.mxu0
    %v81 = vmax.f32 %v79, 0.0
    %v82 = vand.u32 2147483647, %v79
    %v83 = vsub.f32 0.0, %v82
    %v84 = vmul.f32 %v83, 1.442695
    %v85 = vpow.pop %v84
    %v86 = vadd.f32 %v85, 1.0
    %v87 = vlog2.pop %v86
    %v88 = vmul.f32 %v87, 0.6931472
    %v89 = vmul.f32 -0.5, %v85
    %v90 = vadd.f32 %v89, 1.0
    %v91 = vmul.f32 %v90, %v85
    %v92 = vand.u32 2147483647, %v85
    %vm93 = vcmp.lt.f32.partialorder %v92, 0.0004427343
    %v94 = vsel %vm93, %v91, %v88
    %v95 = vadd.f32 %v81, %v94
    %v96 = vsub.f32 0.0, %v95
    %v97 = vld [vmem:[#allocation5 + $0x88] sm:$0xff]
    %v98 = vld [vmem:[#allocation5 + $0x90] sm:$0xff]
    %v99 = vld [vmem:[#allocation5 + $0x98] sm:$0xff]
    %v100 = vld [vmem:[#allocation5 + $0xa0] sm:$0xff]
    %v101 = vld [vmem:[#allocation5 + $0xa8] sm:$0xff]
    %v102 = vld [vmem:[#allocation5 + $0xb0] sm:$0xff]
    %v103 = vld [vmem:[#allocation5 + $0xb8] sm:$0xff]
    %v104 = vld [vmem:[#allocation5 + $0xc0] sm:$0xff]
    %v105 = vld [vmem:[#allocation5 + $0xc8] sm:$0xff]
    %v106 = vld [vmem:[#allocation5 + $0xd0] sm:$0xff]
    %v107 = vld [vmem:[#allocation5 + $0xd8] sm:$0xff]
    %v108 = vld [vmem:[#allocation5 + $0xe0] sm:$0xff]
    %v109 = vld [vmem:[#allocation5 + $0xe8] sm:$0xff]
    %v110 = vld [vmem:[#allocation5 + $0xf0] sm:$0xff]
    %v111 = vld [vmem:[#allocation5 + $0xf8] sm:$0xff]
    %v112 = vld [vmem:[#allocation5 + $0x100] sm:$0xff]
    %v113 = vld [vmem:[#allocation5 + $0x108] sm:$0xff]
    %v114 = vld [vmem:[#allocation5 + $0x110] sm:$0xff]
    %v115 = vld [vmem:[#allocation5 + $0x118] sm:$0xff]
    %v116 = vld [vmem:[#allocation5 + $0x120] sm:$0xff]
    %v117 = vld [vmem:[#allocation5 + $0x128] sm:$0xff]
    %v118 = vld [vmem:[#allocation5 + $0x130] sm:$0xff]
    %v119 = vld [vmem:[#allocation5 + $0x138] sm:$0xff]
    %v120 = vld [vmem:[#allocation5 + $0x140] sm:$0xff]
    %v121 = vld [vmem:[#allocation5 + $0x148] sm:$0xff]
    %v122 = vld [vmem:[#allocation5 + $0x150] sm:$0xff]
    %v123 = vld [vmem:[#allocation5 + $0x158] sm:$0xff]
    %v124 = vld [vmem:[#allocation5 + $0x160] sm:$0xff]
    %v125 = vld [vmem:[#allocation5 + $0x168] sm:$0xff]
    %v126 = vld [vmem:[#allocation5 + $0x170] sm:$0xff]
    %v127 = vld [vmem:[#allocation5 + $0x178] sm:$0xff]
    %v128 = vld [vmem:[#allocation5 + $0x180] sm:$0xff]
    %v129 = vld [vmem:[#allocation5 + $0x188] sm:$0x1]
    %v130 = vperm.slane %v129, 0
    %131 = vmatpush.msra.mxu0 %v112
    %132 = vmatpush.msra.mxu0 %v111
    %133 = vmatpush.msra.mxu0 %v110
    %134 = vmatpush.msra.mxu0 %v109
    %135 = vmatpush.msra.mxu0 %v108
    %136 = vmatpush.msra.mxu0 %v107
    %137 = vmatpush.msra.mxu0 %v106
    %138 = vmatpush.msra.mxu0 %v105
    %139 = vmatpush.msra.mxu0 %v104
    %140 = vmatpush.msra.mxu0 %v103
    %141 = vmatpush.msra.mxu0 %v102
    %142 = vmatpush.msra.mxu0 %v101
    %143 = vmatpush.msra.mxu0 %v100
    %144 = vmatpush.msra.mxu0 %v99
    %145 = vmatpush.msra.mxu0 %v98
    %146 = vmatpush.msra.mxu0 %v97
    %147 = vmatmul.f32.gmra.mxu0 %v96
    %v148 = vpop.f32.mrf.mxu0
    %v149 = vadd.f32 %v130, %v148
    %150 = vdwg.mxu0
    %151 = vmatpush.msra.mxu0 %v128
    %152 = vmatpush.msra.mxu0 %v127
    %153 = vmatpush.msra.mxu0 %v126
    %154 = vmatpush.msra.mxu0 %v125
    %155 = vmatpush.msra.mxu0 %v124
    %156 = vmatpush.msra.mxu0 %v123
    %157 = vmatpush.msra.mxu0 %v122
    %158 = vmatpush.msra.mxu0 %v121
    %159 = vmatpush.msra.mxu0 %v120
    %160 = vmatpush.msra.mxu0 %v119
    %161 = vmatpush.msra.mxu0 %v118
    %162 = vmatpush.msra.mxu0 %v117
    %163 = vmatpush.msra.mxu0 %v116
    %164 = vmatpush.msra.mxu0 %v115
    %165 = vmatpush.msra.mxu0 %v114
    %166 = vmatpush.msra.mxu0 %v113
    %167 = vmatmul.f32.gmra.mxu0 %v42
    %v168 = vpop.f32.mrf.mxu0
    %v169 = vadd.f32 %v149, %v168
    %170 = vdwg.mxu0
    %v171 = vmax.f32 %v169, 0.0
    %v172 = vand.u32 2147483647, %v169
    %v173 = vsub.f32 0.0, %v172
    %v174 = vmul.f32 %v173, 1.442695
    %v175 = vpow.pop %v174
    %v176 = vadd.f32 %v175, 1.0
    %v177 = vlog2.pop %v176
    %v178 = vmul.f32 %v177, 0.6931472
    %v179 = vmul.f32 -0.5, %v175
    %v180 = vadd.f32 %v179, 1.0
    %v181 = vmul.f32 %v180, %v175
    %v182 = vand.u32 2147483647, %v175
    %vm183 = vcmp.lt.f32.partialorder %v182, 0.0004427343
    %v184 = vsel %vm183, %v181, %v178
    %v185 = vadd.f32 %v171, %v184
    %v186 = vsub.f32 0.0, %v185
    %v187 = vld [vmem:[#allocation5 + $0x190] sm:$0xff]
    %v188 = vld [vmem:[#allocation5 + $0x198] sm:$0xff]
    %v189 = vld [vmem:[#allocation5 + $0x1a0] sm:$0xff]
    %v190 = vld [vmem:[#allocation5 + $0x1a8] sm:$0xff]
    %v191 = vld [vmem:[#allocation5 + $0x1b0] sm:$0xff]
    %v192 = vld [vmem:[#allocation5 + $0x1b8] sm:$0xff]
    %v193 = vld [vmem:[#allocation5 + $0x1c0] sm:$0xff]
    %v194 = vld [vmem:[#allocation5 + $0x1c8] sm:$0xff]
    %v195 = vld [vmem:[#allocation5 + $0x1d0] sm:$0xff]
    %v196 = vld [vmem:[#allocation5 + $0x1d8] sm:$0xff]
    %v197 = vld [vmem:[#allocation5 + $0x1e0] sm:$0xff]
    %v198 = vld [vmem:[#allocation5 + $0x1e8] sm:$0xff]
    %v199 = vld [vmem:[#allocation5 + $0x1f0] sm:$0xff]
    %v200 = vld [vmem:[#allocation5 + $0x1f8] sm:$0xff]
    %v201 = vld [vmem:[#allocation5 + $0x200] sm:$0xff]
    %v202 = vld [vmem:[#allocation5 + $0x208] sm:$0xff]
    %v203 = vld [vmem:[#allocation5 + $0x210] sm:$0xff]
    %v204 = vld [vmem:[#allocation5 + $0x218] sm:$0xff]
    %v205 = vld [vmem:[#allocation5 + $0x220] sm:$0xff]
    %v206 = vld [vmem:[#allocation5 + $0x228] sm:$0xff]
    %v207 = vld [vmem:[#allocation5 + $0x230] sm:$0xff]
    %v208 = vld [vmem:[#allocation5 + $0x238] sm:$0xff]
    %v209 = vld [vmem:[#allocation5 + $0x240] sm:$0xff]
    %v210 = vld [vmem:[#allocation5 + $0x248] sm:$0xff]
    %v211 = vld [vmem:[#allocation5 + $0x250] sm:$0xff]
    %v212 = vld [vmem:[#allocation5 + $0x258] sm:$0xff]
    %v213 = vld [vmem:[#allocation5 + $0x260] sm:$0xff]
    %v214 = vld [vmem:[#allocation5 + $0x268] sm:$0xff]
    %v215 = vld [vmem:[#allocation5 + $0x270] sm:$0xff]
    %v216 = vld [vmem:[#allocation5 + $0x278] sm:$0xff]
    %v217 = vld [vmem:[#allocation5 + $0x280] sm:$0xff]
    %v218 = vld [vmem:[#allocation5 + $0x288] sm:$0xff]
    %v219 = vld [vmem:[#allocation5 + $0x290] sm:$0x1]
    %v220 = vperm.slane %v219, 0
    %221 = vmatpush.msra.mxu0 %v202
    %222 = vmatpush.msra.mxu0 %v201
    %223 = vmatpush.msra.mxu0 %v200
    %224 = vmatpush.msra.mxu0 %v199
    %225 = vmatpush.msra.mxu0 %v198
    %226 = vmatpush.msra.mxu0 %v197
    %227 = vmatpush.msra.mxu0 %v196
    %228 = vmatpush.msra.mxu0 %v195
    %229 = vmatpush.msra.mxu0 %v194
    %230 = vmatpush.msra.mxu0 %v193
    %231 = vmatpush.msra.mxu0 %v192
    %232 = vmatpush.msra.mxu0 %v191
    %233 = vmatpush.msra.mxu0 %v190
    %234 = vmatpush.msra.mxu0 %v189
    %235 = vmatpush.msra.mxu0 %v188
    %236 = vmatpush.msra.mxu0 %v187
    %237 = vmatmul.f32.gmra.mxu0 %v186
    %v238 = vpop.f32.mrf.mxu0
    %v239 = vadd.f32 %v220, %v238
    %240 = vdwg.mxu0
    %241 = vmatpush.msra.mxu0 %v218
    %242 = vmatpush.msra.mxu0 %v217
    %243 = vmatpush.msra.mxu0 %v216
    %244 = vmatpush.msra.mxu0 %v215
    %245 = vmatpush.msra.mxu0 %v214
    %246 = vmatpush.msra.mxu0 %v213
    %247 = vmatpush.msra.mxu0 %v212
    %248 = vmatpush.msra.mxu0 %v211
    %249 = vmatpush.msra.mxu0 %v210
    %250 = vmatpush.msra.mxu0 %v209
    %251 = vmatpush.msra.mxu0 %v208
    %252 = vmatpush.msra.mxu0 %v207
    %253 = vmatpush.msra.mxu0 %v206
    %254 = vmatpush.msra.mxu0 %v205
    %255 = vmatpush.msra.mxu0 %v204
    %256 = vmatpush.msra.mxu0 %v203
    %257 = vmatmul.f32.gmra.mxu0 %v42
    %v258 = vpop.f32.mrf.mxu0
    %v259 = vadd.f32 %v239, %v258
    %260 = vdwg.mxu0
    %v261 = vmax.f32 %v259, 0.0
    %v262 = vand.u32 2147483647, %v259
    %v263 = vsub.f32 0.0, %v262
    %v264 = vmul.f32 %v263, 1.442695
    %v265 = vpow.pop %v264
    %v266 = vadd.f32 %v265, 1.0
    %v267 = vlog2.pop %v266
    %v268 = vmul.f32 %v267, 0.6931472
    %v269 = vmul.f32 -0.5, %v265
    %v270 = vadd.f32 %v269, 1.0
    %v271 = vmul.f32 %v270, %v265
    %v272 = vand.u32 2147483647, %v265
    %vm273 = vcmp.lt.f32.partialorder %v272, 0.0004427343
    %v274 = vsel %vm273, %v271, %v268
    %v275 = vadd.f32 %v261, %v274
    %v276 = vsub.f32 0.0, %v275
    %v277 = vld [vmem:[#allocation5 + $0x298] sm:$0xff]
    %v278 = vld [vmem:[#allocation5 + $0x2a0] sm:$0xff]
    %v279 = vld [vmem:[#allocation5 + $0x2a8] sm:$0xff]
    %v280 = vld [vmem:[#allocation5 + $0x2b0] sm:$0xff]
    %v281 = vld [vmem:[#allocation5 + $0x2b8] sm:$0xff]
    %v282 = vld [vmem:[#allocation5 + $0x2c0] sm:$0xff]
    %v283 = vld [vmem:[#allocation5 + $0x2c8] sm:$0xff]
    %v284 = vld [vmem:[#allocation5 + $0x2d0] sm:$0xff]
    %v285 = vld [vmem:[#allocation5 + $0x2d8] sm:$0xff]
    %v286 = vld [vmem:[#allocation5 + $0x2e0] sm:$0xff]
    %v287 = vld [vmem:[#allocation5 + $0x2e8] sm:$0xff]
    %v288 = vld [vmem:[#allocation5 + $0x2f0] sm:$0xff]
    %v289 = vld [vmem:[#allocation5 + $0x2f8] sm:$0xff]
    %v290 = vld [vmem:[#allocation5 + $0x300] sm:$0xff]
    %v291 = vld [vmem:[#allocation5 + $0x308] sm:$0xff]
    %v292 = vld [vmem:[#allocation5 + $0x310] sm:$0xff]
    %v293 = vld [vmem:[#allocation5 + $0x318] sm:$0xff]
    %v294 = vld [vmem:[#allocation5 + $0x320] sm:$0xff]
    %v295 = vld [vmem:[#allocation5 + $0x328] sm:$0xff]
    %v296 = vld [vmem:[#allocation5 + $0x330] sm:$0xff]
    %v297 = vld [vmem:[#allocation5 + $0x338] sm:$0xff]
    %v298 = vld [vmem:[#allocation5 + $0x340] sm:$0xff]
    %v299 = vld [vmem:[#allocation5 + $0x348] sm:$0xff]
    %v300 = vld [vmem:[#allocation5 + $0x350] sm:$0xff]
    %v301 = vld [vmem:[#allocation5 + $0x358] sm:$0xff]
    %v302 = vld [vmem:[#allocation5 + $0x360] sm:$0xff]
    %v303 = vld [vmem:[#allocation5 + $0x368] sm:$0xff]
    %v304 = vld [vmem:[#allocation5 + $0x370] sm:$0xff]
    %v305 = vld [vmem:[#allocation5 + $0x378] sm:$0xff]
    %v306 = vld [vmem:[#allocation5 + $0x380] sm:$0xff]
    %v307 = vld [vmem:[#allocation5 + $0x388] sm:$0xff]
    %v308 = vld [vmem:[#allocation5 + $0x390] sm:$0xff]
    %v309 = vld [vmem:[#allocation5 + $0x398] sm:$0x1]
    %v310 = vperm.slane %v309, 0
    %311 = vmatpush.msra.mxu0 %v292
    %312 = vmatpush.msra.mxu0 %v291
    %313 = vmatpush.msra.mxu0 %v290
    %314 = vmatpush.msra.mxu0 %v289
    %315 = vmatpush.msra.mxu0 %v288
    %316 = vmatpush.msra.mxu0 %v287
    %317 = vmatpush.msra.mxu0 %v286
    %318 = vmatpush.msra.mxu0 %v285
    %319 = vmatpush.msra.mxu0 %v284
    %320 = vmatpush.msra.mxu0 %v283
    %321 = vmatpush.msra.mxu0 %v282
    %322 = vmatpush.msra.mxu0 %v281
    %323 = vmatpush.msra.mxu0 %v280
    %324 = vmatpush.msra.mxu0 %v279
    %325 = vmatpush.msra.mxu0 %v278
    %326 = vmatpush.msra.mxu0 %v277
    %327 = vmatmul.f32.gmra.mxu0 %v276
    %v328 = vpop.f32.mrf.mxu0
    %v329 = vadd.f32 %v310, %v328
    %330 = vdwg.mxu0
    %331 = vmatpush.msra.mxu0 %v308
    %332 = vmatpush.msra.mxu0 %v307
    %333 = vmatpush.msra.mxu0 %v306
    %334 = vmatpush.msra.mxu0 %v305
    %335 = vmatpush.msra.mxu0 %v304
    %336 = vmatpush.msra.mxu0 %v303
    %337 = vmatpush.msra.mxu0 %v302
    %338 = vmatpush.msra.mxu0 %v301
    %339 = vmatpush.msra.mxu0 %v300
    %340 = vmatpush.msra.mxu0 %v299
    %341 = vmatpush.msra.mxu0 %v298
    %342 = vmatpush.msra.mxu0 %v297
    %343 = vmatpush.msra.mxu0 %v296
    %344 = vmatpush.msra.mxu0 %v295
    %345 = vmatpush.msra.mxu0 %v294
    %346 = vmatpush.msra.mxu0 %v293
    %347 = vmatmul.f32.gmra.mxu0 %v42
    %v348 = vpop.f32.mrf.mxu0
    %v349 = vadd.f32 %v329, %v348
    %350 = vdwg.mxu0
    %v351 = vmax.f32 %v349, 0.0
    %v352 = vand.u32 2147483647, %v349
    %v353 = vsub.f32 0.0, %v352
    %v354 = vmul.f32 %v353, 1.442695
    %v355 = vpow.pop %v354
    %v356 = vadd.f32 %v355, 1.0
    %v357 = vlog2.pop %v356
    %v358 = vmul.f32 %v357, 0.6931472
    %v359 = vmul.f32 -0.5, %v355
    %v360 = vadd.f32 %v359, 1.0
    %v361 = vmul.f32 %v360, %v355
    %v362 = vand.u32 2147483647, %v355
    %vm363 = vcmp.lt.f32.partialorder %v362, 0.0004427343
    %v364 = vsel %vm363, %v361, %v358
    %v365 = vadd.f32 %v351, %v364
    %v366 = vsub.f32 0.0, %v365
    %v367 = vld [vmem:[#allocation5 + $0x3a0] sm:$0xff]
    %v368 = vld [vmem:[#allocation5 + $0x3a8] sm:$0xff]
    %v369 = vld [vmem:[#allocation5 + $0x3b0] sm:$0xff]
    %v370 = vld [vmem:[#allocation5 + $0x3b8] sm:$0xff]
    %v371 = vld [vmem:[#allocation5 + $0x3c0] sm:$0xff]
    %v372 = vld [vmem:[#allocation5 + $0x3c8] sm:$0xff]
    %v373 = vld [vmem:[#allocation5 + $0x3d0] sm:$0xff]
    %v374 = vld [vmem:[#allocation5 + $0x3d8] sm:$0xff]
    %v375 = vld [vmem:[#allocation5 + $0x3e0] sm:$0xff]
    %v376 = vld [vmem:[#allocation5 + $0x3e8] sm:$0xff]
    %v377 = vld [vmem:[#allocation5 + $0x3f0] sm:$0xff]
    %v378 = vld [vmem:[#allocation5 + $0x3f8] sm:$0xff]
    %v379 = vld [vmem:[#allocation5 + $0x400] sm:$0xff]
    %v380 = vld [vmem:[#allocation5 + $0x408] sm:$0xff]
    %v381 = vld [vmem:[#allocation5 + $0x410] sm:$0xff]
    %v382 = vld [vmem:[#allocation5 + $0x418] sm:$0xff]
    %v383 = vld [vmem:[#allocation5 + $0x420] sm:$0xff]
    %v384 = vld [vmem:[#allocation5 + $0x428] sm:$0xff]
    %v385 = vld [vmem:[#allocation5 + $0x430] sm:$0xff]
    %v386 = vld [vmem:[#allocation5 + $0x438] sm:$0xff]
    %v387 = vld [vmem:[#allocation5 + $0x440] sm:$0xff]
    %v388 = vld [vmem:[#allocation5 + $0x448] sm:$0xff]
    %v389 = vld [vmem:[#allocation5 + $0x450] sm:$0xff]
    %v390 = vld [vmem:[#allocation5 + $0x458] sm:$0xff]
    %v391 = vld [vmem:[#allocation5 + $0x460] sm:$0xff]
    %v392 = vld [vmem:[#allocation5 + $0x468] sm:$0xff]
    %v393 = vld [vmem:[#allocation5 + $0x470] sm:$0xff]
    %v394 = vld [vmem:[#allocation5 + $0x478] sm:$0xff]
    %v395 = vld [vmem:[#allocation5 + $0x480] sm:$0xff]
    %v396 = vld [vmem:[#allocation5 + $0x488] sm:$0xff]
    %v397 = vld [vmem:[#allocation5 + $0x490] sm:$0xff]
    %v398 = vld [vmem:[#allocation5 + $0x498] sm:$0xff]
    %v399 = vld [vmem:[#allocation5 + $0x4a0] sm:$0x1]
    %v400 = vperm.slane %v399, 0
    %401 = vmatpush.msra.mxu0 %v382
    %402 = vmatpush.msra.mxu0 %v381
    %403 = vmatpush.msra.mxu0 %v380
    %404 = vmatpush.msra.mxu0 %v379
    %405 = vmatpush.msra.mxu0 %v378
    %406 = vmatpush.msra.mxu0 %v377
    %407 = vmatpush.msra.mxu0 %v376
    %408 = vmatpush.msra.mxu0 %v375
    %409 = vmatpush.msra.mxu0 %v374
    %410 = vmatpush.msra.mxu0 %v373
    %411 = vmatpush.msra.mxu0 %v372
    %412 = vmatpush.msra.mxu0 %v371
    %413 = vmatpush.msra.mxu0 %v370
    %414 = vmatpush.msra.mxu0 %v369
    %415 = vmatpush.msra.mxu0 %v368
    %416 = vmatpush.msra.mxu0 %v367
    %417 = vmatmul.f32.gmra.mxu0 %v366
    %v418 = vpop.f32.mrf.mxu0
    %v419 = vadd.f32 %v400, %v418
    %420 = vdwg.mxu0
    %421 = vmatpush.msra.mxu0 %v398
    %422 = vmatpush.msra.mxu0 %v397
    %423 = vmatpush.msra.mxu0 %v396
    %424 = vmatpush.msra.mxu0 %v395
    %425 = vmatpush.msra.mxu0 %v394
    %426 = vmatpush.msra.mxu0 %v393
    %427 = vmatpush.msra.mxu0 %v392
    %428 = vmatpush.msra.mxu0 %v391
    %429 = vmatpush.msra.mxu0 %v390
    %430 = vmatpush.msra.mxu0 %v389
    %431 = vmatpush.msra.mxu0 %v388
    %432 = vmatpush.msra.mxu0 %v387
    %433 = vmatpush.msra.mxu0 %v386
    %434 = vmatpush.msra.mxu0 %v385
    %435 = vmatpush.msra.mxu0 %v384
    %436 = vmatpush.msra.mxu0 %v383
    %437 = vmatmul.f32.gmra.mxu0 %v42
    %v438 = vpop.f32.mrf.mxu0
    %v439 = vadd.f32 %v419, %v438
    %440 = vdwg.mxu0
    %v441 = vmax.f32 %v439, 0.0
    %v442 = vand.u32 2147483647, %v439
    %v443 = vsub.f32 0.0, %v442
    %v444 = vmul.f32 %v443, 1.442695
    %v445 = vpow.pop %v444
    %v446 = vadd.f32 %v445, 1.0
    %v447 = vlog2.pop %v446
    %v448 = vmul.f32 %v447, 0.6931472
    %v449 = vmul.f32 -0.5, %v445
    %v450 = vadd.f32 %v449, 1.0
    %v451 = vmul.f32 %v450, %v445
    %v452 = vand.u32 2147483647, %v445
    %vm453 = vcmp.lt.f32.partialorder %v452, 0.0004427343
    %v454 = vsel %vm453, %v451, %v448
    %v455 = vadd.f32 %v441, %v454
    %v456 = vsub.f32 0.0, %v455
    %v457 = vld [vmem:[#allocation5 + $0x4a8] sm:$0xff]
    %v458 = vld [vmem:[#allocation5 + $0x4b0] sm:$0xff]
    %v459 = vld [vmem:[#allocation5 + $0x4b8] sm:$0xff]
    %v460 = vld [vmem:[#allocation5 + $0x4c0] sm:$0xff]
    %v461 = vld [vmem:[#allocation5 + $0x4c8] sm:$0xff]
    %v462 = vld [vmem:[#allocation5 + $0x4d0] sm:$0xff]
    %v463 = vld [vmem:[#allocation5 + $0x4d8] sm:$0xff]
    %v464 = vld [vmem:[#allocation5 + $0x4e0] sm:$0xff]
    %v465 = vld [vmem:[#allocation5 + $0x4e8] sm:$0xff]
    %v466 = vld [vmem:[#allocation5 + $0x4f0] sm:$0xff]
    %v467 = vld [vmem:[#allocation5 + $0x4f8] sm:$0xff]
    %v468 = vld [vmem:[#allocation5 + $0x500] sm:$0xff]
    %v469 = vld [vmem:[#allocation5 + $0x508] sm:$0xff]
    %v470 = vld [vmem:[#allocation5 + $0x510] sm:$0xff]
    %v471 = vld [vmem:[#allocation5 + $0x518] sm:$0xff]
    %v472 = vld [vmem:[#allocation5 + $0x520] sm:$0xff]
    %v473 = vld [vmem:[#allocation5 + $0x528] sm:$0xff]
    %v474 = vld [vmem:[#allocation5 + $0x530] sm:$0xff]
    %v475 = vld [vmem:[#allocation5 + $0x538] sm:$0xff]
    %v476 = vld [vmem:[#allocation5 + $0x540] sm:$0xff]
    %v477 = vld [vmem:[#allocation5 + $0x548] sm:$0xff]
    %v478 = vld [vmem:[#allocation5 + $0x550] sm:$0xff]
    %v479 = vld [vmem:[#allocation5 + $0x558] sm:$0xff]
    %v480 = vld [vmem:[#allocation5 + $0x560] sm:$0xff]
    %v481 = vld [vmem:[#allocation5 + $0x568] sm:$0xff]
    %v482 = vld [vmem:[#allocation5 + $0x570] sm:$0xff]
    %v483 = vld [vmem:[#allocation5 + $0x578] sm:$0xff]
    %v484 = vld [vmem:[#allocation5 + $0x580] sm:$0xff]
    %v485 = vld [vmem:[#allocation5 + $0x588] sm:$0xff]
    %v486 = vld [vmem:[#allocation5 + $0x590] sm:$0xff]
    %v487 = vld [vmem:[#allocation5 + $0x598] sm:$0xff]
    %v488 = vld [vmem:[#allocation5 + $0x5a0] sm:$0xff]
    %v489 = vld [vmem:[#allocation5 + $0x5a8] sm:$0x1]
    %v490 = vperm.slane %v489, 0
    %491 = vmatpush.msra.mxu0 %v472
    %492 = vmatpush.msra.mxu0 %v471
    %493 = vmatpush.msra.mxu0 %v470
    %494 = vmatpush.msra.mxu0 %v469
    %495 = vmatpush.msra.mxu0 %v468
    %496 = vmatpush.msra.mxu0 %v467
    %497 = vmatpush.msra.mxu0 %v466
    %498 = vmatpush.msra.mxu0 %v465
    %499 = vmatpush.msra.mxu0 %v464
    %500 = vmatpush.msra.mxu0 %v463
    %501 = vmatpush.msra.mxu0 %v462
    %502 = vmatpush.msra.mxu0 %v461
    %503 = vmatpush.msra.mxu0 %v460
    %504 = vmatpush.msra.mxu0 %v459
    %505 = vmatpush.msra.mxu0 %v458
    %506 = vmatpush.msra.mxu0 %v457
    %507 = vmatmul.f32.gmra.mxu0 %v456
    %v508 = vpop.f32.mrf.mxu0
    %v509 = vadd.f32 %v490, %v508
    %510 = vdwg.mxu0
    %511 = vmatpush.msra.mxu0 %v488
    %512 = vmatpush.msra.mxu0 %v487
    %513 = vmatpush.msra.mxu0 %v486
    %514 = vmatpush.msra.mxu0 %v485
    %515 = vmatpush.msra.mxu0 %v484
    %516 = vmatpush.msra.mxu0 %v483
    %517 = vmatpush.msra.mxu0 %v482
    %518 = vmatpush.msra.mxu0 %v481
    %519 = vmatpush.msra.mxu0 %v480
    %520 = vmatpush.msra.mxu0 %v479
    %521 = vmatpush.msra.mxu0 %v478
    %522 = vmatpush.msra.mxu0 %v477
    %523 = vmatpush.msra.mxu0 %v476
    %524 = vmatpush.msra.mxu0 %v475
    %525 = vmatpush.msra.mxu0 %v474
    %526 = vmatpush.msra.mxu0 %v473
    %527 = vmatmul.f32.gmra.mxu0 %v42
    %v528 = vpop.f32.mrf.mxu0
    %v529 = vadd.f32 %v509, %v528
    %530 = vdwg.mxu0
    %v531 = vld [vmem:[#allocation5 + $0x5b0] sm:$0xff]
    %v532 = vsub.f32 0.0, %v529
    %v533 = vmul.f32 %v532, 1.442695
    %v534 = vpow.pop %v533
    %v535 = vadd.f32 %v534, 1.0
    %v536 = vrcp.pop %v535
    %v537 = vmul.f32 %v535, %v536
    %v538 = vsub.f32 1.0, %v537
    %v539 = vmul.f32 %v536, %v538
    %v540 = vadd.f32 %v536, %v539
    %vm541 = vweird.f32 %v535
    %vm542 = vweird.f32 %v536
    %vm543 = vmor %vm541, %vm542
    %v544 = vsel %vm543, %v536, %v540
    %v545 = vand.u32 2147483647, %v535
    %vm546 = vcmp.eq.f32.partialorder %v545, 8.507059e+37
    %v547 = vand.u32 %v535, 2147483648
    %v548 = vor.u32 1.1754944e-38, %v547
    %v549 = vsel %vm546, %v548, %v544
    %v550 = vmul.f32 1.0, %v549
    %v551 = vsub.f32 0.0, %v550
    %553 = vset.pattern.permute.xlu0 0
    %554 = vperm.xlu0 %553, %v551
    %v555 = vpop.permute.xlu0 %554
    %v557 = vperm.slane %v531, 0
    %v558 = vmul.f32 %v555, %v557
    %v559 = vperm.slane %v531, 1
    %v560 = vmul.f32 %v555, %v559
    %v561 = vsub.f32 0.0, %v439
    %v562 = vmul.f32 %v561, 1.442695
    %v563 = vpow.pop %v562
    %v564 = vadd.f32 %v563, 1.0
    %v565 = vrcp.pop %v564
    %v566 = vmul.f32 %v564, %v565
    %v567 = vsub.f32 1.0, %v566
    %v568 = vmul.f32 %v565, %v567
    %v569 = vadd.f32 %v565, %v568
    %vm570 = vweird.f32 %v564
    %vm571 = vweird.f32 %v565
    %vm572 = vmor %vm570, %vm571
    %v573 = vsel %vm572, %v565, %v569
    %v574 = vand.u32 2147483647, %v564
    %vm575 = vcmp.eq.f32.partialorder %v574, 8.507059e+37
    %v576 = vand.u32 %v564, 2147483648
    %v577 = vor.u32 1.1754944e-38, %v576
    %v578 = vsel %vm575, %v577, %v573
    %v579 = vmul.f32 1.0, %v578
    %v580 = vsub.f32 0.0, %v579
    %v581 = vmul.f32 %v558, %v580
    %v582 = vld [vmem:[#allocation5 + $0x8b8] sm:$0xff]
    %v583 = vld [vmem:[#allocation5 + $0x8c0] sm:$0xff]
    %v584 = vld [vmem:[#allocation5 + $0x8c8] sm:$0xff]
    %v585 = vld [vmem:[#allocation5 + $0x8d0] sm:$0xff]
    %v586 = vld [vmem:[#allocation5 + $0x8d8] sm:$0xff]
    %v587 = vld [vmem:[#allocation5 + $0x8e0] sm:$0xff]
    %v588 = vld [vmem:[#allocation5 + $0x8e8] sm:$0xff]
    %v589 = vld [vmem:[#allocation5 + $0x8f0] sm:$0xff]
    %v590 = vld [vmem:[#allocation5 + $0x8f8] sm:$0xff]
    %v591 = vld [vmem:[#allocation5 + $0x900] sm:$0xff]
    %v592 = vld [vmem:[#allocation5 + $0x908] sm:$0xff]
    %v593 = vld [vmem:[#allocation5 + $0x910] sm:$0xff]
    %v594 = vld [vmem:[#allocation5 + $0x918] sm:$0xff]
    %v595 = vld [vmem:[#allocation5 + $0x920] sm:$0xff]
    %v596 = vld [vmem:[#allocation5 + $0x928] sm:$0xff]
    %v597 = vld [vmem:[#allocation5 + $0x930] sm:$0xff]
    %598 = vmatpush.msra.mxu0 %v597
    %599 = vmatpush.msra.mxu0 %v596
    %600 = vmatpush.msra.mxu0 %v595
    %601 = vmatpush.msra.mxu0 %v594
    %602 = vmatpush.msra.mxu0 %v593
    %603 = vmatpush.msra.mxu0 %v592
    %604 = vmatpush.msra.mxu0 %v591
    %605 = vmatpush.msra.mxu0 %v590
    %606 = vmatpush.msra.mxu0 %v589
    %607 = vmatpush.msra.mxu0 %v588
    %608 = vmatpush.msra.mxu0 %v587
    %609 = vmatpush.msra.mxu0 %v586
    %610 = vmatpush.msra.mxu0 %v585
    %611 = vmatpush.msra.mxu0 %v584
    %612 = vmatpush.msra.mxu0 %v583
    %613 = vmatpush.msra.mxu0 %v582
    %614 = vmatmul.f32.gmra.mxu0 %v581
    %v615 = vpop.f32.mrf.mxu0
    %v616 = vadd.f32 0.0, %v615
    %617 = vdwg.mxu0
    %v618 = vadd.f32 %v560, %v616
    %v619 = vld [vmem:[#allocation5 + $0x938] sm:$0xff]
    %v620 = vld [vmem:[#allocation5 + $0x940] sm:$0xff]
    %v621 = vld [vmem:[#allocation5 + $0x948] sm:$0xff]
    %v622 = vld [vmem:[#allocation5 + $0x950] sm:$0xff]
    %v623 = vld [vmem:[#allocation5 + $0x958] sm:$0xff]
    %v624 = vld [vmem:[#allocation5 + $0x960] sm:$0xff]
    %v625 = vld [vmem:[#allocation5 + $0x968] sm:$0xff]
    %v626 = vld [vmem:[#allocation5 + $0x970] sm:$0xff]
    %v627 = vld [vmem:[#allocation5 + $0x978] sm:$0xff]
    %v628 = vld [vmem:[#allocation5 + $0x980] sm:$0xff]
    %v629 = vld [vmem:[#allocation5 + $0x988] sm:$0xff]
    %v630 = vld [vmem:[#allocation5 + $0x990] sm:$0xff]
    %v631 = vld [vmem:[#allocation5 + $0x998] sm:$0xff]
    %v632 = vld [vmem:[#allocation5 + $0x9a0] sm:$0xff]
    %v633 = vld [vmem:[#allocation5 + $0x9a8] sm:$0xff]
    %v634 = vld [vmem:[#allocation5 + $0x9b0] sm:$0xff]
    %635 = vmatpush.msra.mxu0 %v634
    %636 = vmatpush.msra.mxu0 %v633
    %637 = vmatpush.msra.mxu0 %v632
    %638 = vmatpush.msra.mxu0 %v631
    %639 = vmatpush.msra.mxu0 %v630
    %640 = vmatpush.msra.mxu0 %v629
    %641 = vmatpush.msra.mxu0 %v628
    %642 = vmatpush.msra.mxu0 %v627
    %643 = vmatpush.msra.mxu0 %v626
    %644 = vmatpush.msra.mxu0 %v625
    %645 = vmatpush.msra.mxu0 %v624
    %646 = vmatpush.msra.mxu0 %v623
    %647 = vmatpush.msra.mxu0 %v622
    %648 = vmatpush.msra.mxu0 %v621
    %649 = vmatpush.msra.mxu0 %v620
    %650 = vmatpush.msra.mxu0 %v619
    %651 = vmatmul.f32.gmra.mxu0 %v581
    %v652 = vpop.f32.mrf.mxu0
    %v653 = vadd.f32 0.0, %v652
    %654 = vdwg.mxu0
    %v655 = vsub.f32 0.0, %v349
    %v656 = vmul.f32 %v655, 1.442695
    %v657 = vpow.pop %v656
    %v658 = vadd.f32 %v657, 1.0
    %v659 = vrcp.pop %v658
    %v660 = vmul.f32 %v658, %v659
    %v661 = vsub.f32 1.0, %v660
    %v662 = vmul.f32 %v659, %v661
    %v663 = vadd.f32 %v659, %v662
    %vm664 = vweird.f32 %v658
    %vm665 = vweird.f32 %v659
    %vm666 = vmor %vm664, %vm665
    %v667 = vsel %vm666, %v659, %v663
    %v668 = vand.u32 2147483647, %v658
    %vm669 = vcmp.eq.f32.partialorder %v668, 8.507059e+37
    %v670 = vand.u32 %v658, 2147483648
    %v671 = vor.u32 1.1754944e-38, %v670
    %v672 = vsel %vm669, %v671, %v667
    %v673 = vmul.f32 1.0, %v672
    %v674 = vsub.f32 0.0, %v673
    %v675 = vmul.f32 %v653, %v674
    %v676 = vld [vmem:[#allocation5 + $0x7b8] sm:$0xff]
    %v677 = vld [vmem:[#allocation5 + $0x7c0] sm:$0xff]
    %v678 = vld [vmem:[#allocation5 + $0x7c8] sm:$0xff]
    %v679 = vld [vmem:[#allocation5 + $0x7d0] sm:$0xff]
    %v680 = vld [vmem:[#allocation5 + $0x7d8] sm:$0xff]
    %v681 = vld [vmem:[#allocation5 + $0x7e0] sm:$0xff]
    %v682 = vld [vmem:[#allocation5 + $0x7e8] sm:$0xff]
    %v683 = vld [vmem:[#allocation5 + $0x7f0] sm:$0xff]
    %v684 = vld [vmem:[#allocation5 + $0x7f8] sm:$0xff]
    %v685 = vld [vmem:[#allocation5 + $0x800] sm:$0xff]
    %v686 = vld [vmem:[#allocation5 + $0x808] sm:$0xff]
    %v687 = vld [vmem:[#allocation5 + $0x810] sm:$0xff]
    %v688 = vld [vmem:[#allocation5 + $0x818] sm:$0xff]
    %v689 = vld [vmem:[#allocation5 + $0x820] sm:$0xff]
    %v690 = vld [vmem:[#allocation5 + $0x828] sm:$0xff]
    %v691 = vld [vmem:[#allocation5 + $0x830] sm:$0xff]
    %692 = vmatpush.msra.mxu0 %v691
    %693 = vmatpush.msra.mxu0 %v690
    %694 = vmatpush.msra.mxu0 %v689
    %695 = vmatpush.msra.mxu0 %v688
    %696 = vmatpush.msra.mxu0 %v687
    %697 = vmatpush.msra.mxu0 %v686
    %698 = vmatpush.msra.mxu0 %v685
    %699 = vmatpush.msra.mxu0 %v684
    %700 = vmatpush.msra.mxu0 %v683
    %701 = vmatpush.msra.mxu0 %v682
    %702 = vmatpush.msra.mxu0 %v681
    %703 = vmatpush.msra.mxu0 %v680
    %704 = vmatpush.msra.mxu0 %v679
    %705 = vmatpush.msra.mxu0 %v678
    %706 = vmatpush.msra.mxu0 %v677
    %707 = vmatpush.msra.mxu0 %v676
    %708 = vmatmul.f32.gmra.mxu0 %v675
    %v709 = vpop.f32.mrf.mxu0
    %v710 = vadd.f32 0.0, %v709
    %711 = vdwg.mxu0
    %v712 = vadd.f32 %v618, %v710
    %v713 = vld [vmem:[#allocation5 + $0x838] sm:$0xff]
    %v714 = vld [vmem:[#allocation5 + $0x840] sm:$0xff]
    %v715 = vld [vmem:[#allocation5 + $0x848] sm:$0xff]
    %v716 = vld [vmem:[#allocation5 + $0x850] sm:$0xff]
    %v717 = vld [vmem:[#allocation5 + $0x858] sm:$0xff]
    %v718 = vld [vmem:[#allocation5 + $0x860] sm:$0xff]
    %v719 = vld [vmem:[#allocation5 + $0x868] sm:$0xff]
    %v720 = vld [vmem:[#allocation5 + $0x870] sm:$0xff]
    %v721 = vld [vmem:[#allocation5 + $0x878] sm:$0xff]
    %v722 = vld [vmem:[#allocation5 + $0x880] sm:$0xff]
    %v723 = vld [vmem:[#allocation5 + $0x888] sm:$0xff]
    %v724 = vld [vmem:[#allocation5 + $0x890] sm:$0xff]
    %v725 = vld [vmem:[#allocation5 + $0x898] sm:$0xff]
    %v726 = vld [vmem:[#allocation5 + $0x8a0] sm:$0xff]
    %v727 = vld [vmem:[#allocation5 + $0x8a8] sm:$0xff]
    %v728 = vld [vmem:[#allocation5 + $0x8b0] sm:$0xff]
    %729 = vmatpush.msra.mxu0 %v728
    %730 = vmatpush.msra.mxu0 %v727
    %731 = vmatpush.msra.mxu0 %v726
    %732 = vmatpush.msra.mxu0 %v725
    %733 = vmatpush.msra.mxu0 %v724
    %734 = vmatpush.msra.mxu0 %v723
    %735 = vmatpush.msra.mxu0 %v722
    %736 = vmatpush.msra.mxu0 %v721
    %737 = vmatpush.msra.mxu0 %v720
    %738 = vmatpush.msra.mxu0 %v719
    %739 = vmatpush.msra.mxu0 %v718
    %740 = vmatpush.msra.mxu0 %v717
    %741 = vmatpush.msra.mxu0 %v716
    %742 = vmatpush.msra.mxu0 %v715
    %743 = vmatpush.msra.mxu0 %v714
    %744 = vmatpush.msra.mxu0 %v713
    %745 = vmatmul.f32.gmra.mxu0 %v675
    %v746 = vpop.f32.mrf.mxu0
    %v747 = vadd.f32 0.0, %v746
    %748 = vdwg.mxu0
    %v749 = vsub.f32 0.0, %v259
    %v750 = vmul.f32 %v749, 1.442695
    %v751 = vpow.pop %v750
    %v752 = vadd.f32 %v751, 1.0
    %v753 = vrcp.pop %v752
    %v754 = vmul.f32 %v752, %v753
    %v755 = vsub.f32 1.0, %v754
    %v756 = vmul.f32 %v753, %v755
    %v757 = vadd.f32 %v753, %v756
    %vm758 = vweird.f32 %v752
    %vm759 = vweird.f32 %v753
    %vm760 = vmor %vm758, %vm759
    %v761 = vsel %vm760, %v753, %v757
    %v762 = vand.u32 2147483647, %v752
    %vm763 = vcmp.eq.f32.partialorder %v762, 8.507059e+37
    %v764 = vand.u32 %v752, 2147483648
    %v765 = vor.u32 1.1754944e-38, %v764
    %v766 = vsel %vm763, %v765, %v761
    %v767 = vmul.f32 1.0, %v766
    %v768 = vsub.f32 0.0, %v767
    %v769 = vmul.f32 %v747, %v768
    %v770 = vld [vmem:[#allocation5 + $0x6b8] sm:$0xff]
    %v771 = vld [vmem:[#allocation5 + $0x6c0] sm:$0xff]
    %v772 = vld [vmem:[#allocation5 + $0x6c8] sm:$0xff]
    %v773 = vld [vmem:[#allocation5 + $0x6d0] sm:$0xff]
    %v774 = vld [vmem:[#allocation5 + $0x6d8] sm:$0xff]
    %v775 = vld [vmem:[#allocation5 + $0x6e0] sm:$0xff]
    %v776 = vld [vmem:[#allocation5 + $0x6e8] sm:$0xff]
    %v777 = vld [vmem:[#allocation5 + $0x6f0] sm:$0xff]
    %v778 = vld [vmem:[#allocation5 + $0x6f8] sm:$0xff]
    %v779 = vld [vmem:[#allocation5 + $0x700] sm:$0xff]
    %v780 = vld [vmem:[#allocation5 + $0x708] sm:$0xff]
    %v781 = vld [vmem:[#allocation5 + $0x710] sm:$0xff]
    %v782 = vld [vmem:[#allocation5 + $0x718] sm:$0xff]
    %v783 = vld [vmem:[#allocation5 + $0x720] sm:$0xff]
    %v784 = vld [vmem:[#allocation5 + $0x728] sm:$0xff]
    %v785 = vld [vmem:[#allocation5 + $0x730] sm:$0xff]
    %786 = vmatpush.msra.mxu0 %v785
    %787 = vmatpush.msra.mxu0 %v784
    %788 = vmatpush.msra.mxu0 %v783
    %789 = vmatpush.msra.mxu0 %v782
    %790 = vmatpush.msra.mxu0 %v781
    %791 = vmatpush.msra.mxu0 %v780
    %792 = vmatpush.msra.mxu0 %v779
    %793 = vmatpush.msra.mxu0 %v778
    %794 = vmatpush.msra.mxu0 %v777
    %795 = vmatpush.msra.mxu0 %v776
    %796 = vmatpush.msra.mxu0 %v775
    %797 = vmatpush.msra.mxu0 %v774
    %798 = vmatpush.msra.mxu0 %v773
    %799 = vmatpush.msra.mxu0 %v772
    %800 = vmatpush.msra.mxu0 %v771
    %801 = vmatpush.msra.mxu0 %v770
    %802 = vmatmul.f32.gmra.mxu0 %v769
    %v803 = vpop.f32.mrf.mxu0
    %v804 = vadd.f32 0.0, %v803
    %805 = vdwg.mxu0
    %v806 = vadd.f32 %v712, %v804
    %v807 = vld [vmem:[#allocation5 + $0x738] sm:$0xff]
    %v808 = vld [vmem:[#allocation5 + $0x740] sm:$0xff]
    %v809 = vld [vmem:[#allocation5 + $0x748] sm:$0xff]
    %v810 = vld [vmem:[#allocation5 + $0x750] sm:$0xff]
    %v811 = vld [vmem:[#allocation5 + $0x758] sm:$0xff]
    %v812 = vld [vmem:[#allocation5 + $0x760] sm:$0xff]
    %v813 = vld [vmem:[#allocation5 + $0x768] sm:$0xff]
    %v814 = vld [vmem:[#allocation5 + $0x770] sm:$0xff]
    %v815 = vld [vmem:[#allocation5 + $0x778] sm:$0xff]
    %v816 = vld [vmem:[#allocation5 + $0x780] sm:$0xff]
    %v817 = vld [vmem:[#allocation5 + $0x788] sm:$0xff]
    %v818 = vld [vmem:[#allocation5 + $0x790] sm:$0xff]
    %v819 = vld [vmem:[#allocation5 + $0x798] sm:$0xff]
    %v820 = vld [vmem:[#allocation5 + $0x7a0] sm:$0xff]
    %v821 = vld [vmem:[#allocation5 + $0x7a8] sm:$0xff]
    %v822 = vld [vmem:[#allocation5 + $0x7b0] sm:$0xff]
    %823 = vmatpush.msra.mxu0 %v822
    %824 = vmatpush.msra.mxu0 %v821
    %825 = vmatpush.msra.mxu0 %v820
    %826 = vmatpush.msra.mxu0 %v819
    %827 = vmatpush.msra.mxu0 %v818
    %828 = vmatpush.msra.mxu0 %v817
    %829 = vmatpush.msra.mxu0 %v816
    %830 = vmatpush.msra.mxu0 %v815
    %831 = vmatpush.msra.mxu0 %v814
    %832 = vmatpush.msra.mxu0 %v813
    %833 = vmatpush.msra.mxu0 %v812
    %834 = vmatpush.msra.mxu0 %v811
    %835 = vmatpush.msra.mxu0 %v810
    %836 = vmatpush.msra.mxu0 %v809
    %837 = vmatpush.msra.mxu0 %v808
    %838 = vmatpush.msra.mxu0 %v807
    %839 = vmatmul.f32.gmra.mxu0 %v769
    %v840 = vpop.f32.mrf.mxu0
    %v841 = vadd.f32 0.0, %v840
    %842 = vdwg.mxu0
    %v843 = vsub.f32 0.0, %v169
    %v844 = vmul.f32 %v843, 1.442695
    %v845 = vpow.pop %v844
    %v846 = vadd.f32 %v845, 1.0
    %v847 = vrcp.pop %v846
    %v848 = vmul.f32 %v846, %v847
    %v849 = vsub.f32 1.0, %v848
    %v850 = vmul.f32 %v847, %v849
    %v851 = vadd.f32 %v847, %v850
    %vm852 = vweird.f32 %v846
    %vm853 = vweird.f32 %v847
    %vm854 = vmor %vm852, %vm853
    %v855 = vsel %vm854, %v847, %v851
    %v856 = vand.u32 2147483647, %v846
    %vm857 = vcmp.eq.f32.partialorder %v856, 8.507059e+37
    %v858 = vand.u32 %v846, 2147483648
    %v859 = vor.u32 1.1754944e-38, %v858
    %v860 = vsel %vm857, %v859, %v855
    %v861 = vmul.f32 1.0, %v860
    %v862 = vsub.f32 0.0, %v861
    %v863 = vmul.f32 %v841, %v862
    %v864 = vld [vmem:[#allocation5 + $0x5b8] sm:$0xff]
    %v865 = vld [vmem:[#allocation5 + $0x5c0] sm:$0xff]
    %v866 = vld [vmem:[#allocation5 + $0x5c8] sm:$0xff]
    %v867 = vld [vmem:[#allocation5 + $0x5d0] sm:$0xff]
    %v868 = vld [vmem:[#allocation5 + $0x5d8] sm:$0xff]
    %v869 = vld [vmem:[#allocation5 + $0x5e0] sm:$0xff]
    %v870 = vld [vmem:[#allocation5 + $0x5e8] sm:$0xff]
    %v871 = vld [vmem:[#allocation5 + $0x5f0] sm:$0xff]
    %v872 = vld [vmem:[#allocation5 + $0x5f8] sm:$0xff]
    %v873 = vld [vmem:[#allocation5 + $0x600] sm:$0xff]
    %v874 = vld [vmem:[#allocation5 + $0x608] sm:$0xff]
    %v875 = vld [vmem:[#allocation5 + $0x610] sm:$0xff]
    %v876 = vld [vmem:[#allocation5 + $0x618] sm:$0xff]
    %v877 = vld [vmem:[#allocation5 + $0x620] sm:$0xff]
    %v878 = vld [vmem:[#allocation5 + $0x628] sm:$0xff]
    %v879 = vld [vmem:[#allocation5 + $0x630] sm:$0xff]
    %880 = vmatpush.msra.mxu0 %v879
    %881 = vmatpush.msra.mxu0 %v878
    %882 = vmatpush.msra.mxu0 %v877
    %883 = vmatpush.msra.mxu0 %v876
    %884 = vmatpush.msra.mxu0 %v875
    %885 = vmatpush.msra.mxu0 %v874
    %886 = vmatpush.msra.mxu0 %v873
    %887 = vmatpush.msra.mxu0 %v872
    %888 = vmatpush.msra.mxu0 %v871
    %889 = vmatpush.msra.mxu0 %v870
    %890 = vmatpush.msra.mxu0 %v869
    %891 = vmatpush.msra.mxu0 %v868
    %892 = vmatpush.msra.mxu0 %v867
    %893 = vmatpush.msra.mxu0 %v866
    %894 = vmatpush.msra.mxu0 %v865
    %895 = vmatpush.msra.mxu0 %v864
    %896 = vmatmul.f32.gmra.mxu0 %v863
    %v897 = vpop.f32.mrf.mxu0
    %v898 = vadd.f32 0.0, %v897
    %899 = vdwg.mxu0
    %v900 = vadd.f32 %v806, %v898
    %v901 = vld [vmem:[#allocation5 + $0x638] sm:$0xff]
    %v902 = vld [vmem:[#allocation5 + $0x640] sm:$0xff]
    %v903 = vld [vmem:[#allocation5 + $0x648] sm:$0xff]
    %v904 = vld [vmem:[#allocation5 + $0x650] sm:$0xff]
    %v905 = vld [vmem:[#allocation5 + $0x658] sm:$0xff]
    %v906 = vld [vmem:[#allocation5 + $0x660] sm:$0xff]
    %v907 = vld [vmem:[#allocation5 + $0x668] sm:$0xff]
    %v908 = vld [vmem:[#allocation5 + $0x670] sm:$0xff]
    %v909 = vld [vmem:[#allocation5 + $0x678] sm:$0xff]
    %v910 = vld [vmem:[#allocation5 + $0x680] sm:$0xff]
    %v911 = vld [vmem:[#allocation5 + $0x688] sm:$0xff]
    %v912 = vld [vmem:[#allocation5 + $0x690] sm:$0xff]
    %v913 = vld [vmem:[#allocation5 + $0x698] sm:$0xff]
    %v914 = vld [vmem:[#allocation5 + $0x6a0] sm:$0xff]
    %v915 = vld [vmem:[#allocation5 + $0x6a8] sm:$0xff]
    %v916 = vld [vmem:[#allocation5 + $0x6b0] sm:$0xff]
    %917 = vmatpush.msra.mxu0 %v916
    %918 = vmatpush.msra.mxu0 %v915
    %919 = vmatpush.msra.mxu0 %v914
    %920 = vmatpush.msra.mxu0 %v913
    %921 = vmatpush.msra.mxu0 %v912
    %922 = vmatpush.msra.mxu0 %v911
    %923 = vmatpush.msra.mxu0 %v910
    %924 = vmatpush.msra.mxu0 %v909
    %925 = vmatpush.msra.mxu0 %v908
    %926 = vmatpush.msra.mxu0 %v907
    %927 = vmatpush.msra.mxu0 %v906
    %928 = vmatpush.msra.mxu0 %v905
    %929 = vmatpush.msra.mxu0 %v904
    %930 = vmatpush.msra.mxu0 %v903
    %931 = vmatpush.msra.mxu0 %v902
    %932 = vmatpush.msra.mxu0 %v901
    %933 = vmatmul.f32.gmra.mxu0 %v863
    %v934 = vpop.f32.mrf.mxu0
    %v935 = vadd.f32 0.0, %v934
    %936 = vdwg.mxu0
    %v937 = vsub.f32 0.0, %v79
    %v938 = vmul.f32 %v937, 1.442695
    %v939 = vpow.pop %v938
    %v940 = vadd.f32 %v939, 1.0
    %v941 = vrcp.pop %v940
    %v942 = vmul.f32 %v940, %v941
    %v943 = vsub.f32 1.0, %v942
    %v944 = vmul.f32 %v941, %v943
    %v945 = vadd.f32 %v941, %v944
    %vm946 = vweird.f32 %v940
    %vm947 = vweird.f32 %v941
    %vm948 = vmor %vm946, %vm947
    %v949 = vsel %vm948, %v941, %v945
    %v950 = vand.u32 2147483647, %v940
    %vm951 = vcmp.eq.f32.partialorder %v950, 8.507059e+37
    %v952 = vand.u32 %v940, 2147483648
    %v953 = vor.u32 1.1754944e-38, %v952
    %v954 = vsel %vm951, %v953, %v949
    %v955 = vmul.f32 1.0, %v954
    %v956 = vsub.f32 0.0, %v955
    %v957 = vmul.f32 %v935, %v956
    %v958 = vld [vmem:[#allocation5 + $0x9b8] sm:$0xff]
    %v959 = vld [vmem:[#allocation5 + $0x9c0] sm:$0xff]
    %v960 = vld [vmem:[#allocation5 + $0x9c8] sm:$0xff]
    %v961 = vld [vmem:[#allocation5 + $0x9d0] sm:$0xff]
    %v962 = vld [vmem:[#allocation5 + $0x9d8] sm:$0xff]
    %v963 = vld [vmem:[#allocation5 + $0x9e0] sm:$0xff]
    %v964 = vld [vmem:[#allocation5 + $0x9e8] sm:$0xff]
    %v965 = vld [vmem:[#allocation5 + $0x9f0] sm:$0xff]
    %v966 = vld [vmem:[#allocation5 + $0x9f8] sm:$0xff]
    %v967 = vld [vmem:[#allocation5 + $0xa00] sm:$0xff]
    %v968 = vld [vmem:[#allocation5 + $0xa08] sm:$0xff]
    %v969 = vld [vmem:[#allocation5 + $0xa10] sm:$0xff]
    %v970 = vld [vmem:[#allocation5 + $0xa18] sm:$0xff]
    %v971 = vld [vmem:[#allocation5 + $0xa20] sm:$0xff]
    %v972 = vld [vmem:[#allocation5 + $0xa28] sm:$0xff]
    %v973 = vld [vmem:[#allocation5 + $0xa30] sm:$0xff]
    %974 = vmatpush.msra.mxu0 %v973
    %975 = vmatpush.msra.mxu0 %v972
    %976 = vmatpush.msra.mxu0 %v971
    %977 = vmatpush.msra.mxu0 %v970
    %978 = vmatpush.msra.mxu0 %v969
    %979 = vmatpush.msra.mxu0 %v968
    %980 = vmatpush.msra.mxu0 %v967
    %981 = vmatpush.msra.mxu0 %v966
    %982 = vmatpush.msra.mxu0 %v965
    %983 = vmatpush.msra.mxu0 %v964
    %984 = vmatpush.msra.mxu0 %v963
    %985 = vmatpush.msra.mxu0 %v962
    %986 = vmatpush.msra.mxu0 %v961
    %987 = vmatpush.msra.mxu0 %v960
    %988 = vmatpush.msra.mxu0 %v959
    %989 = vmatpush.msra.mxu0 %v958
    %990 = vmatmul.f32.gmra.mxu0 %v957
    %v991 = vpop.f32.mrf.mxu0
    %v992 = vadd.f32 0.0, %v991
    %993 = vdwg.mxu0
    %v994 = vadd.f32 %v900, %v992
    %v995 = vld [vmem:[#allocation5 + $0xa38] sm:$0xff]
    %v996 = vld [vmem:[#allocation5 + $0xa40] sm:$0xff]
    %v997 = vld [vmem:[#allocation5 + $0xa48] sm:$0xff]
    %v998 = vld [vmem:[#allocation5 + $0xa50] sm:$0xff]
    %v999 = vld [vmem:[#allocation5 + $0xa58] sm:$0xff]
    %v1000 = vld [vmem:[#allocation5 + $0xa60] sm:$0xff]
    %v1001 = vld [vmem:[#allocation5 + $0xa68] sm:$0xff]
    %v1002 = vld [vmem:[#allocation5 + $0xa70] sm:$0xff]
    %v1003 = vld [vmem:[#allocation5 + $0xa78] sm:$0xff]
    %v1004 = vld [vmem:[#allocation5 + $0xa80] sm:$0xff]
    %v1005 = vld [vmem:[#allocation5 + $0xa88] sm:$0xff]
    %v1006 = vld [vmem:[#allocation5 + $0xa90] sm:$0xff]
    %v1007 = vld [vmem:[#allocation5 + $0xa98] sm:$0xff]
    %v1008 = vld [vmem:[#allocation5 + $0xaa0] sm:$0xff]
    %v1009 = vld [vmem:[#allocation5 + $0xaa8] sm:$0xff]
    %v1010 = vld [vmem:[#allocation5 + $0xab0] sm:$0xff]
    %v1011 = vld [vmem:[#allocation5 + $0xab8] sm:$0x1]
    %v1012 = vperm.slane %v1011, 0
    %1013 = vmatpush.msra.mxu0 %v1010
    %1014 = vmatpush.msra.mxu0 %v1009
    %1015 = vmatpush.msra.mxu0 %v1008
    %1016 = vmatpush.msra.mxu0 %v1007
    %1017 = vmatpush.msra.mxu0 %v1006
    %1018 = vmatpush.msra.mxu0 %v1005
    %1019 = vmatpush.msra.mxu0 %v1004
    %1020 = vmatpush.msra.mxu0 %v1003
    %1021 = vmatpush.msra.mxu0 %v1002
    %1022 = vmatpush.msra.mxu0 %v1001
    %1023 = vmatpush.msra.mxu0 %v1000
    %1024 = vmatpush.msra.mxu0 %v999
    %1025 = vmatpush.msra.mxu0 %v998
    %1026 = vmatpush.msra.mxu0 %v997
    %1027 = vmatpush.msra.mxu0 %v996
    %1028 = vmatpush.msra.mxu0 %v995
    %1029 = vmatmul.f32.gmra.mxu0 %v42
    %v1030 = vpop.f32.mrf.mxu0
    %v1031 = vadd.f32 %v1012, %v1030
    %1032 = vdwg.mxu0
    %v1033 = vmul.f32 %v994, %v1031
    %v1034 = vld [vmem:[#allocation5 + $0xac0] sm:$0xff]
    %v1035 = vld [vmem:[#allocation5 + $0xac8] sm:$0xff]
    %v1036 = vld [vmem:[#allocation5 + $0xad0] sm:$0xff]
    %v1037 = vld [vmem:[#allocation5 + $0xad8] sm:$0xff]
    %v1038 = vld [vmem:[#allocation5 + $0xae0] sm:$0xff]
    %v1039 = vld [vmem:[#allocation5 + $0xae8] sm:$0xff]
    %v1040 = vld [vmem:[#allocation5 + $0xaf0] sm:$0xff]
    %v1041 = vld [vmem:[#allocation5 + $0xaf8] sm:$0xff]
    %v1042 = vld [vmem:[#allocation5 + $0xb00] sm:$0xff]
    %v1043 = vld [vmem:[#allocation5 + $0xb08] sm:$0xff]
    %v1044 = vld [vmem:[#allocation5 + $0xb10] sm:$0xff]
    %v1045 = vld [vmem:[#allocation5 + $0xb18] sm:$0xff]
    %v1046 = vld [vmem:[#allocation5 + $0xb20] sm:$0xff]
    %v1047 = vld [vmem:[#allocation5 + $0xb28] sm:$0xff]
    %v1048 = vld [vmem:[#allocation5 + $0xb30] sm:$0xff]
    %v1049 = vld [vmem:[#allocation5 + $0xb38] sm:$0xff]
    %v1050 = vld [vmem:[#allocation5 + $0xb40] sm:$0xff]
    %v1051 = vld [vmem:[#allocation5 + $0xb48] sm:$0xff]
    %v1052 = vld [vmem:[#allocation5 + $0xb50] sm:$0xff]
    %v1053 = vld [vmem:[#allocation5 + $0xb58] sm:$0xff]
    %v1054 = vld [vmem:[#allocation5 + $0xb60] sm:$0xff]
    %v1055 = vld [vmem:[#allocation5 + $0xb68] sm:$0xff]
    %v1056 = vld [vmem:[#allocation5 + $0xb70] sm:$0xff]
    %v1057 = vld [vmem:[#allocation5 + $0xb78] sm:$0xff]
    %v1058 = vld [vmem:[#allocation5 + $0xb80] sm:$0xff]
    %v1059 = vld [vmem:[#allocation5 + $0xb88] sm:$0xff]
    %v1060 = vld [vmem:[#allocation5 + $0xb90] sm:$0xff]
    %v1061 = vld [vmem:[#allocation5 + $0xb98] sm:$0xff]
    %v1062 = vld [vmem:[#allocation5 + $0xba0] sm:$0xff]
    %v1063 = vld [vmem:[#allocation5 + $0xba8] sm:$0xff]
    %v1064 = vld [vmem:[#allocation5 + $0xbb0] sm:$0xff]
    %v1065 = vld [vmem:[#allocation5 + $0xbb8] sm:$0xff]
    %v1066 = vld [vmem:[#allocation5 + $0xbc0] sm:$0x1]
    %v1067 = vperm.slane %v1066, 0
    %1068 = vmatpush.msra.mxu0 %v1049
    %1069 = vmatpush.msra.mxu0 %v1048
    %1070 = vmatpush.msra.mxu0 %v1047
    %1071 = vmatpush.msra.mxu0 %v1046
    %1072 = vmatpush.msra.mxu0 %v1045
    %1073 = vmatpush.msra.mxu0 %v1044
    %1074 = vmatpush.msra.mxu0 %v1043
    %1075 = vmatpush.msra.mxu0 %v1042
    %1076 = vmatpush.msra.mxu0 %v1041
    %1077 = vmatpush.msra.mxu0 %v1040
    %1078 = vmatpush.msra.mxu0 %v1039
    %1079 = vmatpush.msra.mxu0 %v1038
    %1080 = vmatpush.msra.mxu0 %v1037
    %1081 = vmatpush.msra.mxu0 %v1036
    %1082 = vmatpush.msra.mxu0 %v1035
    %1083 = vmatpush.msra.mxu0 %v1034
    %1084 = vmatmul.f32.gmra.mxu0 %v42
    %v1085 = vpop.f32.mrf.mxu0
    %v1086 = vadd.f32 %v1067, %v1085
    %1087 = vdwg.mxu0
    %1088 = vmatpush.msra.mxu0 %v1065
    %1089 = vmatpush.msra.mxu0 %v1064
    %1090 = vmatpush.msra.mxu0 %v1063
    %1091 = vmatpush.msra.mxu0 %v1062
    %1092 = vmatpush.msra.mxu0 %v1061
    %1093 = vmatpush.msra.mxu0 %v1060
    %1094 = vmatpush.msra.mxu0 %v1059
    %1095 = vmatpush.msra.mxu0 %v1058
    %1096 = vmatpush.msra.mxu0 %v1057
    %1097 = vmatpush.msra.mxu0 %v1056
    %1098 = vmatpush.msra.mxu0 %v1055
    %1099 = vmatpush.msra.mxu0 %v1054
    %1100 = vmatpush.msra.mxu0 %v1053
    %1101 = vmatpush.msra.mxu0 %v1052
    %1102 = vmatpush.msra.mxu0 %v1051
    %1103 = vmatpush.msra.mxu0 %v1050
    %1104 = vmatmul.f32.gmra.mxu0 %v1033
    %v1105 = vpop.f32.mrf.mxu0
    %v1106 = vadd.f32 %v1086, %v1105
    %1107 = vdwg.mxu0
    %v1108 = vmax.f32 %v1106, 0.0
    %v1109 = vand.u32 2147483647, %v1106
    %v1110 = vsub.f32 0.0, %v1109
    %v1111 = vmul.f32 %v1110, 1.442695
    %v1112 = vpow.pop %v1111
    %v1113 = vadd.f32 %v1112, 1.0
    %v1114 = vlog2.pop %v1113
    %v1115 = vmul.f32 %v1114, 0.6931472
    %v1116 = vmul.f32 -0.5, %v1112
    %v1117 = vadd.f32 %v1116, 1.0
    %v1118 = vmul.f32 %v1117, %v1112
    %v1119 = vand.u32 2147483647, %v1112
    %vm1120 = vcmp.lt.f32.partialorder %v1119, 0.0004427343
    %v1121 = vsel %vm1120, %v1118, %v1115
    %v1122 = vadd.f32 %v1108, %v1121
    %v1123 = vld [vmem:[#allocation5 + $0xbc8] sm:$0xff]
    %v1124 = vld [vmem:[#allocation5 + $0xbd0] sm:$0xff]
    %v1125 = vld [vmem:[#allocation5 + $0xbd8] sm:$0xff]
    %v1126 = vld [vmem:[#allocation5 + $0xbe0] sm:$0xff]
    %v1127 = vld [vmem:[#allocation5 + $0xbe8] sm:$0xff]
    %v1128 = vld [vmem:[#allocation5 + $0xbf0] sm:$0xff]
    %v1129 = vld [vmem:[#allocation5 + $0xbf8] sm:$0xff]
    %v1130 = vld [vmem:[#allocation5 + $0xc00] sm:$0xff]
    %v1131 = vld [vmem:[#allocation5 + $0xc08] sm:$0xff]
    %v1132 = vld [vmem:[#allocation5 + $0xc10] sm:$0xff]
    %v1133 = vld [vmem:[#allocation5 + $0xc18] sm:$0xff]
    %v1134 = vld [vmem:[#allocation5 + $0xc20] sm:$0xff]
    %v1135 = vld [vmem:[#allocation5 + $0xc28] sm:$0xff]
    %v1136 = vld [vmem:[#allocation5 + $0xc30] sm:$0xff]
    %v1137 = vld [vmem:[#allocation5 + $0xc38] sm:$0xff]
    %v1138 = vld [vmem:[#allocation5 + $0xc40] sm:$0xff]
    %v1139 = vld [vmem:[#allocation5 + $0xc48] sm:$0x1]
    %v1140 = vperm.slane %v1139, 0
    %1141 = vmatpush.msra.mxu0 %v1138
    %1142 = vmatpush.msra.mxu0 %v1137
    %1143 = vmatpush.msra.mxu0 %v1136
    %1144 = vmatpush.msra.mxu0 %v1135
    %1145 = vmatpush.msra.mxu0 %v1134
    %1146 = vmatpush.msra.mxu0 %v1133
    %1147 = vmatpush.msra.mxu0 %v1132
    %1148 = vmatpush.msra.mxu0 %v1131
    %1149 = vmatpush.msra.mxu0 %v1130
    %1150 = vmatpush.msra.mxu0 %v1129
    %1151 = vmatpush.msra.mxu0 %v1128
    %1152 = vmatpush.msra.mxu0 %v1127
    %1153 = vmatpush.msra.mxu0 %v1126
    %1154 = vmatpush.msra.mxu0 %v1125
    %1155 = vmatpush.msra.mxu0 %v1124
    %1156 = vmatpush.msra.mxu0 %v1123
    %1157 = vmatmul.f32.gmra.mxu0 %v42
    %v1158 = vpop.f32.mrf.mxu0
    %v1159 = vadd.f32 %v1140, %v1158
    %1160 = vdwg.mxu0
    %v1161 = vmax.f32 %v1159, 0.0
    %v1162 = vand.u32 2147483647, %v1159
    %v1163 = vsub.f32 0.0, %v1162
    %v1164 = vmul.f32 %v1163, 1.442695
    %v1165 = vpow.pop %v1164
    %v1166 = vadd.f32 %v1165, 1.0
    %v1167 = vlog2.pop %v1166
    %v1168 = vmul.f32 %v1167, 0.6931472
    %v1169 = vmul.f32 -0.5, %v1165
    %v1170 = vadd.f32 %v1169, 1.0
    %v1171 = vmul.f32 %v1170, %v1165
    %v1172 = vand.u32 2147483647, %v1165
    %vm1173 = vcmp.lt.f32.partialorder %v1172, 0.0004427343
    %v1174 = vsel %vm1173, %v1171, %v1168
    %v1175 = vadd.f32 %v1161, %v1174
    %v1176 = vld [vmem:[#allocation5 + $0xc50] sm:$0xff]
    %v1177 = vld [vmem:[#allocation5 + $0xc58] sm:$0xff]
    %v1178 = vld [vmem:[#allocation5 + $0xc60] sm:$0xff]
    %v1179 = vld [vmem:[#allocation5 + $0xc68] sm:$0xff]
    %v1180 = vld [vmem:[#allocation5 + $0xc70] sm:$0xff]
    %v1181 = vld [vmem:[#allocation5 + $0xc78] sm:$0xff]
    %v1182 = vld [vmem:[#allocation5 + $0xc80] sm:$0xff]
    %v1183 = vld [vmem:[#allocation5 + $0xc88] sm:$0xff]
    %v1184 = vld [vmem:[#allocation5 + $0xc90] sm:$0xff]
    %v1185 = vld [vmem:[#allocation5 + $0xc98] sm:$0xff]
    %v1186 = vld [vmem:[#allocation5 + $0xca0] sm:$0xff]
    %v1187 = vld [vmem:[#allocation5 + $0xca8] sm:$0xff]
    %v1188 = vld [vmem:[#allocation5 + $0xcb0] sm:$0xff]
    %v1189 = vld [vmem:[#allocation5 + $0xcb8] sm:$0xff]
    %v1190 = vld [vmem:[#allocation5 + $0xcc0] sm:$0xff]
    %v1191 = vld [vmem:[#allocation5 + $0xcc8] sm:$0xff]
    %v1192 = vld [vmem:[#allocation5 + $0xcd0] sm:$0x1]
    %v1193 = vperm.slane %v1192, 0
    %1194 = vmatpush.msra.mxu0 %v1191
    %1195 = vmatpush.msra.mxu0 %v1190
    %1196 = vmatpush.msra.mxu0 %v1189
    %1197 = vmatpush.msra.mxu0 %v1188
    %1198 = vmatpush.msra.mxu0 %v1187
    %1199 = vmatpush.msra.mxu0 %v1186
    %1200 = vmatpush.msra.mxu0 %v1185
    %1201 = vmatpush.msra.mxu0 %v1184
    %1202 = vmatpush.msra.mxu0 %v1183
    %1203 = vmatpush.msra.mxu0 %v1182
    %1204 = vmatpush.msra.mxu0 %v1181
    %1205 = vmatpush.msra.mxu0 %v1180
    %1206 = vmatpush.msra.mxu0 %v1179
    %1207 = vmatpush.msra.mxu0 %v1178
    %1208 = vmatpush.msra.mxu0 %v1177
    %1209 = vmatpush.msra.mxu0 %v1176
    %1210 = vmatmul.f32.gmra.mxu0 %v1175
    %v1211 = vpop.f32.mrf.mxu0
    %v1212 = vadd.f32 %v1193, %v1211
    %1213 = vdwg.mxu0
    %v1214 = vmax.f32 %v1212, 0.0
    %v1215 = vand.u32 2147483647, %v1212
    %v1216 = vsub.f32 0.0, %v1215
    %v1217 = vmul.f32 %v1216, 1.442695
    %v1218 = vpow.pop %v1217
    %v1219 = vadd.f32 %v1218, 1.0
    %v1220 = vlog2.pop %v1219
    %v1221 = vmul.f32 %v1220, 0.6931472
    %v1222 = vmul.f32 -0.5, %v1218
    %v1223 = vadd.f32 %v1222, 1.0
    %v1224 = vmul.f32 %v1223, %v1218
    %v1225 = vand.u32 2147483647, %v1218
    %vm1226 = vcmp.lt.f32.partialorder %v1225, 0.0004427343
    %v1227 = vsel %vm1226, %v1224, %v1221
    %v1228 = vadd.f32 %v1214, %v1227
    %v1229 = vld [vmem:[#allocation5 + $0xcd8] sm:$0xff]
    %v1230 = vld [vmem:[#allocation5 + $0xce0] sm:$0xff]
    %v1231 = vld [vmem:[#allocation5 + $0xce8] sm:$0xff]
    %v1232 = vld [vmem:[#allocation5 + $0xcf0] sm:$0xff]
    %v1233 = vld [vmem:[#allocation5 + $0xcf8] sm:$0xff]
    %v1234 = vld [vmem:[#allocation5 + $0xd00] sm:$0xff]
    %v1235 = vld [vmem:[#allocation5 + $0xd08] sm:$0xff]
    %v1236 = vld [vmem:[#allocation5 + $0xd10] sm:$0xff]
    %v1237 = vld [vmem:[#allocation5 + $0xd18] sm:$0xff]
    %v1238 = vld [vmem:[#allocation5 + $0xd20] sm:$0xff]
    %v1239 = vld [vmem:[#allocation5 + $0xd28] sm:$0xff]
    %v1240 = vld [vmem:[#allocation5 + $0xd30] sm:$0xff]
    %v1241 = vld [vmem:[#allocation5 + $0xd38] sm:$0xff]
    %v1242 = vld [vmem:[#allocation5 + $0xd40] sm:$0xff]
    %v1243 = vld [vmem:[#allocation5 + $0xd48] sm:$0xff]
    %v1244 = vld [vmem:[#allocation5 + $0xd50] sm:$0xff]
    %v1245 = vld [vmem:[#allocation5 + $0xd58] sm:$0x1]
    %v1246 = vperm.slane %v1245, 0
    %1247 = vmatpush.msra.mxu0 %v1244
    %1248 = vmatpush.msra.mxu0 %v1243
    %1249 = vmatpush.msra.mxu0 %v1242
    %1250 = vmatpush.msra.mxu0 %v1241
    %1251 = vmatpush.msra.mxu0 %v1240
    %1252 = vmatpush.msra.mxu0 %v1239
    %1253 = vmatpush.msra.mxu0 %v1238
    %1254 = vmatpush.msra.mxu0 %v1237
    %1255 = vmatpush.msra.mxu0 %v1236
    %1256 = vmatpush.msra.mxu0 %v1235
    %1257 = vmatpush.msra.mxu0 %v1234
    %1258 = vmatpush.msra.mxu0 %v1233
    %1259 = vmatpush.msra.mxu0 %v1232
    %1260 = vmatpush.msra.mxu0 %v1231
    %1261 = vmatpush.msra.mxu0 %v1230
    %1262 = vmatpush.msra.mxu0 %v1229
    %1263 = vmatmul.f32.gmra.mxu0 %v1175
    %v1264 = vpop.f32.mrf.mxu0
    %v1265 = vadd.f32 %v1246, %v1264
    %1266 = vdwg.mxu0
    %v1267 = vmul.f32 %v1122, %v1228
    %v1268 = vmul.f32 %v994, %v1265
    %v1269 = vld [vmem:[#allocation5 + $0xd60] sm:$0xff]
    %v1270 = vld [vmem:[#allocation5 + $0xd68] sm:$0xff]
    %v1271 = vld [vmem:[#allocation5 + $0xd70] sm:$0xff]
    %v1272 = vld [vmem:[#allocation5 + $0xd78] sm:$0xff]
    %v1273 = vld [vmem:[#allocation5 + $0xd80] sm:$0xff]
    %v1274 = vld [vmem:[#allocation5 + $0xd88] sm:$0xff]
    %v1275 = vld [vmem:[#allocation5 + $0xd90] sm:$0xff]
    %v1276 = vld [vmem:[#allocation5 + $0xd98] sm:$0xff]
    %v1277 = vld [vmem:[#allocation5 + $0xda0] sm:$0xff]
    %v1278 = vld [vmem:[#allocation5 + $0xda8] sm:$0xff]
    %v1279 = vld [vmem:[#allocation5 + $0xdb0] sm:$0xff]
    %v1280 = vld [vmem:[#allocation5 + $0xdb8] sm:$0xff]
    %v1281 = vld [vmem:[#allocation5 + $0xdc0] sm:$0xff]
    %v1282 = vld [vmem:[#allocation5 + $0xdc8] sm:$0xff]
    %v1283 = vld [vmem:[#allocation5 + $0xdd0] sm:$0xff]
    %v1284 = vld [vmem:[#allocation5 + $0xdd8] sm:$0xff]
    %v1285 = vld [vmem:[#allocation5 + $0xde0] sm:$0xff]
    %v1286 = vld [vmem:[#allocation5 + $0xde8] sm:$0xff]
    %v1287 = vld [vmem:[#allocation5 + $0xdf0] sm:$0xff]
    %v1288 = vld [vmem:[#allocation5 + $0xdf8] sm:$0xff]
    %v1289 = vld [vmem:[#allocation5 + $0xe00] sm:$0xff]
    %v1290 = vld [vmem:[#allocation5 + $0xe08] sm:$0xff]
    %v1291 = vld [vmem:[#allocation5 + $0xe10] sm:$0xff]
    %v1292 = vld [vmem:[#allocation5 + $0xe18] sm:$0xff]
    %v1293 = vld [vmem:[#allocation5 + $0xe20] sm:$0xff]
    %v1294 = vld [vmem:[#allocation5 + $0xe28] sm:$0xff]
    %v1295 = vld [vmem:[#allocation5 + $0xe30] sm:$0xff]
    %v1296 = vld [vmem:[#allocation5 + $0xe38] sm:$0xff]
    %v1297 = vld [vmem:[#allocation5 + $0xe40] sm:$0xff]
    %v1298 = vld [vmem:[#allocation5 + $0xe48] sm:$0xff]
    %v1299 = vld [vmem:[#allocation5 + $0xe50] sm:$0xff]
    %v1300 = vld [vmem:[#allocation5 + $0xe58] sm:$0xff]
    %v1301 = vld [vmem:[#allocation5 + $0xe60] sm:$0xff]
    %v1302 = vld [vmem:[#allocation5 + $0xe68] sm:$0xff]
    %v1303 = vld [vmem:[#allocation5 + $0xe70] sm:$0xff]
    %v1304 = vld [vmem:[#allocation5 + $0xe78] sm:$0xff]
    %v1305 = vld [vmem:[#allocation5 + $0xe80] sm:$0xff]
    %v1306 = vld [vmem:[#allocation5 + $0xe88] sm:$0xff]
    %v1307 = vld [vmem:[#allocation5 + $0xe90] sm:$0xff]
    %v1308 = vld [vmem:[#allocation5 + $0xe98] sm:$0xff]
    %v1309 = vld [vmem:[#allocation5 + $0xea0] sm:$0xff]
    %v1310 = vld [vmem:[#allocation5 + $0xea8] sm:$0xff]
    %v1311 = vld [vmem:[#allocation5 + $0xeb0] sm:$0xff]
    %v1312 = vld [vmem:[#allocation5 + $0xeb8] sm:$0xff]
    %v1313 = vld [vmem:[#allocation5 + $0xec0] sm:$0xff]
    %v1314 = vld [vmem:[#allocation5 + $0xec8] sm:$0xff]
    %v1315 = vld [vmem:[#allocation5 + $0xed0] sm:$0xff]
    %v1316 = vld [vmem:[#allocation5 + $0xed8] sm:$0xff]
    %v1317 = vld [vmem:[#allocation5 + $0xee0] sm:$0x1]
    %v1318 = vperm.slane %v1317, 0
    %1319 = vmatpush.msra.mxu0 %v1284
    %1320 = vmatpush.msra.mxu0 %v1283
    %1321 = vmatpush.msra.mxu0 %v1282
    %1322 = vmatpush.msra.mxu0 %v1281
    %1323 = vmatpush.msra.mxu0 %v1280
    %1324 = vmatpush.msra.mxu0 %v1279
    %1325 = vmatpush.msra.mxu0 %v1278
    %1326 = vmatpush.msra.mxu0 %v1277
    %1327 = vmatpush.msra.mxu0 %v1276
    %1328 = vmatpush.msra.mxu0 %v1275
    %1329 = vmatpush.msra.mxu0 %v1274
    %1330 = vmatpush.msra.mxu0 %v1273
    %1331 = vmatpush.msra.mxu0 %v1272
    %1332 = vmatpush.msra.mxu0 %v1271
    %1333 = vmatpush.msra.mxu0 %v1270
    %1334 = vmatpush.msra.mxu0 %v1269
    %1335 = vmatmul.f32.gmra.mxu0 %v1175
    %v1336 = vpop.f32.mrf.mxu0
    %v1337 = vadd.f32 %v1318, %v1336
    %1338 = vdwg.mxu0
    %1339 = vmatpush.msra.mxu0 %v1300
    %1340 = vmatpush.msra.mxu0 %v1299
    %1341 = vmatpush.msra.mxu0 %v1298
    %1342 = vmatpush.msra.mxu0 %v1297
    %1343 = vmatpush.msra.mxu0 %v1296
    %1344 = vmatpush.msra.mxu0 %v1295
    %1345 = vmatpush.msra.mxu0 %v1294
    %1346 = vmatpush.msra.mxu0 %v1293
    %1347 = vmatpush.msra.mxu0 %v1292
    %1348 = vmatpush.msra.mxu0 %v1291
    %1349 = vmatpush.msra.mxu0 %v1290
    %1350 = vmatpush.msra.mxu0 %v1289
    %1351 = vmatpush.msra.mxu0 %v1288
    %1352 = vmatpush.msra.mxu0 %v1287
    %1353 = vmatpush.msra.mxu0 %v1286
    %1354 = vmatpush.msra.mxu0 %v1285
    %1355 = vmatmul.f32.gmra.mxu0 %v1267
    %v1356 = vpop.f32.mrf.mxu0
    %v1357 = vadd.f32 %v1337, %v1356
    %1358 = vdwg.mxu0
    %1359 = vmatpush.msra.mxu0 %v1316
    %1360 = vmatpush.msra.mxu0 %v1315
    %1361 = vmatpush.msra.mxu0 %v1314
    %1362 = vmatpush.msra.mxu0 %v1313
    %1363 = vmatpush.msra.mxu0 %v1312
    %1364 = vmatpush.msra.mxu0 %v1311
    %1365 = vmatpush.msra.mxu0 %v1310
    %1366 = vmatpush.msra.mxu0 %v1309
    %1367 = vmatpush.msra.mxu0 %v1308
    %1368 = vmatpush.msra.mxu0 %v1307
    %1369 = vmatpush.msra.mxu0 %v1306
    %1370 = vmatpush.msra.mxu0 %v1305
    %1371 = vmatpush.msra.mxu0 %v1304
    %1372 = vmatpush.msra.mxu0 %v1303
    %1373 = vmatpush.msra.mxu0 %v1302
    %1374 = vmatpush.msra.mxu0 %v1301
    %1375 = vmatmul.f32.gmra.mxu0 %v1268
    %v1376 = vpop.f32.mrf.mxu0
    %v1377 = vadd.f32 %v1357, %v1376
    %1378 = vdwg.mxu0
    %v1379 = vmax.f32 %v1377, 0.0
    %v1380 = vand.u32 2147483647, %v1377
    %v1381 = vsub.f32 0.0, %v1380
    %v1382 = vmul.f32 %v1381, 1.442695
    %v1383 = vpow.pop %v1382
    %v1384 = vadd.f32 %v1383, 1.0
    %v1385 = vlog2.pop %v1384
    %v1386 = vmul.f32 %v1385, 0.6931472
    %v1387 = vmul.f32 -0.5, %v1383
    %v1388 = vadd.f32 %v1387, 1.0
    %v1389 = vmul.f32 %v1388, %v1383
    %v1390 = vand.u32 2147483647, %v1383
    %vm1391 = vcmp.lt.f32.partialorder %v1390, 0.0004427343
    %v1392 = vsel %vm1391, %v1389, %v1386
    %v1393 = vadd.f32 %v1379, %v1392
    %v1394 = vld [vmem:[#allocation5 + $0xee8] sm:$0xff]
    %v1395 = vld [vmem:[#allocation5 + $0xef0] sm:$0xff]
    %v1396 = vld [vmem:[#allocation5 + $0xef8] sm:$0xff]
    %v1397 = vld [vmem:[#allocation5 + $0xf00] sm:$0xff]
    %v1398 = vld [vmem:[#allocation5 + $0xf08] sm:$0xff]
    %v1399 = vld [vmem:[#allocation5 + $0xf10] sm:$0xff]
    %v1400 = vld [vmem:[#allocation5 + $0xf18] sm:$0xff]
    %v1401 = vld [vmem:[#allocation5 + $0xf20] sm:$0xff]
    %v1402 = vld [vmem:[#allocation5 + $0xf28] sm:$0xff]
    %v1403 = vld [vmem:[#allocation5 + $0xf30] sm:$0xff]
    %v1404 = vld [vmem:[#allocation5 + $0xf38] sm:$0xff]
    %v1405 = vld [vmem:[#allocation5 + $0xf40] sm:$0xff]
    %v1406 = vld [vmem:[#allocation5 + $0xf48] sm:$0xff]
    %v1407 = vld [vmem:[#allocation5 + $0xf50] sm:$0xff]
    %v1408 = vld [vmem:[#allocation5 + $0xf58] sm:$0xff]
    %v1409 = vld [vmem:[#allocation5 + $0xf60] sm:$0xff]
    %v1410 = vld [vmem:[#allocation5 + $0xf68] sm:$0x1]
    %v1411 = vperm.slane %v1410, 0
    %1412 = vmatpush.msra.mxu0 %v1409
    %1413 = vmatpush.msra.mxu0 %v1408
    %1414 = vmatpush.msra.mxu0 %v1407
    %1415 = vmatpush.msra.mxu0 %v1406
    %1416 = vmatpush.msra.mxu0 %v1405
    %1417 = vmatpush.msra.mxu0 %v1404
    %1418 = vmatpush.msra.mxu0 %v1403
    %1419 = vmatpush.msra.mxu0 %v1402
    %1420 = vmatpush.msra.mxu0 %v1401
    %1421 = vmatpush.msra.mxu0 %v1400
    %1422 = vmatpush.msra.mxu0 %v1399
    %1423 = vmatpush.msra.mxu0 %v1398
    %1424 = vmatpush.msra.mxu0 %v1397
    %1425 = vmatpush.msra.mxu0 %v1396
    %1426 = vmatpush.msra.mxu0 %v1395
    %1427 = vmatpush.msra.mxu0 %v1394
    %1428 = vmatmul.f32.gmra.mxu0 %v1175
    %v1429 = vpop.f32.mrf.mxu0
    %v1430 = vadd.f32 %v1411, %v1429
    %1431 = vdwg.mxu0
    %v1432 = vmax.f32 %v1430, 0.0
    %v1433 = vand.u32 2147483647, %v1430
    %v1434 = vsub.f32 0.0, %v1433
    %v1435 = vmul.f32 %v1434, 1.442695
    %v1436 = vpow.pop %v1435
    %v1437 = vadd.f32 %v1436, 1.0
    %v1438 = vlog2.pop %v1437
    %v1439 = vmul.f32 %v1438, 0.6931472
    %v1440 = vmul.f32 -0.5, %v1436
    %v1441 = vadd.f32 %v1440, 1.0
    %v1442 = vmul.f32 %v1441, %v1436
    %v1443 = vand.u32 2147483647, %v1436
    %vm1444 = vcmp.lt.f32.partialorder %v1443, 0.0004427343
    %v1445 = vsel %vm1444, %v1442, %v1439
    %v1446 = vadd.f32 %v1432, %v1445
    %v1447 = vld [vmem:[#allocation5 + $0xf70] sm:$0xff]
    %v1448 = vld [vmem:[#allocation5 + $0xf78] sm:$0xff]
    %v1449 = vld [vmem:[#allocation5 + $0xf80] sm:$0xff]
    %v1450 = vld [vmem:[#allocation5 + $0xf88] sm:$0xff]
    %v1451 = vld [vmem:[#allocation5 + $0xf90] sm:$0xff]
    %v1452 = vld [vmem:[#allocation5 + $0xf98] sm:$0xff]
    %v1453 = vld [vmem:[#allocation5 + $0xfa0] sm:$0xff]
    %v1454 = vld [vmem:[#allocation5 + $0xfa8] sm:$0xff]
    %v1455 = vld [vmem:[#allocation5 + $0xfb0] sm:$0xff]
    %v1456 = vld [vmem:[#allocation5 + $0xfb8] sm:$0xff]
    %v1457 = vld [vmem:[#allocation5 + $0xfc0] sm:$0xff]
    %v1458 = vld [vmem:[#allocation5 + $0xfc8] sm:$0xff]
    %v1459 = vld [vmem:[#allocation5 + $0xfd0] sm:$0xff]
    %v1460 = vld [vmem:[#allocation5 + $0xfd8] sm:$0xff]
    %v1461 = vld [vmem:[#allocation5 + $0xfe0] sm:$0xff]
    %v1462 = vld [vmem:[#allocation5 + $0xfe8] sm:$0xff]
    %v1463 = vld [vmem:[#allocation5 + $0xff0] sm:$0x1]
    %v1464 = vperm.slane %v1463, 0
    %1465 = vmatpush.msra.mxu0 %v1462
    %1466 = vmatpush.msra.mxu0 %v1461
    %1467 = vmatpush.msra.mxu0 %v1460
    %1468 = vmatpush.msra.mxu0 %v1459
    %1469 = vmatpush.msra.mxu0 %v1458
    %1470 = vmatpush.msra.mxu0 %v1457
    %1471 = vmatpush.msra.mxu0 %v1456
    %1472 = vmatpush.msra.mxu0 %v1455
    %1473 = vmatpush.msra.mxu0 %v1454
    %1474 = vmatpush.msra.mxu0 %v1453
    %1475 = vmatpush.msra.mxu0 %v1452
    %1476 = vmatpush.msra.mxu0 %v1451
    %1477 = vmatpush.msra.mxu0 %v1450
    %1478 = vmatpush.msra.mxu0 %v1449
    %1479 = vmatpush.msra.mxu0 %v1448
    %1480 = vmatpush.msra.mxu0 %v1447
    %1481 = vmatmul.f32.gmra.mxu0 %v1446
    %v1482 = vpop.f32.mrf.mxu0
    %v1483 = vadd.f32 %v1464, %v1482
    %1484 = vdwg.mxu0
    %v1485 = vmax.f32 %v1483, 0.0
    %v1486 = vand.u32 2147483647, %v1483
    %v1487 = vsub.f32 0.0, %v1486
    %v1488 = vmul.f32 %v1487, 1.442695
    %v1489 = vpow.pop %v1488
    %v1490 = vadd.f32 %v1489, 1.0
    %v1491 = vlog2.pop %v1490
    %v1492 = vmul.f32 %v1491, 0.6931472
    %v1493 = vmul.f32 -0.5, %v1489
    %v1494 = vadd.f32 %v1493, 1.0
    %v1495 = vmul.f32 %v1494, %v1489
    %v1496 = vand.u32 2147483647, %v1489
    %vm1497 = vcmp.lt.f32.partialorder %v1496, 0.0004427343
    %v1498 = vsel %vm1497, %v1495, %v1492
    %v1499 = vadd.f32 %v1485, %v1498
    %v1500 = vld [vmem:[#allocation5 + $0xff8] sm:$0xff]
    %v1501 = vld [vmem:[#allocation5 + $0x1000] sm:$0xff]
    %v1502 = vld [vmem:[#allocation5 + $0x1008] sm:$0xff]
    %v1503 = vld [vmem:[#allocation5 + $0x1010] sm:$0xff]
    %v1504 = vld [vmem:[#allocation5 + $0x1018] sm:$0xff]
    %v1505 = vld [vmem:[#allocation5 + $0x1020] sm:$0xff]
    %v1506 = vld [vmem:[#allocation5 + $0x1028] sm:$0xff]
    %v1507 = vld [vmem:[#allocation5 + $0x1030] sm:$0xff]
    %v1508 = vld [vmem:[#allocation5 + $0x1038] sm:$0xff]
    %v1509 = vld [vmem:[#allocation5 + $0x1040] sm:$0xff]
    %v1510 = vld [vmem:[#allocation5 + $0x1048] sm:$0xff]
    %v1511 = vld [vmem:[#allocation5 + $0x1050] sm:$0xff]
    %v1512 = vld [vmem:[#allocation5 + $0x1058] sm:$0xff]
    %v1513 = vld [vmem:[#allocation5 + $0x1060] sm:$0xff]
    %v1514 = vld [vmem:[#allocation5 + $0x1068] sm:$0xff]
    %v1515 = vld [vmem:[#allocation5 + $0x1070] sm:$0xff]
    %v1516 = vld [vmem:[#allocation5 + $0x1078] sm:$0x1]
    %v1517 = vperm.slane %v1516, 0
    %1518 = vmatpush.msra.mxu0 %v1515
    %1519 = vmatpush.msra.mxu0 %v1514
    %1520 = vmatpush.msra.mxu0 %v1513
    %1521 = vmatpush.msra.mxu0 %v1512
    %1522 = vmatpush.msra.mxu0 %v1511
    %1523 = vmatpush.msra.mxu0 %v1510
    %1524 = vmatpush.msra.mxu0 %v1509
    %1525 = vmatpush.msra.mxu0 %v1508
    %1526 = vmatpush.msra.mxu0 %v1507
    %1527 = vmatpush.msra.mxu0 %v1506
    %1528 = vmatpush.msra.mxu0 %v1505
    %1529 = vmatpush.msra.mxu0 %v1504
    %1530 = vmatpush.msra.mxu0 %v1503
    %1531 = vmatpush.msra.mxu0 %v1502
    %1532 = vmatpush.msra.mxu0 %v1501
    %1533 = vmatpush.msra.mxu0 %v1500
    %1534 = vmatmul.f32.gmra.mxu0 %v1446
    %v1535 = vpop.f32.mrf.mxu0
    %v1536 = vadd.f32 %v1517, %v1535
    %1537 = vdwg.mxu0
    %v1538 = vmul.f32 %v1393, %v1499
    %v1539 = vmul.f32 %v994, %v1536
    %v1540 = vld [vmem:[#allocation5 + $0x1080] sm:$0xff]
    %v1541 = vld [vmem:[#allocation5 + $0x1088] sm:$0xff]
    %v1542 = vld [vmem:[#allocation5 + $0x1090] sm:$0xff]
    %v1543 = vld [vmem:[#allocation5 + $0x1098] sm:$0xff]
    %v1544 = vld [vmem:[#allocation5 + $0x10a0] sm:$0xff]
    %v1545 = vld [vmem:[#allocation5 + $0x10a8] sm:$0xff]
    %v1546 = vld [vmem:[#allocation5 + $0x10b0] sm:$0xff]
    %v1547 = vld [vmem:[#allocation5 + $0x10b8] sm:$0xff]
    %v1548 = vld [vmem:[#allocation5 + $0x10c0] sm:$0xff]
    %v1549 = vld [vmem:[#allocation5 + $0x10c8] sm:$0xff]
    %v1550 = vld [vmem:[#allocation5 + $0x10d0] sm:$0xff]
    %v1551 = vld [vmem:[#allocation5 + $0x10d8] sm:$0xff]
    %v1552 = vld [vmem:[#allocation5 + $0x10e0] sm:$0xff]
    %v1553 = vld [vmem:[#allocation5 + $0x10e8] sm:$0xff]
    %v1554 = vld [vmem:[#allocation5 + $0x10f0] sm:$0xff]
    %v1555 = vld [vmem:[#allocation5 + $0x10f8] sm:$0xff]
    %v1556 = vld [vmem:[#allocation5 + $0x1100] sm:$0xff]
    %v1557 = vld [vmem:[#allocation5 + $0x1108] sm:$0xff]
    %v1558 = vld [vmem:[#allocation5 + $0x1110] sm:$0xff]
    %v1559 = vld [vmem:[#allocation5 + $0x1118] sm:$0xff]
    %v1560 = vld [vmem:[#allocation5 + $0x1120] sm:$0xff]
    %v1561 = vld [vmem:[#allocation5 + $0x1128] sm:$0xff]
    %v1562 = vld [vmem:[#allocation5 + $0x1130] sm:$0xff]
    %v1563 = vld [vmem:[#allocation5 + $0x1138] sm:$0xff]
    %v1564 = vld [vmem:[#allocation5 + $0x1140] sm:$0xff]
    %v1565 = vld [vmem:[#allocation5 + $0x1148] sm:$0xff]
    %v1566 = vld [vmem:[#allocation5 + $0x1150] sm:$0xff]
    %v1567 = vld [vmem:[#allocation5 + $0x1158] sm:$0xff]
    %v1568 = vld [vmem:[#allocation5 + $0x1160] sm:$0xff]
    %v1569 = vld [vmem:[#allocation5 + $0x1168] sm:$0xff]
    %v1570 = vld [vmem:[#allocation5 + $0x1170] sm:$0xff]
    %v1571 = vld [vmem:[#allocation5 + $0x1178] sm:$0xff]
    %v1572 = vld [vmem:[#allocation5 + $0x1180] sm:$0xff]
    %v1573 = vld [vmem:[#allocation5 + $0x1188] sm:$0xff]
    %v1574 = vld [vmem:[#allocation5 + $0x1190] sm:$0xff]
    %v1575 = vld [vmem:[#allocation5 + $0x1198] sm:$0xff]
    %v1576 = vld [vmem:[#allocation5 + $0x11a0] sm:$0xff]
    %v1577 = vld [vmem:[#allocation5 + $0x11a8] sm:$0xff]
    %v1578 = vld [vmem:[#allocation5 + $0x11b0] sm:$0xff]
    %v1579 = vld [vmem:[#allocation5 + $0x11b8] sm:$0xff]
    %v1580 = vld [vmem:[#allocation5 + $0x11c0] sm:$0xff]
    %v1581 = vld [vmem:[#allocation5 + $0x11c8] sm:$0xff]
    %v1582 = vld [vmem:[#allocation5 + $0x11d0] sm:$0xff]
    %v1583 = vld [vmem:[#allocation5 + $0x11d8] sm:$0xff]
    %v1584 = vld [vmem:[#allocation5 + $0x11e0] sm:$0xff]
    %v1585 = vld [vmem:[#allocation5 + $0x11e8] sm:$0xff]
    %v1586 = vld [vmem:[#allocation5 + $0x11f0] sm:$0xff]
    %v1587 = vld [vmem:[#allocation5 + $0x11f8] sm:$0xff]
    %v1588 = vld [vmem:[#allocation5 + $0x1200] sm:$0x1]
    %v1589 = vperm.slane %v1588, 0
    %1590 = vmatpush.msra.mxu0 %v1555
    %1591 = vmatpush.msra.mxu0 %v1554
    %1592 = vmatpush.msra.mxu0 %v1553
    %1593 = vmatpush.msra.mxu0 %v1552
    %1594 = vmatpush.msra.mxu0 %v1551
    %1595 = vmatpush.msra.mxu0 %v1550
    %1596 = vmatpush.msra.mxu0 %v1549
    %1597 = vmatpush.msra.mxu0 %v1548
    %1598 = vmatpush.msra.mxu0 %v1547
    %1599 = vmatpush.msra.mxu0 %v1546
    %1600 = vmatpush.msra.mxu0 %v1545
    %1601 = vmatpush.msra.mxu0 %v1544
    %1602 = vmatpush.msra.mxu0 %v1543
    %1603 = vmatpush.msra.mxu0 %v1542
    %1604 = vmatpush.msra.mxu0 %v1541
    %1605 = vmatpush.msra.mxu0 %v1540
    %1606 = vmatmul.f32.gmra.mxu0 %v1446
    %v1607 = vpop.f32.mrf.mxu0
    %v1608 = vadd.f32 %v1589, %v1607
    %1609 = vdwg.mxu0
    %1610 = vmatpush.msra.mxu0 %v1571
    %1611 = vmatpush.msra.mxu0 %v1570
    %1612 = vmatpush.msra.mxu0 %v1569
    %1613 = vmatpush.msra.mxu0 %v1568
    %1614 = vmatpush.msra.mxu0 %v1567
    %1615 = vmatpush.msra.mxu0 %v1566
    %1616 = vmatpush.msra.mxu0 %v1565
    %1617 = vmatpush.msra.mxu0 %v1564
    %1618 = vmatpush.msra.mxu0 %v1563
    %1619 = vmatpush.msra.mxu0 %v1562
    %1620 = vmatpush.msra.mxu0 %v1561
    %1621 = vmatpush.msra.mxu0 %v1560
    %1622 = vmatpush.msra.mxu0 %v1559
    %1623 = vmatpush.msra.mxu0 %v1558
    %1624 = vmatpush.msra.mxu0 %v1557
    %1625 = vmatpush.msra.mxu0 %v1556
    %1626 = vmatmul.f32.gmra.mxu0 %v1538
    %v1627 = vpop.f32.mrf.mxu0
    %v1628 = vadd.f32 %v1608, %v1627
    %1629 = vdwg.mxu0
    %1630 = vmatpush.msra.mxu0 %v1587
    %1631 = vmatpush.msra.mxu0 %v1586
    %1632 = vmatpush.msra.mxu0 %v1585
    %1633 = vmatpush.msra.mxu0 %v1584
    %1634 = vmatpush.msra.mxu0 %v1583
    %1635 = vmatpush.msra.mxu0 %v1582
    %1636 = vmatpush.msra.mxu0 %v1581
    %1637 = vmatpush.msra.mxu0 %v1580
    %1638 = vmatpush.msra.mxu0 %v1579
    %1639 = vmatpush.msra.mxu0 %v1578
    %1640 = vmatpush.msra.mxu0 %v1577
    %1641 = vmatpush.msra.mxu0 %v1576
    %1642 = vmatpush.msra.mxu0 %v1575
    %1643 = vmatpush.msra.mxu0 %v1574
    %1644 = vmatpush.msra.mxu0 %v1573
    %1645 = vmatpush.msra.mxu0 %v1572
    %1646 = vmatmul.f32.gmra.mxu0 %v1539
    %v1647 = vpop.f32.mrf.mxu0
    %v1648 = vadd.f32 %v1628, %v1647
    %1649 = vdwg.mxu0
    %v1650 = vmax.f32 %v1648, 0.0
    %v1651 = vand.u32 2147483647, %v1648
    %v1652 = vsub.f32 0.0, %v1651
    %v1653 = vmul.f32 %v1652, 1.442695
    %v1654 = vpow.pop %v1653
    %v1655 = vadd.f32 %v1654, 1.0
    %v1656 = vlog2.pop %v1655
    %v1657 = vmul.f32 %v1656, 0.6931472
    %v1658 = vmul.f32 -0.5, %v1654
    %v1659 = vadd.f32 %v1658, 1.0
    %v1660 = vmul.f32 %v1659, %v1654
    %v1661 = vand.u32 2147483647, %v1654
    %vm1662 = vcmp.lt.f32.partialorder %v1661, 0.0004427343
    %v1663 = vsel %vm1662, %v1660, %v1657
    %v1664 = vadd.f32 %v1650, %v1663
    %v1665 = vld [vmem:[#allocation5 + $0x1208] sm:$0xff]
    %v1666 = vld [vmem:[#allocation5 + $0x1210] sm:$0xff]
    %v1667 = vld [vmem:[#allocation5 + $0x1218] sm:$0xff]
    %v1668 = vld [vmem:[#allocation5 + $0x1220] sm:$0xff]
    %v1669 = vld [vmem:[#allocation5 + $0x1228] sm:$0xff]
    %v1670 = vld [vmem:[#allocation5 + $0x1230] sm:$0xff]
    %v1671 = vld [vmem:[#allocation5 + $0x1238] sm:$0xff]
    %v1672 = vld [vmem:[#allocation5 + $0x1240] sm:$0xff]
    %v1673 = vld [vmem:[#allocation5 + $0x1248] sm:$0xff]
    %v1674 = vld [vmem:[#allocation5 + $0x1250] sm:$0xff]
    %v1675 = vld [vmem:[#allocation5 + $0x1258] sm:$0xff]
    %v1676 = vld [vmem:[#allocation5 + $0x1260] sm:$0xff]
    %v1677 = vld [vmem:[#allocation5 + $0x1268] sm:$0xff]
    %v1678 = vld [vmem:[#allocation5 + $0x1270] sm:$0xff]
    %v1679 = vld [vmem:[#allocation5 + $0x1278] sm:$0xff]
    %v1680 = vld [vmem:[#allocation5 + $0x1280] sm:$0xff]
    %v1681 = vld [vmem:[#allocation5 + $0x1288] sm:$0x1]
    %v1682 = vperm.slane %v1681, 0
    %1683 = vmatpush.msra.mxu0 %v1680
    %1684 = vmatpush.msra.mxu0 %v1679
    %1685 = vmatpush.msra.mxu0 %v1678
    %1686 = vmatpush.msra.mxu0 %v1677
    %1687 = vmatpush.msra.mxu0 %v1676
    %1688 = vmatpush.msra.mxu0 %v1675
    %1689 = vmatpush.msra.mxu0 %v1674
    %1690 = vmatpush.msra.mxu0 %v1673
    %1691 = vmatpush.msra.mxu0 %v1672
    %1692 = vmatpush.msra.mxu0 %v1671
    %1693 = vmatpush.msra.mxu0 %v1670
    %1694 = vmatpush.msra.mxu0 %v1669
    %1695 = vmatpush.msra.mxu0 %v1668
    %1696 = vmatpush.msra.mxu0 %v1667
    %1697 = vmatpush.msra.mxu0 %v1666
    %1698 = vmatpush.msra.mxu0 %v1665
    %1699 = vmatmul.f32.gmra.mxu0 %v1446
    %v1700 = vpop.f32.mrf.mxu0
    %v1701 = vadd.f32 %v1682, %v1700
    %1702 = vdwg.mxu0
    %v1703 = vmax.f32 %v1701, 0.0
    %v1704 = vand.u32 2147483647, %v1701
    %v1705 = vsub.f32 0.0, %v1704
    %v1706 = vmul.f32 %v1705, 1.442695
    %v1707 = vpow.pop %v1706
    %v1708 = vadd.f32 %v1707, 1.0
    %v1709 = vlog2.pop %v1708
    %v1710 = vmul.f32 %v1709, 0.6931472
    %v1711 = vmul.f32 -0.5, %v1707
    %v1712 = vadd.f32 %v1711, 1.0
    %v1713 = vmul.f32 %v1712, %v1707
    %v1714 = vand.u32 2147483647, %v1707
    %vm1715 = vcmp.lt.f32.partialorder %v1714, 0.0004427343
    %v1716 = vsel %vm1715, %v1713, %v1710
    %v1717 = vadd.f32 %v1703, %v1716
    %v1718 = vld [vmem:[#allocation5 + $0x1290] sm:$0xff]
    %v1719 = vld [vmem:[#allocation5 + $0x1298] sm:$0xff]
    %v1720 = vld [vmem:[#allocation5 + $0x12a0] sm:$0xff]
    %v1721 = vld [vmem:[#allocation5 + $0x12a8] sm:$0xff]
    %v1722 = vld [vmem:[#allocation5 + $0x12b0] sm:$0xff]
    %v1723 = vld [vmem:[#allocation5 + $0x12b8] sm:$0xff]
    %v1724 = vld [vmem:[#allocation5 + $0x12c0] sm:$0xff]
    %v1725 = vld [vmem:[#allocation5 + $0x12c8] sm:$0xff]
    %v1726 = vld [vmem:[#allocation5 + $0x12d0] sm:$0xff]
    %v1727 = vld [vmem:[#allocation5 + $0x12d8] sm:$0xff]
    %v1728 = vld [vmem:[#allocation5 + $0x12e0] sm:$0xff]
    %v1729 = vld [vmem:[#allocation5 + $0x12e8] sm:$0xff]
    %v1730 = vld [vmem:[#allocation5 + $0x12f0] sm:$0xff]
    %v1731 = vld [vmem:[#allocation5 + $0x12f8] sm:$0xff]
    %v1732 = vld [vmem:[#allocation5 + $0x1300] sm:$0xff]
    %v1733 = vld [vmem:[#allocation5 + $0x1308] sm:$0xff]
    %v1734 = vld [vmem:[#allocation5 + $0x1310] sm:$0x1]
    %v1735 = vperm.slane %v1734, 0
    %1736 = vmatpush.msra.mxu0 %v1733
    %1737 = vmatpush.msra.mxu0 %v1732
    %1738 = vmatpush.msra.mxu0 %v1731
    %1739 = vmatpush.msra.mxu0 %v1730
    %1740 = vmatpush.msra.mxu0 %v1729
    %1741 = vmatpush.msra.mxu0 %v1728
    %1742 = vmatpush.msra.mxu0 %v1727
    %1743 = vmatpush.msra.mxu0 %v1726
    %1744 = vmatpush.msra.mxu0 %v1725
    %1745 = vmatpush.msra.mxu0 %v1724
    %1746 = vmatpush.msra.mxu0 %v1723
    %1747 = vmatpush.msra.mxu0 %v1722
    %1748 = vmatpush.msra.mxu0 %v1721
    %1749 = vmatpush.msra.mxu0 %v1720
    %1750 = vmatpush.msra.mxu0 %v1719
    %1751 = vmatpush.msra.mxu0 %v1718
    %1752 = vmatmul.f32.gmra.mxu0 %v1717
    %v1753 = vpop.f32.mrf.mxu0
    %v1754 = vadd.f32 %v1735, %v1753
    %1755 = vdwg.mxu0
    %v1756 = vmax.f32 %v1754, 0.0
    %v1757 = vand.u32 2147483647, %v1754
    %v1758 = vsub.f32 0.0, %v1757
    %v1759 = vmul.f32 %v1758, 1.442695
    %v1760 = vpow.pop %v1759
    %v1761 = vadd.f32 %v1760, 1.0
    %v1762 = vlog2.pop %v1761
    %v1763 = vmul.f32 %v1762, 0.6931472
    %v1764 = vmul.f32 -0.5, %v1760
    %v1765 = vadd.f32 %v1764, 1.0
    %v1766 = vmul.f32 %v1765, %v1760
    %v1767 = vand.u32 2147483647, %v1760
    %vm1768 = vcmp.lt.f32.partialorder %v1767, 0.0004427343
    %v1769 = vsel %vm1768, %v1766, %v1763
    %v1770 = vadd.f32 %v1756, %v1769
    %v1771 = vld [vmem:[#allocation5 + $0x1318] sm:$0xff]
    %v1772 = vld [vmem:[#allocation5 + $0x1320] sm:$0xff]
    %v1773 = vld [vmem:[#allocation5 + $0x1328] sm:$0xff]
    %v1774 = vld [vmem:[#allocation5 + $0x1330] sm:$0xff]
    %v1775 = vld [vmem:[#allocation5 + $0x1338] sm:$0xff]
    %v1776 = vld [vmem:[#allocation5 + $0x1340] sm:$0xff]
    %v1777 = vld [vmem:[#allocation5 + $0x1348] sm:$0xff]
    %v1778 = vld [vmem:[#allocation5 + $0x1350] sm:$0xff]
    %v1779 = vld [vmem:[#allocation5 + $0x1358] sm:$0xff]
    %v1780 = vld [vmem:[#allocation5 + $0x1360] sm:$0xff]
    %v1781 = vld [vmem:[#allocation5 + $0x1368] sm:$0xff]
    %v1782 = vld [vmem:[#allocation5 + $0x1370] sm:$0xff]
    %v1783 = vld [vmem:[#allocation5 + $0x1378] sm:$0xff]
    %v1784 = vld [vmem:[#allocation5 + $0x1380] sm:$0xff]
    %v1785 = vld [vmem:[#allocation5 + $0x1388] sm:$0xff]
    %v1786 = vld [vmem:[#allocation5 + $0x1390] sm:$0xff]
    %v1787 = vld [vmem:[#allocation5 + $0x1398] sm:$0x1]
    %v1788 = vperm.slane %v1787, 0
    %1789 = vmatpush.msra.mxu0 %v1786
    %1790 = vmatpush.msra.mxu0 %v1785
    %1791 = vmatpush.msra.mxu0 %v1784
    %1792 = vmatpush.msra.mxu0 %v1783
    %1793 = vmatpush.msra.mxu0 %v1782
    %1794 = vmatpush.msra.mxu0 %v1781
    %1795 = vmatpush.msra.mxu0 %v1780
    %1796 = vmatpush.msra.mxu0 %v1779
    %1797 = vmatpush.msra.mxu0 %v1778
    %1798 = vmatpush.msra.mxu0 %v1777
    %1799 = vmatpush.msra.mxu0 %v1776
    %1800 = vmatpush.msra.mxu0 %v1775
    %1801 = vmatpush.msra.mxu0 %v1774
    %1802 = vmatpush.msra.mxu0 %v1773
    %1803 = vmatpush.msra.mxu0 %v1772
    %1804 = vmatpush.msra.mxu0 %v1771
    %1805 = vmatmul.f32.gmra.mxu0 %v1717
    %v1806 = vpop.f32.mrf.mxu0
    %v1807 = vadd.f32 %v1788, %v1806
    %1808 = vdwg.mxu0
    %v1809 = vmul.f32 %v1664, %v1770
    %v1810 = vmul.f32 %v994, %v1807
    %v1811 = vld [vmem:[#allocation5 + $0x13a0] sm:$0xff]
    %v1812 = vld [vmem:[#allocation5 + $0x13a8] sm:$0xff]
    %v1813 = vld [vmem:[#allocation5 + $0x13b0] sm:$0xff]
    %v1814 = vld [vmem:[#allocation5 + $0x13b8] sm:$0xff]
    %v1815 = vld [vmem:[#allocation5 + $0x13c0] sm:$0xff]
    %v1816 = vld [vmem:[#allocation5 + $0x13c8] sm:$0xff]
    %v1817 = vld [vmem:[#allocation5 + $0x13d0] sm:$0xff]
    %v1818 = vld [vmem:[#allocation5 + $0x13d8] sm:$0xff]
    %v1819 = vld [vmem:[#allocation5 + $0x13e0] sm:$0xff]
    %v1820 = vld [vmem:[#allocation5 + $0x13e8] sm:$0xff]
    %v1821 = vld [vmem:[#allocation5 + $0x13f0] sm:$0xff]
    %v1822 = vld [vmem:[#allocation5 + $0x13f8] sm:$0xff]
    %v1823 = vld [vmem:[#allocation5 + $0x1400] sm:$0xff]
    %v1824 = vld [vmem:[#allocation5 + $0x1408] sm:$0xff]
    %v1825 = vld [vmem:[#allocation5 + $0x1410] sm:$0xff]
    %v1826 = vld [vmem:[#allocation5 + $0x1418] sm:$0xff]
    %v1827 = vld [vmem:[#allocation5 + $0x1420] sm:$0xff]
    %v1828 = vld [vmem:[#allocation5 + $0x1428] sm:$0xff]
    %v1829 = vld [vmem:[#allocation5 + $0x1430] sm:$0xff]
    %v1830 = vld [vmem:[#allocation5 + $0x1438] sm:$0xff]
    %v1831 = vld [vmem:[#allocation5 + $0x1440] sm:$0xff]
    %v1832 = vld [vmem:[#allocation5 + $0x1448] sm:$0xff]
    %v1833 = vld [vmem:[#allocation5 + $0x1450] sm:$0xff]
    %v1834 = vld [vmem:[#allocation5 + $0x1458] sm:$0xff]
    %v1835 = vld [vmem:[#allocation5 + $0x1460] sm:$0xff]
    %v1836 = vld [vmem:[#allocation5 + $0x1468] sm:$0xff]
    %v1837 = vld [vmem:[#allocation5 + $0x1470] sm:$0xff]
    %v1838 = vld [vmem:[#allocation5 + $0x1478] sm:$0xff]
    %v1839 = vld [vmem:[#allocation5 + $0x1480] sm:$0xff]
    %v1840 = vld [vmem:[#allocation5 + $0x1488] sm:$0xff]
    %v1841 = vld [vmem:[#allocation5 + $0x1490] sm:$0xff]
    %v1842 = vld [vmem:[#allocation5 + $0x1498] sm:$0xff]
    %v1843 = vld [vmem:[#allocation5 + $0x14a0] sm:$0xff]
    %v1844 = vld [vmem:[#allocation5 + $0x14a8] sm:$0xff]
    %v1845 = vld [vmem:[#allocation5 + $0x14b0] sm:$0xff]
    %v1846 = vld [vmem:[#allocation5 + $0x14b8] sm:$0xff]
    %v1847 = vld [vmem:[#allocation5 + $0x14c0] sm:$0xff]
    %v1848 = vld [vmem:[#allocation5 + $0x14c8] sm:$0xff]
    %v1849 = vld [vmem:[#allocation5 + $0x14d0] sm:$0xff]
    %v1850 = vld [vmem:[#allocation5 + $0x14d8] sm:$0xff]
    %v1851 = vld [vmem:[#allocation5 + $0x14e0] sm:$0xff]
    %v1852 = vld [vmem:[#allocation5 + $0x14e8] sm:$0xff]
    %v1853 = vld [vmem:[#allocation5 + $0x14f0] sm:$0xff]
    %v1854 = vld [vmem:[#allocation5 + $0x14f8] sm:$0xff]
    %v1855 = vld [vmem:[#allocation5 + $0x1500] sm:$0xff]
    %v1856 = vld [vmem:[#allocation5 + $0x1508] sm:$0xff]
    %v1857 = vld [vmem:[#allocation5 + $0x1510] sm:$0xff]
    %v1858 = vld [vmem:[#allocation5 + $0x1518] sm:$0xff]
    %v1859 = vld [vmem:[#allocation5 + $0x1520] sm:$0x1]
    %v1860 = vperm.slane %v1859, 0
    %1861 = vmatpush.msra.mxu0 %v1826
    %1862 = vmatpush.msra.mxu0 %v1825
    %1863 = vmatpush.msra.mxu0 %v1824
    %1864 = vmatpush.msra.mxu0 %v1823
    %1865 = vmatpush.msra.mxu0 %v1822
    %1866 = vmatpush.msra.mxu0 %v1821
    %1867 = vmatpush.msra.mxu0 %v1820
    %1868 = vmatpush.msra.mxu0 %v1819
    %1869 = vmatpush.msra.mxu0 %v1818
    %1870 = vmatpush.msra.mxu0 %v1817
    %1871 = vmatpush.msra.mxu0 %v1816
    %1872 = vmatpush.msra.mxu0 %v1815
    %1873 = vmatpush.msra.mxu0 %v1814
    %1874 = vmatpush.msra.mxu0 %v1813
    %1875 = vmatpush.msra.mxu0 %v1812
    %1876 = vmatpush.msra.mxu0 %v1811
    %1877 = vmatmul.f32.gmra.mxu0 %v1717
    %v1878 = vpop.f32.mrf.mxu0
    %v1879 = vadd.f32 %v1860, %v1878
    %1880 = vdwg.mxu0
    %1881 = vmatpush.msra.mxu0 %v1842
    %1882 = vmatpush.msra.mxu0 %v1841
    %1883 = vmatpush.msra.mxu0 %v1840
    %1884 = vmatpush.msra.mxu0 %v1839
    %1885 = vmatpush.msra.mxu0 %v1838
    %1886 = vmatpush.msra.mxu0 %v1837
    %1887 = vmatpush.msra.mxu0 %v1836
    %1888 = vmatpush.msra.mxu0 %v1835
    %1889 = vmatpush.msra.mxu0 %v1834
    %1890 = vmatpush.msra.mxu0 %v1833
    %1891 = vmatpush.msra.mxu0 %v1832
    %1892 = vmatpush.msra.mxu0 %v1831
    %1893 = vmatpush.msra.mxu0 %v1830
    %1894 = vmatpush.msra.mxu0 %v1829
    %1895 = vmatpush.msra.mxu0 %v1828
    %1896 = vmatpush.msra.mxu0 %v1827
    %1897 = vmatmul.f32.gmra.mxu0 %v1809
    %v1898 = vpop.f32.mrf.mxu0
    %v1899 = vadd.f32 %v1879, %v1898
    %1900 = vdwg.mxu0
    %1901 = vmatpush.msra.mxu0 %v1858
    %1902 = vmatpush.msra.mxu0 %v1857
    %1903 = vmatpush.msra.mxu0 %v1856
    %1904 = vmatpush.msra.mxu0 %v1855
    %1905 = vmatpush.msra.mxu0 %v1854
    %1906 = vmatpush.msra.mxu0 %v1853
    %1907 = vmatpush.msra.mxu0 %v1852
    %1908 = vmatpush.msra.mxu0 %v1851
    %1909 = vmatpush.msra.mxu0 %v1850
    %1910 = vmatpush.msra.mxu0 %v1849
    %1911 = vmatpush.msra.mxu0 %v1848
    %1912 = vmatpush.msra.mxu0 %v1847
    %1913 = vmatpush.msra.mxu0 %v1846
    %1914 = vmatpush.msra.mxu0 %v1845
    %1915 = vmatpush.msra.mxu0 %v1844
    %1916 = vmatpush.msra.mxu0 %v1843
    %1917 = vmatmul.f32.gmra.mxu0 %v1810
    %v1918 = vpop.f32.mrf.mxu0
    %v1919 = vadd.f32 %v1899, %v1918
    %1920 = vdwg.mxu0
    %v1921 = vmax.f32 %v1919, 0.0
    %v1922 = vand.u32 2147483647, %v1919
    %v1923 = vsub.f32 0.0, %v1922
    %v1924 = vmul.f32 %v1923, 1.442695
    %v1925 = vpow.pop %v1924
    %v1926 = vadd.f32 %v1925, 1.0
    %v1927 = vlog2.pop %v1926
    %v1928 = vmul.f32 %v1927, 0.6931472
    %v1929 = vmul.f32 -0.5, %v1925
    %v1930 = vadd.f32 %v1929, 1.0
    %v1931 = vmul.f32 %v1930, %v1925
    %v1932 = vand.u32 2147483647, %v1925
    %vm1933 = vcmp.lt.f32.partialorder %v1932, 0.0004427343
    %v1934 = vsel %vm1933, %v1931, %v1928
    %v1935 = vadd.f32 %v1921, %v1934
    %v1936 = vld [vmem:[#allocation5 + $0x1528] sm:$0xff]
    %v1937 = vld [vmem:[#allocation5 + $0x1530] sm:$0xff]
    %v1938 = vld [vmem:[#allocation5 + $0x1538] sm:$0xff]
    %v1939 = vld [vmem:[#allocation5 + $0x1540] sm:$0xff]
    %v1940 = vld [vmem:[#allocation5 + $0x1548] sm:$0xff]
    %v1941 = vld [vmem:[#allocation5 + $0x1550] sm:$0xff]
    %v1942 = vld [vmem:[#allocation5 + $0x1558] sm:$0xff]
    %v1943 = vld [vmem:[#allocation5 + $0x1560] sm:$0xff]
    %v1944 = vld [vmem:[#allocation5 + $0x1568] sm:$0xff]
    %v1945 = vld [vmem:[#allocation5 + $0x1570] sm:$0xff]
    %v1946 = vld [vmem:[#allocation5 + $0x1578] sm:$0xff]
    %v1947 = vld [vmem:[#allocation5 + $0x1580] sm:$0xff]
    %v1948 = vld [vmem:[#allocation5 + $0x1588] sm:$0xff]
    %v1949 = vld [vmem:[#allocation5 + $0x1590] sm:$0xff]
    %v1950 = vld [vmem:[#allocation5 + $0x1598] sm:$0xff]
    %v1951 = vld [vmem:[#allocation5 + $0x15a0] sm:$0xff]
    %v1952 = vld [vmem:[#allocation5 + $0x15a8] sm:$0x1]
    %v1953 = vperm.slane %v1952, 0
    %1954 = vmatpush.msra.mxu0 %v1951
    %1955 = vmatpush.msra.mxu0 %v1950
    %1956 = vmatpush.msra.mxu0 %v1949
    %1957 = vmatpush.msra.mxu0 %v1948
    %1958 = vmatpush.msra.mxu0 %v1947
    %1959 = vmatpush.msra.mxu0 %v1946
    %1960 = vmatpush.msra.mxu0 %v1945
    %1961 = vmatpush.msra.mxu0 %v1944
    %1962 = vmatpush.msra.mxu0 %v1943
    %1963 = vmatpush.msra.mxu0 %v1942
    %1964 = vmatpush.msra.mxu0 %v1941
    %1965 = vmatpush.msra.mxu0 %v1940
    %1966 = vmatpush.msra.mxu0 %v1939
    %1967 = vmatpush.msra.mxu0 %v1938
    %1968 = vmatpush.msra.mxu0 %v1937
    %1969 = vmatpush.msra.mxu0 %v1936
    %1970 = vmatmul.f32.gmra.mxu0 %v1717
    %v1971 = vpop.f32.mrf.mxu0
    %v1972 = vadd.f32 %v1953, %v1971
    %1973 = vdwg.mxu0
    %v1974 = vmax.f32 %v1972, 0.0
    %v1975 = vand.u32 2147483647, %v1972
    %v1976 = vsub.f32 0.0, %v1975
    %v1977 = vmul.f32 %v1976, 1.442695
    %v1978 = vpow.pop %v1977
    %v1979 = vadd.f32 %v1978, 1.0
    %v1980 = vlog2.pop %v1979
    %v1981 = vmul.f32 %v1980, 0.6931472
    %v1982 = vmul.f32 -0.5, %v1978
    %v1983 = vadd.f32 %v1982, 1.0
    %v1984 = vmul.f32 %v1983, %v1978
    %v1985 = vand.u32 2147483647, %v1978
    %vm1986 = vcmp.lt.f32.partialorder %v1985, 0.0004427343
    %v1987 = vsel %vm1986, %v1984, %v1981
    %v1988 = vadd.f32 %v1974, %v1987
    %v1989 = vld [vmem:[#allocation5 + $0x15b0] sm:$0xff]
    %v1990 = vld [vmem:[#allocation5 + $0x15b8] sm:$0xff]
    %v1991 = vld [vmem:[#allocation5 + $0x15c0] sm:$0xff]
    %v1992 = vld [vmem:[#allocation5 + $0x15c8] sm:$0xff]
    %v1993 = vld [vmem:[#allocation5 + $0x15d0] sm:$0xff]
    %v1994 = vld [vmem:[#allocation5 + $0x15d8] sm:$0xff]
    %v1995 = vld [vmem:[#allocation5 + $0x15e0] sm:$0xff]
    %v1996 = vld [vmem:[#allocation5 + $0x15e8] sm:$0xff]
    %v1997 = vld [vmem:[#allocation5 + $0x15f0] sm:$0xff]
    %v1998 = vld [vmem:[#allocation5 + $0x15f8] sm:$0xff]
    %v1999 = vld [vmem:[#allocation5 + $0x1600] sm:$0xff]
    %v2000 = vld [vmem:[#allocation5 + $0x1608] sm:$0xff]
    %v2001 = vld [vmem:[#allocation5 + $0x1610] sm:$0xff]
    %v2002 = vld [vmem:[#allocation5 + $0x1618] sm:$0xff]
    %v2003 = vld [vmem:[#allocation5 + $0x1620] sm:$0xff]
    %v2004 = vld [vmem:[#allocation5 + $0x1628] sm:$0xff]
    %v2005 = vld [vmem:[#allocation5 + $0x1630] sm:$0x1]
    %v2006 = vperm.slane %v2005, 0
    %2007 = vmatpush.msra.mxu0 %v2004
    %2008 = vmatpush.msra.mxu0 %v2003
    %2009 = vmatpush.msra.mxu0 %v2002
    %2010 = vmatpush.msra.mxu0 %v2001
    %2011 = vmatpush.msra.mxu0 %v2000
    %2012 = vmatpush.msra.mxu0 %v1999
    %2013 = vmatpush.msra.mxu0 %v1998
    %2014 = vmatpush.msra.mxu0 %v1997
    %2015 = vmatpush.msra.mxu0 %v1996
    %2016 = vmatpush.msra.mxu0 %v1995
    %2017 = vmatpush.msra.mxu0 %v1994
    %2018 = vmatpush.msra.mxu0 %v1993
    %2019 = vmatpush.msra.mxu0 %v1992
    %2020 = vmatpush.msra.mxu0 %v1991
    %2021 = vmatpush.msra.mxu0 %v1990
    %2022 = vmatpush.msra.mxu0 %v1989
    %2023 = vmatmul.f32.gmra.mxu0 %v1988
    %v2024 = vpop.f32.mrf.mxu0
    %v2025 = vadd.f32 %v2006, %v2024
    %2026 = vdwg.mxu0
    %v2027 = vmax.f32 %v2025, 0.0
    %v2028 = vand.u32 2147483647, %v2025
    %v2029 = vsub.f32 0.0, %v2028
    %v2030 = vmul.f32 %v2029, 1.442695
    %v2031 = vpow.pop %v2030
    %v2032 = vadd.f32 %v2031, 1.0
    %v2033 = vlog2.pop %v2032
    %v2034 = vmul.f32 %v2033, 0.6931472
    %v2035 = vmul.f32 -0.5, %v2031
    %v2036 = vadd.f32 %v2035, 1.0
    %v2037 = vmul.f32 %v2036, %v2031
    %v2038 = vand.u32 2147483647, %v2031
    %vm2039 = vcmp.lt.f32.partialorder %v2038, 0.0004427343
    %v2040 = vsel %vm2039, %v2037, %v2034
    %v2041 = vadd.f32 %v2027, %v2040
    %v2042 = vld [vmem:[#allocation5 + $0x1638] sm:$0xff]
    %v2043 = vld [vmem:[#allocation5 + $0x1640] sm:$0xff]
    %v2044 = vld [vmem:[#allocation5 + $0x1648] sm:$0xff]
    %v2045 = vld [vmem:[#allocation5 + $0x1650] sm:$0xff]
    %v2046 = vld [vmem:[#allocation5 + $0x1658] sm:$0xff]
    %v2047 = vld [vmem:[#allocation5 + $0x1660] sm:$0xff]
    %v2048 = vld [vmem:[#allocation5 + $0x1668] sm:$0xff]
    %v2049 = vld [vmem:[#allocation5 + $0x1670] sm:$0xff]
    %v2050 = vld [vmem:[#allocation5 + $0x1678] sm:$0xff]
    %v2051 = vld [vmem:[#allocation5 + $0x1680] sm:$0xff]
    %v2052 = vld [vmem:[#allocation5 + $0x1688] sm:$0xff]
    %v2053 = vld [vmem:[#allocation5 + $0x1690] sm:$0xff]
    %v2054 = vld [vmem:[#allocation5 + $0x1698] sm:$0xff]
    %v2055 = vld [vmem:[#allocation5 + $0x16a0] sm:$0xff]
    %v2056 = vld [vmem:[#allocation5 + $0x16a8] sm:$0xff]
    %v2057 = vld [vmem:[#allocation5 + $0x16b0] sm:$0xff]
    %v2058 = vld [vmem:[#allocation5 + $0x16b8] sm:$0x1]
    %v2059 = vperm.slane %v2058, 0
    %2060 = vmatpush.msra.mxu0 %v2057
    %2061 = vmatpush.msra.mxu0 %v2056
    %2062 = vmatpush.msra.mxu0 %v2055
    %2063 = vmatpush.msra.mxu0 %v2054
    %2064 = vmatpush.msra.mxu0 %v2053
    %2065 = vmatpush.msra.mxu0 %v2052
    %2066 = vmatpush.msra.mxu0 %v2051
    %2067 = vmatpush.msra.mxu0 %v2050
    %2068 = vmatpush.msra.mxu0 %v2049
    %2069 = vmatpush.msra.mxu0 %v2048
    %2070 = vmatpush.msra.mxu0 %v2047
    %2071 = vmatpush.msra.mxu0 %v2046
    %2072 = vmatpush.msra.mxu0 %v2045
    %2073 = vmatpush.msra.mxu0 %v2044
    %2074 = vmatpush.msra.mxu0 %v2043
    %2075 = vmatpush.msra.mxu0 %v2042
    %2076 = vmatmul.f32.gmra.mxu0 %v1988
    %v2077 = vpop.f32.mrf.mxu0
    %v2078 = vadd.f32 %v2059, %v2077
    %2079 = vdwg.mxu0
    %v2080 = vmul.f32 %v1935, %v2041
    %v2081 = vmul.f32 %v994, %v2078
    %v2082 = vld [vmem:[#allocation5 + $0x16c0] sm:$0xff]
    %v2083 = vld [vmem:[#allocation5 + $0x16c8] sm:$0xff]
    %v2084 = vld [vmem:[#allocation5 + $0x16d0] sm:$0xff]
    %v2085 = vld [vmem:[#allocation5 + $0x16d8] sm:$0xff]
    %v2086 = vld [vmem:[#allocation5 + $0x16e0] sm:$0xff]
    %v2087 = vld [vmem:[#allocation5 + $0x16e8] sm:$0xff]
    %v2088 = vld [vmem:[#allocation5 + $0x16f0] sm:$0xff]
    %v2089 = vld [vmem:[#allocation5 + $0x16f8] sm:$0xff]
    %v2090 = vld [vmem:[#allocation5 + $0x1700] sm:$0xff]
    %v2091 = vld [vmem:[#allocation5 + $0x1708] sm:$0xff]
    %v2092 = vld [vmem:[#allocation5 + $0x1710] sm:$0xff]
    %v2093 = vld [vmem:[#allocation5 + $0x1718] sm:$0xff]
    %v2094 = vld [vmem:[#allocation5 + $0x1720] sm:$0xff]
    %v2095 = vld [vmem:[#allocation5 + $0x1728] sm:$0xff]
    %v2096 = vld [vmem:[#allocation5 + $0x1730] sm:$0xff]
    %v2097 = vld [vmem:[#allocation5 + $0x1738] sm:$0xff]
    %v2098 = vld [vmem:[#allocation5 + $0x1740] sm:$0xff]
    %v2099 = vld [vmem:[#allocation5 + $0x1748] sm:$0xff]
    %v2100 = vld [vmem:[#allocation5 + $0x1750] sm:$0xff]
    %v2101 = vld [vmem:[#allocation5 + $0x1758] sm:$0xff]
    %v2102 = vld [vmem:[#allocation5 + $0x1760] sm:$0xff]
    %v2103 = vld [vmem:[#allocation5 + $0x1768] sm:$0xff]
    %v2104 = vld [vmem:[#allocation5 + $0x1770] sm:$0xff]
    %v2105 = vld [vmem:[#allocation5 + $0x1778] sm:$0xff]
    %v2106 = vld [vmem:[#allocation5 + $0x1780] sm:$0xff]
    %v2107 = vld [vmem:[#allocation5 + $0x1788] sm:$0xff]
    %v2108 = vld [vmem:[#allocation5 + $0x1790] sm:$0xff]
    %v2109 = vld [vmem:[#allocation5 + $0x1798] sm:$0xff]
    %v2110 = vld [vmem:[#allocation5 + $0x17a0] sm:$0xff]
    %v2111 = vld [vmem:[#allocation5 + $0x17a8] sm:$0xff]
    %v2112 = vld [vmem:[#allocation5 + $0x17b0] sm:$0xff]
    %v2113 = vld [vmem:[#allocation5 + $0x17b8] sm:$0xff]
    %v2114 = vld [vmem:[#allocation5 + $0x17c0] sm:$0xff]
    %v2115 = vld [vmem:[#allocation5 + $0x17c8] sm:$0xff]
    %v2116 = vld [vmem:[#allocation5 + $0x17d0] sm:$0xff]
    %v2117 = vld [vmem:[#allocation5 + $0x17d8] sm:$0xff]
    %v2118 = vld [vmem:[#allocation5 + $0x17e0] sm:$0xff]
    %v2119 = vld [vmem:[#allocation5 + $0x17e8] sm:$0xff]
    %v2120 = vld [vmem:[#allocation5 + $0x17f0] sm:$0xff]
    %v2121 = vld [vmem:[#allocation5 + $0x17f8] sm:$0xff]
    %v2122 = vld [vmem:[#allocation5 + $0x1800] sm:$0xff]
    %v2123 = vld [vmem:[#allocation5 + $0x1808] sm:$0xff]
    %v2124 = vld [vmem:[#allocation5 + $0x1810] sm:$0xff]
    %v2125 = vld [vmem:[#allocation5 + $0x1818] sm:$0xff]
    %v2126 = vld [vmem:[#allocation5 + $0x1820] sm:$0xff]
    %v2127 = vld [vmem:[#allocation5 + $0x1828] sm:$0xff]
    %v2128 = vld [vmem:[#allocation5 + $0x1830] sm:$0xff]
    %v2129 = vld [vmem:[#allocation5 + $0x1838] sm:$0xff]
    %v2130 = vld [vmem:[#allocation5 + $0x1840] sm:$0x1]
    %v2131 = vperm.slane %v2130, 0
    %2132 = vmatpush.msra.mxu0 %v2097
    %2133 = vmatpush.msra.mxu0 %v2096
    %2134 = vmatpush.msra.mxu0 %v2095
    %2135 = vmatpush.msra.mxu0 %v2094
    %2136 = vmatpush.msra.mxu0 %v2093
    %2137 = vmatpush.msra.mxu0 %v2092
    %2138 = vmatpush.msra.mxu0 %v2091
    %2139 = vmatpush.msra.mxu0 %v2090
    %2140 = vmatpush.msra.mxu0 %v2089
    %2141 = vmatpush.msra.mxu0 %v2088
    %2142 = vmatpush.msra.mxu0 %v2087
    %2143 = vmatpush.msra.mxu0 %v2086
    %2144 = vmatpush.msra.mxu0 %v2085
    %2145 = vmatpush.msra.mxu0 %v2084
    %2146 = vmatpush.msra.mxu0 %v2083
    %2147 = vmatpush.msra.mxu0 %v2082
    %2148 = vmatmul.f32.gmra.mxu0 %v1988
    %v2149 = vpop.f32.mrf.mxu0
    %v2150 = vadd.f32 %v2131, %v2149
    %2151 = vdwg.mxu0
    %2152 = vmatpush.msra.mxu0 %v2113
    %2153 = vmatpush.msra.mxu0 %v2112
    %2154 = vmatpush.msra.mxu0 %v2111
    %2155 = vmatpush.msra.mxu0 %v2110
    %2156 = vmatpush.msra.mxu0 %v2109
    %2157 = vmatpush.msra.mxu0 %v2108
    %2158 = vmatpush.msra.mxu0 %v2107
    %2159 = vmatpush.msra.mxu0 %v2106
    %2160 = vmatpush.msra.mxu0 %v2105
    %2161 = vmatpush.msra.mxu0 %v2104
    %2162 = vmatpush.msra.mxu0 %v2103
    %2163 = vmatpush.msra.mxu0 %v2102
    %2164 = vmatpush.msra.mxu0 %v2101
    %2165 = vmatpush.msra.mxu0 %v2100
    %2166 = vmatpush.msra.mxu0 %v2099
    %2167 = vmatpush.msra.mxu0 %v2098
    %2168 = vmatmul.f32.gmra.mxu0 %v2080
    %v2169 = vpop.f32.mrf.mxu0
    %v2170 = vadd.f32 %v2150, %v2169
    %2171 = vdwg.mxu0
    %2172 = vmatpush.msra.mxu0 %v2129
    %2173 = vmatpush.msra.mxu0 %v2128
    %2174 = vmatpush.msra.mxu0 %v2127
    %2175 = vmatpush.msra.mxu0 %v2126
    %2176 = vmatpush.msra.mxu0 %v2125
    %2177 = vmatpush.msra.mxu0 %v2124
    %2178 = vmatpush.msra.mxu0 %v2123
    %2179 = vmatpush.msra.mxu0 %v2122
    %2180 = vmatpush.msra.mxu0 %v2121
    %2181 = vmatpush.msra.mxu0 %v2120
    %2182 = vmatpush.msra.mxu0 %v2119
    %2183 = vmatpush.msra.mxu0 %v2118
    %2184 = vmatpush.msra.mxu0 %v2117
    %2185 = vmatpush.msra.mxu0 %v2116
    %2186 = vmatpush.msra.mxu0 %v2115
    %2187 = vmatpush.msra.mxu0 %v2114
    %2188 = vmatmul.f32.gmra.mxu0 %v2081
    %v2189 = vpop.f32.mrf.mxu0
    %v2190 = vadd.f32 %v2170, %v2189
    %2191 = vdwg.mxu0
    %v2192 = vmax.f32 %v2190, 0.0
    %v2193 = vand.u32 2147483647, %v2190
    %v2194 = vsub.f32 0.0, %v2193
    %v2195 = vmul.f32 %v2194, 1.442695
    %v2196 = vpow.pop %v2195
    %v2197 = vadd.f32 %v2196, 1.0
    %v2198 = vlog2.pop %v2197
    %v2199 = vmul.f32 %v2198, 0.6931472
    %v2200 = vmul.f32 -0.5, %v2196
    %v2201 = vadd.f32 %v2200, 1.0
    %v2202 = vmul.f32 %v2201, %v2196
    %v2203 = vand.u32 2147483647, %v2196
    %vm2204 = vcmp.lt.f32.partialorder %v2203, 0.0004427343
    %v2205 = vsel %vm2204, %v2202, %v2199
    %v2206 = vadd.f32 %v2192, %v2205
    %v2207 = vld [vmem:[#allocation5 + $0x1848] sm:$0xff]
    %v2208 = vld [vmem:[#allocation5 + $0x1850] sm:$0xff]
    %v2209 = vld [vmem:[#allocation5 + $0x1858] sm:$0xff]
    %v2210 = vld [vmem:[#allocation5 + $0x1860] sm:$0xff]
    %v2211 = vld [vmem:[#allocation5 + $0x1868] sm:$0xff]
    %v2212 = vld [vmem:[#allocation5 + $0x1870] sm:$0xff]
    %v2213 = vld [vmem:[#allocation5 + $0x1878] sm:$0xff]
    %v2214 = vld [vmem:[#allocation5 + $0x1880] sm:$0xff]
    %v2215 = vld [vmem:[#allocation5 + $0x1888] sm:$0xff]
    %v2216 = vld [vmem:[#allocation5 + $0x1890] sm:$0xff]
    %v2217 = vld [vmem:[#allocation5 + $0x1898] sm:$0xff]
    %v2218 = vld [vmem:[#allocation5 + $0x18a0] sm:$0xff]
    %v2219 = vld [vmem:[#allocation5 + $0x18a8] sm:$0xff]
    %v2220 = vld [vmem:[#allocation5 + $0x18b0] sm:$0xff]
    %v2221 = vld [vmem:[#allocation5 + $0x18b8] sm:$0xff]
    %v2222 = vld [vmem:[#allocation5 + $0x18c0] sm:$0xff]
    %v2223 = vld [vmem:[#allocation5 + $0x18c8] sm:$0x1]
    %v2224 = vperm.slane %v2223, 0
    %2225 = vmatpush.msra.mxu0 %v2222
    %2226 = vmatpush.msra.mxu0 %v2221
    %2227 = vmatpush.msra.mxu0 %v2220
    %2228 = vmatpush.msra.mxu0 %v2219
    %2229 = vmatpush.msra.mxu0 %v2218
    %2230 = vmatpush.msra.mxu0 %v2217
    %2231 = vmatpush.msra.mxu0 %v2216
    %2232 = vmatpush.msra.mxu0 %v2215
    %2233 = vmatpush.msra.mxu0 %v2214
    %2234 = vmatpush.msra.mxu0 %v2213
    %2235 = vmatpush.msra.mxu0 %v2212
    %2236 = vmatpush.msra.mxu0 %v2211
    %2237 = vmatpush.msra.mxu0 %v2210
    %2238 = vmatpush.msra.mxu0 %v2209
    %2239 = vmatpush.msra.mxu0 %v2208
    %2240 = vmatpush.msra.mxu0 %v2207
    %2241 = vmatmul.f32.gmra.mxu0 %v1988
    %v2242 = vpop.f32.mrf.mxu0
    %v2243 = vadd.f32 %v2224, %v2242
    %2244 = vdwg.mxu0
    %v2245 = vmax.f32 %v2243, 0.0
    %v2246 = vand.u32 2147483647, %v2243
    %v2247 = vsub.f32 0.0, %v2246
    %v2248 = vmul.f32 %v2247, 1.442695
    %v2249 = vpow.pop %v2248
    %v2250 = vadd.f32 %v2249, 1.0
    %v2251 = vlog2.pop %v2250
    %v2252 = vmul.f32 %v2251, 0.6931472
    %v2253 = vmul.f32 -0.5, %v2249
    %v2254 = vadd.f32 %v2253, 1.0
    %v2255 = vmul.f32 %v2254, %v2249
    %v2256 = vand.u32 2147483647, %v2249
    %vm2257 = vcmp.lt.f32.partialorder %v2256, 0.0004427343
    %v2258 = vsel %vm2257, %v2255, %v2252
    %v2259 = vadd.f32 %v2245, %v2258
    %v2260 = vld [vmem:[#allocation5 + $0x18d0] sm:$0xff]
    %v2261 = vld [vmem:[#allocation5 + $0x18d8] sm:$0xff]
    %v2262 = vld [vmem:[#allocation5 + $0x18e0] sm:$0xff]
    %v2263 = vld [vmem:[#allocation5 + $0x18e8] sm:$0xff]
    %v2264 = vld [vmem:[#allocation5 + $0x18f0] sm:$0xff]
    %v2265 = vld [vmem:[#allocation5 + $0x18f8] sm:$0xff]
    %v2266 = vld [vmem:[#allocation5 + $0x1900] sm:$0xff]
    %v2267 = vld [vmem:[#allocation5 + $0x1908] sm:$0xff]
    %v2268 = vld [vmem:[#allocation5 + $0x1910] sm:$0xff]
    %v2269 = vld [vmem:[#allocation5 + $0x1918] sm:$0xff]
    %v2270 = vld [vmem:[#allocation5 + $0x1920] sm:$0xff]
    %v2271 = vld [vmem:[#allocation5 + $0x1928] sm:$0xff]
    %v2272 = vld [vmem:[#allocation5 + $0x1930] sm:$0xff]
    %v2273 = vld [vmem:[#allocation5 + $0x1938] sm:$0xff]
    %v2274 = vld [vmem:[#allocation5 + $0x1940] sm:$0xff]
    %v2275 = vld [vmem:[#allocation5 + $0x1948] sm:$0xff]
    %v2276 = vld [vmem:[#allocation5 + $0x1950] sm:$0x1]
    %v2277 = vperm.slane %v2276, 0
    %2278 = vmatpush.msra.mxu0 %v2275
    %2279 = vmatpush.msra.mxu0 %v2274
    %2280 = vmatpush.msra.mxu0 %v2273
    %2281 = vmatpush.msra.mxu0 %v2272
    %2282 = vmatpush.msra.mxu0 %v2271
    %2283 = vmatpush.msra.mxu0 %v2270
    %2284 = vmatpush.msra.mxu0 %v2269
    %2285 = vmatpush.msra.mxu0 %v2268
    %2286 = vmatpush.msra.mxu0 %v2267
    %2287 = vmatpush.msra.mxu0 %v2266
    %2288 = vmatpush.msra.mxu0 %v2265
    %2289 = vmatpush.msra.mxu0 %v2264
    %2290 = vmatpush.msra.mxu0 %v2263
    %2291 = vmatpush.msra.mxu0 %v2262
    %2292 = vmatpush.msra.mxu0 %v2261
    %2293 = vmatpush.msra.mxu0 %v2260
    %2294 = vmatmul.f32.gmra.mxu0 %v2259
    %v2295 = vpop.f32.mrf.mxu0
    %v2296 = vadd.f32 %v2277, %v2295
    %2297 = vdwg.mxu0
    %v2298 = vmax.f32 %v2296, 0.0
    %v2299 = vand.u32 2147483647, %v2296
    %v2300 = vsub.f32 0.0, %v2299
    %v2301 = vmul.f32 %v2300, 1.442695
    %v2302 = vpow.pop %v2301
    %v2303 = vadd.f32 %v2302, 1.0
    %v2304 = vlog2.pop %v2303
    %v2305 = vmul.f32 %v2304, 0.6931472
    %v2306 = vmul.f32 -0.5, %v2302
    %v2307 = vadd.f32 %v2306, 1.0
    %v2308 = vmul.f32 %v2307, %v2302
    %v2309 = vand.u32 2147483647, %v2302
    %vm2310 = vcmp.lt.f32.partialorder %v2309, 0.0004427343
    %v2311 = vsel %vm2310, %v2308, %v2305
    %v2312 = vadd.f32 %v2298, %v2311
    %v2313 = vld [vmem:[#allocation5 + $0x1958] sm:$0xff]
    %v2314 = vld [vmem:[#allocation5 + $0x1960] sm:$0xff]
    %v2315 = vld [vmem:[#allocation5 + $0x1968] sm:$0xff]
    %v2316 = vld [vmem:[#allocation5 + $0x1970] sm:$0xff]
    %v2317 = vld [vmem:[#allocation5 + $0x1978] sm:$0xff]
    %v2318 = vld [vmem:[#allocation5 + $0x1980] sm:$0xff]
    %v2319 = vld [vmem:[#allocation5 + $0x1988] sm:$0xff]
    %v2320 = vld [vmem:[#allocation5 + $0x1990] sm:$0xff]
    %v2321 = vld [vmem:[#allocation5 + $0x1998] sm:$0xff]
    %v2322 = vld [vmem:[#allocation5 + $0x19a0] sm:$0xff]
    %v2323 = vld [vmem:[#allocation5 + $0x19a8] sm:$0xff]
    %v2324 = vld [vmem:[#allocation5 + $0x19b0] sm:$0xff]
    %v2325 = vld [vmem:[#allocation5 + $0x19b8] sm:$0xff]
    %v2326 = vld [vmem:[#allocation5 + $0x19c0] sm:$0xff]
    %v2327 = vld [vmem:[#allocation5 + $0x19c8] sm:$0xff]
    %v2328 = vld [vmem:[#allocation5 + $0x19d0] sm:$0xff]
    %v2329 = vld [vmem:[#allocation5 + $0x19d8] sm:$0x1]
    %v2330 = vperm.slane %v2329, 0
    %2331 = vmatpush.msra.mxu0 %v2328
    %2332 = vmatpush.msra.mxu0 %v2327
    %2333 = vmatpush.msra.mxu0 %v2326
    %2334 = vmatpush.msra.mxu0 %v2325
    %2335 = vmatpush.msra.mxu0 %v2324
    %2336 = vmatpush.msra.mxu0 %v2323
    %2337 = vmatpush.msra.mxu0 %v2322
    %2338 = vmatpush.msra.mxu0 %v2321
    %2339 = vmatpush.msra.mxu0 %v2320
    %2340 = vmatpush.msra.mxu0 %v2319
    %2341 = vmatpush.msra.mxu0 %v2318
    %2342 = vmatpush.msra.mxu0 %v2317
    %2343 = vmatpush.msra.mxu0 %v2316
    %2344 = vmatpush.msra.mxu0 %v2315
    %2345 = vmatpush.msra.mxu0 %v2314
    %2346 = vmatpush.msra.mxu0 %v2313
    %2347 = vmatmul.f32.gmra.mxu0 %v2259
    %v2348 = vpop.f32.mrf.mxu0
    %v2349 = vadd.f32 %v2330, %v2348
    %2350 = vdwg.mxu0
    %v2351 = vmul.f32 %v2206, %v2312
    %v2352 = vmul.f32 %v994, %v2349
    %v2353 = vld [vmem:[#allocation5 + $0x19e0] sm:$0xff]
    %v2354 = vld [vmem:[#allocation5 + $0x19e8] sm:$0xff]
    %v2355 = vld [vmem:[#allocation5 + $0x19f0] sm:$0xff]
    %v2356 = vld [vmem:[#allocation5 + $0x19f8] sm:$0xff]
    %v2357 = vld [vmem:[#allocation5 + $0x1a00] sm:$0xff]
    %v2358 = vld [vmem:[#allocation5 + $0x1a08] sm:$0xff]
    %v2359 = vld [vmem:[#allocation5 + $0x1a10] sm:$0xff]
    %v2360 = vld [vmem:[#allocation5 + $0x1a18] sm:$0xff]
    %v2361 = vld [vmem:[#allocation5 + $0x1a20] sm:$0xff]
    %v2362 = vld [vmem:[#allocation5 + $0x1a28] sm:$0xff]
    %v2363 = vld [vmem:[#allocation5 + $0x1a30] sm:$0xff]
    %v2364 = vld [vmem:[#allocation5 + $0x1a38] sm:$0xff]
    %v2365 = vld [vmem:[#allocation5 + $0x1a40] sm:$0xff]
    %v2366 = vld [vmem:[#allocation5 + $0x1a48] sm:$0xff]
    %v2367 = vld [vmem:[#allocation5 + $0x1a50] sm:$0xff]
    %v2368 = vld [vmem:[#allocation5 + $0x1a58] sm:$0xff]
    %v2369 = vld [vmem:[#allocation5 + $0x1a60] sm:$0xff]
    %v2370 = vld [vmem:[#allocation5 + $0x1a68] sm:$0xff]
    %v2371 = vld [vmem:[#allocation5 + $0x1a70] sm:$0xff]
    %v2372 = vld [vmem:[#allocation5 + $0x1a78] sm:$0xff]
    %v2373 = vld [vmem:[#allocation5 + $0x1a80] sm:$0xff]
    %v2374 = vld [vmem:[#allocation5 + $0x1a88] sm:$0xff]
    %v2375 = vld [vmem:[#allocation5 + $0x1a90] sm:$0xff]
    %v2376 = vld [vmem:[#allocation5 + $0x1a98] sm:$0xff]
    %v2377 = vld [vmem:[#allocation5 + $0x1aa0] sm:$0xff]
    %v2378 = vld [vmem:[#allocation5 + $0x1aa8] sm:$0xff]
    %v2379 = vld [vmem:[#allocation5 + $0x1ab0] sm:$0xff]
    %v2380 = vld [vmem:[#allocation5 + $0x1ab8] sm:$0xff]
    %v2381 = vld [vmem:[#allocation5 + $0x1ac0] sm:$0xff]
    %v2382 = vld [vmem:[#allocation5 + $0x1ac8] sm:$0xff]
    %v2383 = vld [vmem:[#allocation5 + $0x1ad0] sm:$0xff]
    %v2384 = vld [vmem:[#allocation5 + $0x1ad8] sm:$0xff]
    %v2385 = vld [vmem:[#allocation5 + $0x1ae0] sm:$0xff]
    %v2386 = vld [vmem:[#allocation5 + $0x1ae8] sm:$0xff]
    %v2387 = vld [vmem:[#allocation5 + $0x1af0] sm:$0xff]
    %v2388 = vld [vmem:[#allocation5 + $0x1af8] sm:$0xff]
    %v2389 = vld [vmem:[#allocation5 + $0x1b00] sm:$0xff]
    %v2390 = vld [vmem:[#allocation5 + $0x1b08] sm:$0xff]
    %v2391 = vld [vmem:[#allocation5 + $0x1b10] sm:$0xff]
    %v2392 = vld [vmem:[#allocation5 + $0x1b18] sm:$0xff]
    %v2393 = vld [vmem:[#allocation5 + $0x1b20] sm:$0xff]
    %v2394 = vld [vmem:[#allocation5 + $0x1b28] sm:$0xff]
    %v2395 = vld [vmem:[#allocation5 + $0x1b30] sm:$0xff]
    %v2396 = vld [vmem:[#allocation5 + $0x1b38] sm:$0xff]
    %v2397 = vld [vmem:[#allocation5 + $0x1b40] sm:$0xff]
    %v2398 = vld [vmem:[#allocation5 + $0x1b48] sm:$0xff]
    %v2399 = vld [vmem:[#allocation5 + $0x1b50] sm:$0xff]
    %v2400 = vld [vmem:[#allocation5 + $0x1b58] sm:$0xff]
    %v2401 = vld [vmem:[#allocation5 + $0x1b60] sm:$0x1]
    %v2402 = vperm.slane %v2401, 0
    %2403 = vmatpush.msra.mxu0 %v2368
    %2404 = vmatpush.msra.mxu0 %v2367
    %2405 = vmatpush.msra.mxu0 %v2366
    %2406 = vmatpush.msra.mxu0 %v2365
    %2407 = vmatpush.msra.mxu0 %v2364
    %2408 = vmatpush.msra.mxu0 %v2363
    %2409 = vmatpush.msra.mxu0 %v2362
    %2410 = vmatpush.msra.mxu0 %v2361
    %2411 = vmatpush.msra.mxu0 %v2360
    %2412 = vmatpush.msra.mxu0 %v2359
    %2413 = vmatpush.msra.mxu0 %v2358
    %2414 = vmatpush.msra.mxu0 %v2357
    %2415 = vmatpush.msra.mxu0 %v2356
    %2416 = vmatpush.msra.mxu0 %v2355
    %2417 = vmatpush.msra.mxu0 %v2354
    %2418 = vmatpush.msra.mxu0 %v2353
    %2419 = vmatmul.f32.gmra.mxu0 %v2259
    %v2420 = vpop.f32.mrf.mxu0
    %v2421 = vadd.f32 %v2402, %v2420
    %2422 = vdwg.mxu0
    %2423 = vmatpush.msra.mxu0 %v2384
    %2424 = vmatpush.msra.mxu0 %v2383
    %2425 = vmatpush.msra.mxu0 %v2382
    %2426 = vmatpush.msra.mxu0 %v2381
    %2427 = vmatpush.msra.mxu0 %v2380
    %2428 = vmatpush.msra.mxu0 %v2379
    %2429 = vmatpush.msra.mxu0 %v2378
    %2430 = vmatpush.msra.mxu0 %v2377
    %2431 = vmatpush.msra.mxu0 %v2376
    %2432 = vmatpush.msra.mxu0 %v2375
    %2433 = vmatpush.msra.mxu0 %v2374
    %2434 = vmatpush.msra.mxu0 %v2373
    %2435 = vmatpush.msra.mxu0 %v2372
    %2436 = vmatpush.msra.mxu0 %v2371
    %2437 = vmatpush.msra.mxu0 %v2370
    %2438 = vmatpush.msra.mxu0 %v2369
    %2439 = vmatmul.f32.gmra.mxu0 %v2351
    %v2440 = vpop.f32.mrf.mxu0
    %v2441 = vadd.f32 %v2421, %v2440
    %2442 = vdwg.mxu0
    %2443 = vmatpush.msra.mxu0 %v2400
    %2444 = vmatpush.msra.mxu0 %v2399
    %2445 = vmatpush.msra.mxu0 %v2398
    %2446 = vmatpush.msra.mxu0 %v2397
    %2447 = vmatpush.msra.mxu0 %v2396
    %2448 = vmatpush.msra.mxu0 %v2395
    %2449 = vmatpush.msra.mxu0 %v2394
    %2450 = vmatpush.msra.mxu0 %v2393
    %2451 = vmatpush.msra.mxu0 %v2392
    %2452 = vmatpush.msra.mxu0 %v2391
    %2453 = vmatpush.msra.mxu0 %v2390
    %2454 = vmatpush.msra.mxu0 %v2389
    %2455 = vmatpush.msra.mxu0 %v2388
    %2456 = vmatpush.msra.mxu0 %v2387
    %2457 = vmatpush.msra.mxu0 %v2386
    %2458 = vmatpush.msra.mxu0 %v2385
    %2459 = vmatmul.f32.gmra.mxu0 %v2352
    %v2460 = vpop.f32.mrf.mxu0
    %v2461 = vadd.f32 %v2441, %v2460
    %2462 = vdwg.mxu0
    %v2463 = vmax.f32 %v2461, 0.0
    %v2464 = vand.u32 2147483647, %v2461
    %v2465 = vsub.f32 0.0, %v2464
    %v2466 = vmul.f32 %v2465, 1.442695
    %v2467 = vpow.pop %v2466
    %v2468 = vadd.f32 %v2467, 1.0
    %v2469 = vlog2.pop %v2468
    %v2470 = vmul.f32 %v2469, 0.6931472
    %v2471 = vmul.f32 -0.5, %v2467
    %v2472 = vadd.f32 %v2471, 1.0
    %v2473 = vmul.f32 %v2472, %v2467
    %v2474 = vand.u32 2147483647, %v2467
    %vm2475 = vcmp.lt.f32.partialorder %v2474, 0.0004427343
    %v2476 = vsel %vm2475, %v2473, %v2470
    %v2477 = vadd.f32 %v2463, %v2476
    %v2478 = vld [vmem:[#allocation5 + $0x1b68] sm:$0xff]
    %v2479 = vsub.f32 0.0, %v2461
    %v2480 = vmul.f32 %v2479, 1.442695
    %v2481 = vpow.pop %v2480
    %v2482 = vadd.f32 %v2481, 1.0
    %v2483 = vrcp.pop %v2482
    %v2484 = vmul.f32 %v2482, %v2483
    %v2485 = vsub.f32 1.0, %v2484
    %v2486 = vmul.f32 %v2483, %v2485
    %v2487 = vadd.f32 %v2483, %v2486
    %vm2488 = vweird.f32 %v2482
    %vm2489 = vweird.f32 %v2483
    %vm2490 = vmor %vm2488, %vm2489
    %v2491 = vsel %vm2490, %v2483, %v2487
    %v2492 = vand.u32 2147483647, %v2482
    %vm2493 = vcmp.eq.f32.partialorder %v2492, 8.507059e+37
    %v2494 = vand.u32 %v2482, 2147483648
    %v2495 = vor.u32 1.1754944e-38, %v2494
    %v2496 = vsel %vm2493, %v2495, %v2491
    %v2497 = vmul.f32 1.0, %v2496
    %2499 = vset.pattern.permute.xlu0 0
    %2500 = vperm.xlu0 %2499, %v2497
    %v2501 = vpop.permute.xlu0 %2500
    %v2503 = vperm.slane %v2478, 1
    %v2504 = vmul.f32 %v2501, %v2503
    %v2505 = vmul.f32 %v2504, %v2349
    %v2506 = vperm.slane %v2478, 0
    %v2507 = vmul.f32 %v2501, %v2506
    %v2508 = vmul.f32 %v2507, %v2312
    %v2509 = vsub.f32 0.0, %v2190
    %v2510 = vmul.f32 %v2509, 1.442695
    %v2511 = vpow.pop %v2510
    %v2512 = vadd.f32 %v2511, 1.0
    %v2513 = vrcp.pop %v2512
    %v2514 = vmul.f32 %v2512, %v2513
    %v2515 = vsub.f32 1.0, %v2514
    %v2516 = vmul.f32 %v2513, %v2515
    %v2517 = vadd.f32 %v2513, %v2516
    %vm2518 = vweird.f32 %v2512
    %vm2519 = vweird.f32 %v2513
    %vm2520 = vmor %vm2518, %vm2519
    %v2521 = vsel %vm2520, %v2513, %v2517
    %v2522 = vand.u32 2147483647, %v2512
    %vm2523 = vcmp.eq.f32.partialorder %v2522, 8.507059e+37
    %v2524 = vand.u32 %v2512, 2147483648
    %v2525 = vor.u32 1.1754944e-38, %v2524
    %v2526 = vsel %vm2523, %v2525, %v2521
    %v2527 = vmul.f32 1.0, %v2526
    %v2528 = vmul.f32 %v2508, %v2527
    %v2529 = vld [vmem:[#allocation5 + $0x1e70] sm:$0xff]
    %v2530 = vld [vmem:[#allocation5 + $0x1e78] sm:$0xff]
    %v2531 = vld [vmem:[#allocation5 + $0x1e80] sm:$0xff]
    %v2532 = vld [vmem:[#allocation5 + $0x1e88] sm:$0xff]
    %v2533 = vld [vmem:[#allocation5 + $0x1e90] sm:$0xff]
    %v2534 = vld [vmem:[#allocation5 + $0x1e98] sm:$0xff]
    %v2535 = vld [vmem:[#allocation5 + $0x1ea0] sm:$0xff]
    %v2536 = vld [vmem:[#allocation5 + $0x1ea8] sm:$0xff]
    %v2537 = vld [vmem:[#allocation5 + $0x1eb0] sm:$0xff]
    %v2538 = vld [vmem:[#allocation5 + $0x1eb8] sm:$0xff]
    %v2539 = vld [vmem:[#allocation5 + $0x1ec0] sm:$0xff]
    %v2540 = vld [vmem:[#allocation5 + $0x1ec8] sm:$0xff]
    %v2541 = vld [vmem:[#allocation5 + $0x1ed0] sm:$0xff]
    %v2542 = vld [vmem:[#allocation5 + $0x1ed8] sm:$0xff]
    %v2543 = vld [vmem:[#allocation5 + $0x1ee0] sm:$0xff]
    %v2544 = vld [vmem:[#allocation5 + $0x1ee8] sm:$0xff]
    %2545 = vmatpush.msra.mxu0 %v2544
    %2546 = vmatpush.msra.mxu0 %v2543
    %2547 = vmatpush.msra.mxu0 %v2542
    %2548 = vmatpush.msra.mxu0 %v2541
    %2549 = vmatpush.msra.mxu0 %v2540
    %2550 = vmatpush.msra.mxu0 %v2539
    %2551 = vmatpush.msra.mxu0 %v2538
    %2552 = vmatpush.msra.mxu0 %v2537
    %2553 = vmatpush.msra.mxu0 %v2536
    %2554 = vmatpush.msra.mxu0 %v2535
    %2555 = vmatpush.msra.mxu0 %v2534
    %2556 = vmatpush.msra.mxu0 %v2533
    %2557 = vmatpush.msra.mxu0 %v2532
    %2558 = vmatpush.msra.mxu0 %v2531
    %2559 = vmatpush.msra.mxu0 %v2530
    %2560 = vmatpush.msra.mxu0 %v2529
    %2561 = vmatmul.f32.gmra.mxu0 %v2528
    %v2562 = vpop.f32.mrf.mxu0
    %v2563 = vadd.f32 0.0, %v2562
    %2564 = vdwg.mxu0
    %v2565 = vmul.f32 %v2563, %v2078
    %v2566 = vadd.f32 %v2505, %v2565
    %v2567 = vld [vmem:[#allocation5 + $0x1ef0] sm:$0xff]
    %v2568 = vld [vmem:[#allocation5 + $0x1ef8] sm:$0xff]
    %v2569 = vld [vmem:[#allocation5 + $0x1f00] sm:$0xff]
    %v2570 = vld [vmem:[#allocation5 + $0x1f08] sm:$0xff]
    %v2571 = vld [vmem:[#allocation5 + $0x1f10] sm:$0xff]
    %v2572 = vld [vmem:[#allocation5 + $0x1f18] sm:$0xff]
    %v2573 = vld [vmem:[#allocation5 + $0x1f20] sm:$0xff]
    %v2574 = vld [vmem:[#allocation5 + $0x1f28] sm:$0xff]
    %v2575 = vld [vmem:[#allocation5 + $0x1f30] sm:$0xff]
    %v2576 = vld [vmem:[#allocation5 + $0x1f38] sm:$0xff]
    %v2577 = vld [vmem:[#allocation5 + $0x1f40] sm:$0xff]
    %v2578 = vld [vmem:[#allocation5 + $0x1f48] sm:$0xff]
    %v2579 = vld [vmem:[#allocation5 + $0x1f50] sm:$0xff]
    %v2580 = vld [vmem:[#allocation5 + $0x1f58] sm:$0xff]
    %v2581 = vld [vmem:[#allocation5 + $0x1f60] sm:$0xff]
    %v2582 = vld [vmem:[#allocation5 + $0x1f68] sm:$0xff]
    %2583 = vmatpush.msra.mxu0 %v2582
    %2584 = vmatpush.msra.mxu0 %v2581
    %2585 = vmatpush.msra.mxu0 %v2580
    %2586 = vmatpush.msra.mxu0 %v2579
    %2587 = vmatpush.msra.mxu0 %v2578
    %2588 = vmatpush.msra.mxu0 %v2577
    %2589 = vmatpush.msra.mxu0 %v2576
    %2590 = vmatpush.msra.mxu0 %v2575
    %2591 = vmatpush.msra.mxu0 %v2574
    %2592 = vmatpush.msra.mxu0 %v2573
    %2593 = vmatpush.msra.mxu0 %v2572
    %2594 = vmatpush.msra.mxu0 %v2571
    %2595 = vmatpush.msra.mxu0 %v2570
    %2596 = vmatpush.msra.mxu0 %v2569
    %2597 = vmatpush.msra.mxu0 %v2568
    %2598 = vmatpush.msra.mxu0 %v2567
    %2599 = vmatmul.f32.gmra.mxu0 %v2528
    %v2600 = vpop.f32.mrf.mxu0
    %v2601 = vadd.f32 0.0, %v2600
    %2602 = vdwg.mxu0
    %v2603 = vmul.f32 %v2601, %v2041
    %v2604 = vsub.f32 0.0, %v1919
    %v2605 = vmul.f32 %v2604, 1.442695
    %v2606 = vpow.pop %v2605
    %v2607 = vadd.f32 %v2606, 1.0
    %v2608 = vrcp.pop %v2607
    %v2609 = vmul.f32 %v2607, %v2608
    %v2610 = vsub.f32 1.0, %v2609
    %v2611 = vmul.f32 %v2608, %v2610
    %v2612 = vadd.f32 %v2608, %v2611
    %vm2613 = vweird.f32 %v2607
    %vm2614 = vweird.f32 %v2608
    %vm2615 = vmor %vm2613, %vm2614
    %v2616 = vsel %vm2615, %v2608, %v2612
    %v2617 = vand.u32 2147483647, %v2607
    %vm2618 = vcmp.eq.f32.partialorder %v2617, 8.507059e+37
    %v2619 = vand.u32 %v2607, 2147483648
    %v2620 = vor.u32 1.1754944e-38, %v2619
    %v2621 = vsel %vm2618, %v2620, %v2616
    %v2622 = vmul.f32 1.0, %v2621
    %v2623 = vmul.f32 %v2603, %v2622
    %v2624 = vld [vmem:[#allocation5 + $0x1d70] sm:$0xff]
    %v2625 = vld [vmem:[#allocation5 + $0x1d78] sm:$0xff]
    %v2626 = vld [vmem:[#allocation5 + $0x1d80] sm:$0xff]
    %v2627 = vld [vmem:[#allocation5 + $0x1d88] sm:$0xff]
    %v2628 = vld [vmem:[#allocation5 + $0x1d90] sm:$0xff]
    %v2629 = vld [vmem:[#allocation5 + $0x1d98] sm:$0xff]
    %v2630 = vld [vmem:[#allocation5 + $0x1da0] sm:$0xff]
    %v2631 = vld [vmem:[#allocation5 + $0x1da8] sm:$0xff]
    %v2632 = vld [vmem:[#allocation5 + $0x1db0] sm:$0xff]
    %v2633 = vld [vmem:[#allocation5 + $0x1db8] sm:$0xff]
    %v2634 = vld [vmem:[#allocation5 + $0x1dc0] sm:$0xff]
    %v2635 = vld [vmem:[#allocation5 + $0x1dc8] sm:$0xff]
    %v2636 = vld [vmem:[#allocation5 + $0x1dd0] sm:$0xff]
    %v2637 = vld [vmem:[#allocation5 + $0x1dd8] sm:$0xff]
    %v2638 = vld [vmem:[#allocation5 + $0x1de0] sm:$0xff]
    %v2639 = vld [vmem:[#allocation5 + $0x1de8] sm:$0xff]
    %2640 = vmatpush.msra.mxu0 %v2639
    %2641 = vmatpush.msra.mxu0 %v2638
    %2642 = vmatpush.msra.mxu0 %v2637
    %2643 = vmatpush.msra.mxu0 %v2636
    %2644 = vmatpush.msra.mxu0 %v2635
    %2645 = vmatpush.msra.mxu0 %v2634
    %2646 = vmatpush.msra.mxu0 %v2633
    %2647 = vmatpush.msra.mxu0 %v2632
    %2648 = vmatpush.msra.mxu0 %v2631
    %2649 = vmatpush.msra.mxu0 %v2630
    %2650 = vmatpush.msra.mxu0 %v2629
    %2651 = vmatpush.msra.mxu0 %v2628
    %2652 = vmatpush.msra.mxu0 %v2627
    %2653 = vmatpush.msra.mxu0 %v2626
    %2654 = vmatpush.msra.mxu0 %v2625
    %2655 = vmatpush.msra.mxu0 %v2624
    %2656 = vmatmul.f32.gmra.mxu0 %v2623
    %v2657 = vpop.f32.mrf.mxu0
    %v2658 = vadd.f32 0.0, %v2657
    %2659 = vdwg.mxu0
    %v2660 = vmul.f32 %v2658, %v1807
    %v2661 = vadd.f32 %v2566, %v2660
    %v2662 = vld [vmem:[#allocation5 + $0x1df0] sm:$0xff]
    %v2663 = vld [vmem:[#allocation5 + $0x1df8] sm:$0xff]
    %v2664 = vld [vmem:[#allocation5 + $0x1e00] sm:$0xff]
    %v2665 = vld [vmem:[#allocation5 + $0x1e08] sm:$0xff]
    %v2666 = vld [vmem:[#allocation5 + $0x1e10] sm:$0xff]
    %v2667 = vld [vmem:[#allocation5 + $0x1e18] sm:$0xff]
    %v2668 = vld [vmem:[#allocation5 + $0x1e20] sm:$0xff]
    %v2669 = vld [vmem:[#allocation5 + $0x1e28] sm:$0xff]
    %v2670 = vld [vmem:[#allocation5 + $0x1e30] sm:$0xff]
    %v2671 = vld [vmem:[#allocation5 + $0x1e38] sm:$0xff]
    %v2672 = vld [vmem:[#allocation5 + $0x1e40] sm:$0xff]
    %v2673 = vld [vmem:[#allocation5 + $0x1e48] sm:$0xff]
    %v2674 = vld [vmem:[#allocation5 + $0x1e50] sm:$0xff]
    %v2675 = vld [vmem:[#allocation5 + $0x1e58] sm:$0xff]
    %v2676 = vld [vmem:[#allocation5 + $0x1e60] sm:$0xff]
    %v2677 = vld [vmem:[#allocation5 + $0x1e68] sm:$0xff]
    %2678 = vmatpush.msra.mxu0 %v2677
    %2679 = vmatpush.msra.mxu0 %v2676
    %2680 = vmatpush.msra.mxu0 %v2675
    %2681 = vmatpush.msra.mxu0 %v2674
    %2682 = vmatpush.msra.mxu0 %v2673
    %2683 = vmatpush.msra.mxu0 %v2672
    %2684 = vmatpush.msra.mxu0 %v2671
    %2685 = vmatpush.msra.mxu0 %v2670
    %2686 = vmatpush.msra.mxu0 %v2669
    %2687 = vmatpush.msra.mxu0 %v2668
    %2688 = vmatpush.msra.mxu0 %v2667
    %2689 = vmatpush.msra.mxu0 %v2666
    %2690 = vmatpush.msra.mxu0 %v2665
    %2691 = vmatpush.msra.mxu0 %v2664
    %2692 = vmatpush.msra.mxu0 %v2663
    %2693 = vmatpush.msra.mxu0 %v2662
    %2694 = vmatmul.f32.gmra.mxu0 %v2623
    %v2695 = vpop.f32.mrf.mxu0
    %v2696 = vadd.f32 0.0, %v2695
    %2697 = vdwg.mxu0
    %v2698 = vmul.f32 %v2696, %v1770
    %v2699 = vsub.f32 0.0, %v1648
    %v2700 = vmul.f32 %v2699, 1.442695
    %v2701 = vpow.pop %v2700
    %v2702 = vadd.f32 %v2701, 1.0
    %v2703 = vrcp.pop %v2702
    %v2704 = vmul.f32 %v2702, %v2703
    %v2705 = vsub.f32 1.0, %v2704
    %v2706 = vmul.f32 %v2703, %v2705
    %v2707 = vadd.f32 %v2703, %v2706
    %vm2708 = vweird.f32 %v2702
    %vm2709 = vweird.f32 %v2703
    %vm2710 = vmor %vm2708, %vm2709
    %v2711 = vsel %vm2710, %v2703, %v2707
    %v2712 = vand.u32 2147483647, %v2702
    %vm2713 = vcmp.eq.f32.partialorder %v2712, 8.507059e+37
    %v2714 = vand.u32 %v2702, 2147483648
    %v2715 = vor.u32 1.1754944e-38, %v2714
    %v2716 = vsel %vm2713, %v2715, %v2711
    %v2717 = vmul.f32 1.0, %v2716
    %v2718 = vmul.f32 %v2698, %v2717
    %v2719 = vld [vmem:[#allocation5 + $0x1c70] sm:$0xff]
    %v2720 = vld [vmem:[#allocation5 + $0x1c78] sm:$0xff]
    %v2721 = vld [vmem:[#allocation5 + $0x1c80] sm:$0xff]
    %v2722 = vld [vmem:[#allocation5 + $0x1c88] sm:$0xff]
    %v2723 = vld [vmem:[#allocation5 + $0x1c90] sm:$0xff]
    %v2724 = vld [vmem:[#allocation5 + $0x1c98] sm:$0xff]
    %v2725 = vld [vmem:[#allocation5 + $0x1ca0] sm:$0xff]
    %v2726 = vld [vmem:[#allocation5 + $0x1ca8] sm:$0xff]
    %v2727 = vld [vmem:[#allocation5 + $0x1cb0] sm:$0xff]
    %v2728 = vld [vmem:[#allocation5 + $0x1cb8] sm:$0xff]
    %v2729 = vld [vmem:[#allocation5 + $0x1cc0] sm:$0xff]
    %v2730 = vld [vmem:[#allocation5 + $0x1cc8] sm:$0xff]
    %v2731 = vld [vmem:[#allocation5 + $0x1cd0] sm:$0xff]
    %v2732 = vld [vmem:[#allocation5 + $0x1cd8] sm:$0xff]
    %v2733 = vld [vmem:[#allocation5 + $0x1ce0] sm:$0xff]
    %v2734 = vld [vmem:[#allocation5 + $0x1ce8] sm:$0xff]
    %2735 = vmatpush.msra.mxu0 %v2734
    %2736 = vmatpush.msra.mxu0 %v2733
    %2737 = vmatpush.msra.mxu0 %v2732
    %2738 = vmatpush.msra.mxu0 %v2731
    %2739 = vmatpush.msra.mxu0 %v2730
    %2740 = vmatpush.msra.mxu0 %v2729
    %2741 = vmatpush.msra.mxu0 %v2728
    %2742 = vmatpush.msra.mxu0 %v2727
    %2743 = vmatpush.msra.mxu0 %v2726
    %2744 = vmatpush.msra.mxu0 %v2725
    %2745 = vmatpush.msra.mxu0 %v2724
    %2746 = vmatpush.msra.mxu0 %v2723
    %2747 = vmatpush.msra.mxu0 %v2722
    %2748 = vmatpush.msra.mxu0 %v2721
    %2749 = vmatpush.msra.mxu0 %v2720
    %2750 = vmatpush.msra.mxu0 %v2719
    %2751 = vmatmul.f32.gmra.mxu0 %v2718
    %v2752 = vpop.f32.mrf.mxu0
    %v2753 = vadd.f32 0.0, %v2752
    %2754 = vdwg.mxu0
    %v2755 = vmul.f32 %v2753, %v1536
    %v2756 = vadd.f32 %v2661, %v2755
    %v2757 = vld [vmem:[#allocation5 + $0x1cf0] sm:$0xff]
    %v2758 = vld [vmem:[#allocation5 + $0x1cf8] sm:$0xff]
    %v2759 = vld [vmem:[#allocation5 + $0x1d00] sm:$0xff]
    %v2760 = vld [vmem:[#allocation5 + $0x1d08] sm:$0xff]
    %v2761 = vld [vmem:[#allocation5 + $0x1d10] sm:$0xff]
    %v2762 = vld [vmem:[#allocation5 + $0x1d18] sm:$0xff]
    %v2763 = vld [vmem:[#allocation5 + $0x1d20] sm:$0xff]
    %v2764 = vld [vmem:[#allocation5 + $0x1d28] sm:$0xff]
    %v2765 = vld [vmem:[#allocation5 + $0x1d30] sm:$0xff]
    %v2766 = vld [vmem:[#allocation5 + $0x1d38] sm:$0xff]
    %v2767 = vld [vmem:[#allocation5 + $0x1d40] sm:$0xff]
    %v2768 = vld [vmem:[#allocation5 + $0x1d48] sm:$0xff]
    %v2769 = vld [vmem:[#allocation5 + $0x1d50] sm:$0xff]
    %v2770 = vld [vmem:[#allocation5 + $0x1d58] sm:$0xff]
    %v2771 = vld [vmem:[#allocation5 + $0x1d60] sm:$0xff]
    %v2772 = vld [vmem:[#allocation5 + $0x1d68] sm:$0xff]
    %2773 = vmatpush.msra.mxu0 %v2772
    %2774 = vmatpush.msra.mxu0 %v2771
    %2775 = vmatpush.msra.mxu0 %v2770
    %2776 = vmatpush.msra.mxu0 %v2769
    %2777 = vmatpush.msra.mxu0 %v2768
    %2778 = vmatpush.msra.mxu0 %v2767
    %2779 = vmatpush.msra.mxu0 %v2766
    %2780 = vmatpush.msra.mxu0 %v2765
    %2781 = vmatpush.msra.mxu0 %v2764
    %2782 = vmatpush.msra.mxu0 %v2763
    %2783 = vmatpush.msra.mxu0 %v2762
    %2784 = vmatpush.msra.mxu0 %v2761
    %2785 = vmatpush.msra.mxu0 %v2760
    %2786 = vmatpush.msra.mxu0 %v2759
    %2787 = vmatpush.msra.mxu0 %v2758
    %2788 = vmatpush.msra.mxu0 %v2757
    %2789 = vmatmul.f32.gmra.mxu0 %v2718
    %v2790 = vpop.f32.mrf.mxu0
    %v2791 = vadd.f32 0.0, %v2790
    %2792 = vdwg.mxu0
    %v2793 = vmul.f32 %v2791, %v1499
    %v2794 = vsub.f32 0.0, %v1377
    %v2795 = vmul.f32 %v2794, 1.442695
    %v2796 = vpow.pop %v2795
    %v2797 = vadd.f32 %v2796, 1.0
    %v2798 = vrcp.pop %v2797
    %v2799 = vmul.f32 %v2797, %v2798
    %v2800 = vsub.f32 1.0, %v2799
    %v2801 = vmul.f32 %v2798, %v2800
    %v2802 = vadd.f32 %v2798, %v2801
    %vm2803 = vweird.f32 %v2797
    %vm2804 = vweird.f32 %v2798
    %vm2805 = vmor %vm2803, %vm2804
    %v2806 = vsel %vm2805, %v2798, %v2802
    %v2807 = vand.u32 2147483647, %v2797
    %vm2808 = vcmp.eq.f32.partialorder %v2807, 8.507059e+37
    %v2809 = vand.u32 %v2797, 2147483648
    %v2810 = vor.u32 1.1754944e-38, %v2809
    %v2811 = vsel %vm2808, %v2810, %v2806
    %v2812 = vmul.f32 1.0, %v2811
    %v2813 = vmul.f32 %v2793, %v2812
    %v2814 = vld [vmem:[#allocation5 + $0x1b70] sm:$0xff]
    %v2815 = vld [vmem:[#allocation5 + $0x1b78] sm:$0xff]
    %v2816 = vld [vmem:[#allocation5 + $0x1b80] sm:$0xff]
    %v2817 = vld [vmem:[#allocation5 + $0x1b88] sm:$0xff]
    %v2818 = vld [vmem:[#allocation5 + $0x1b90] sm:$0xff]
    %v2819 = vld [vmem:[#allocation5 + $0x1b98] sm:$0xff]
    %v2820 = vld [vmem:[#allocation5 + $0x1ba0] sm:$0xff]
    %v2821 = vld [vmem:[#allocation5 + $0x1ba8] sm:$0xff]
    %v2822 = vld [vmem:[#allocation5 + $0x1bb0] sm:$0xff]
    %v2823 = vld [vmem:[#allocation5 + $0x1bb8] sm:$0xff]
    %v2824 = vld [vmem:[#allocation5 + $0x1bc0] sm:$0xff]
    %v2825 = vld [vmem:[#allocation5 + $0x1bc8] sm:$0xff]
    %v2826 = vld [vmem:[#allocation5 + $0x1bd0] sm:$0xff]
    %v2827 = vld [vmem:[#allocation5 + $0x1bd8] sm:$0xff]
    %v2828 = vld [vmem:[#allocation5 + $0x1be0] sm:$0xff]
    %v2829 = vld [vmem:[#allocation5 + $0x1be8] sm:$0xff]
    %2830 = vmatpush.msra.mxu0 %v2829
    %2831 = vmatpush.msra.mxu0 %v2828
    %2832 = vmatpush.msra.mxu0 %v2827
    %2833 = vmatpush.msra.mxu0 %v2826
    %2834 = vmatpush.msra.mxu0 %v2825
    %2835 = vmatpush.msra.mxu0 %v2824
    %2836 = vmatpush.msra.mxu0 %v2823
    %2837 = vmatpush.msra.mxu0 %v2822
    %2838 = vmatpush.msra.mxu0 %v2821
    %2839 = vmatpush.msra.mxu0 %v2820
    %2840 = vmatpush.msra.mxu0 %v2819
    %2841 = vmatpush.msra.mxu0 %v2818
    %2842 = vmatpush.msra.mxu0 %v2817
    %2843 = vmatpush.msra.mxu0 %v2816
    %2844 = vmatpush.msra.mxu0 %v2815
    %2845 = vmatpush.msra.mxu0 %v2814
    %2846 = vmatmul.f32.gmra.mxu0 %v2813
    %v2847 = vpop.f32.mrf.mxu0
    %v2848 = vadd.f32 0.0, %v2847
    %2849 = vdwg.mxu0
    %v2850 = vmul.f32 %v2848, %v1265
    %v2851 = vadd.f32 %v2756, %v2850
    %v2852 = vld [vmem:[#allocation5 + $0x1bf0] sm:$0xff]
    %v2853 = vld [vmem:[#allocation5 + $0x1bf8] sm:$0xff]
    %v2854 = vld [vmem:[#allocation5 + $0x1c00] sm:$0xff]
    %v2855 = vld [vmem:[#allocation5 + $0x1c08] sm:$0xff]
    %v2856 = vld [vmem:[#allocation5 + $0x1c10] sm:$0xff]
    %v2857 = vld [vmem:[#allocation5 + $0x1c18] sm:$0xff]
    %v2858 = vld [vmem:[#allocation5 + $0x1c20] sm:$0xff]
    %v2859 = vld [vmem:[#allocation5 + $0x1c28] sm:$0xff]
    %v2860 = vld [vmem:[#allocation5 + $0x1c30] sm:$0xff]
    %v2861 = vld [vmem:[#allocation5 + $0x1c38] sm:$0xff]
    %v2862 = vld [vmem:[#allocation5 + $0x1c40] sm:$0xff]
    %v2863 = vld [vmem:[#allocation5 + $0x1c48] sm:$0xff]
    %v2864 = vld [vmem:[#allocation5 + $0x1c50] sm:$0xff]
    %v2865 = vld [vmem:[#allocation5 + $0x1c58] sm:$0xff]
    %v2866 = vld [vmem:[#allocation5 + $0x1c60] sm:$0xff]
    %v2867 = vld [vmem:[#allocation5 + $0x1c68] sm:$0xff]
    %2868 = vmatpush.msra.mxu0 %v2867
    %2869 = vmatpush.msra.mxu0 %v2866
    %2870 = vmatpush.msra.mxu0 %v2865
    %2871 = vmatpush.msra.mxu0 %v2864
    %2872 = vmatpush.msra.mxu0 %v2863
    %2873 = vmatpush.msra.mxu0 %v2862
    %2874 = vmatpush.msra.mxu0 %v2861
    %2875 = vmatpush.msra.mxu0 %v2860
    %2876 = vmatpush.msra.mxu0 %v2859
    %2877 = vmatpush.msra.mxu0 %v2858
    %2878 = vmatpush.msra.mxu0 %v2857
    %2879 = vmatpush.msra.mxu0 %v2856
    %2880 = vmatpush.msra.mxu0 %v2855
    %2881 = vmatpush.msra.mxu0 %v2854
    %2882 = vmatpush.msra.mxu0 %v2853
    %2883 = vmatpush.msra.mxu0 %v2852
    %2884 = vmatmul.f32.gmra.mxu0 %v2813
    %v2885 = vpop.f32.mrf.mxu0
    %v2886 = vadd.f32 0.0, %v2885
    %2887 = vdwg.mxu0
    %v2888 = vmul.f32 %v2886, %v1228
    %v2889 = vsub.f32 0.0, %v1106
    %v2890 = vmul.f32 %v2889, 1.442695
    %v2891 = vpow.pop %v2890
    %v2892 = vadd.f32 %v2891, 1.0
    %v2893 = vrcp.pop %v2892
    %v2894 = vmul.f32 %v2892, %v2893
    %v2895 = vsub.f32 1.0, %v2894
    %v2896 = vmul.f32 %v2893, %v2895
    %v2897 = vadd.f32 %v2893, %v2896
    %vm2898 = vweird.f32 %v2892
    %vm2899 = vweird.f32 %v2893
    %vm2900 = vmor %vm2898, %vm2899
    %v2901 = vsel %vm2900, %v2893, %v2897
    %v2902 = vand.u32 2147483647, %v2892
    %vm2903 = vcmp.eq.f32.partialorder %v2902, 8.507059e+37
    %v2904 = vand.u32 %v2892, 2147483648
    %v2905 = vor.u32 1.1754944e-38, %v2904
    %v2906 = vsel %vm2903, %v2905, %v2901
    %v2907 = vmul.f32 1.0, %v2906
    %v2908 = vmul.f32 %v2888, %v2907
    %v2909 = vld [vmem:[#allocation5 + $0x1f70] sm:$0xff]
    %v2910 = vld [vmem:[#allocation5 + $0x1f78] sm:$0xff]
    %v2911 = vld [vmem:[#allocation5 + $0x1f80] sm:$0xff]
    %v2912 = vld [vmem:[#allocation5 + $0x1f88] sm:$0xff]
    %v2913 = vld [vmem:[#allocation5 + $0x1f90] sm:$0xff]
    %v2914 = vld [vmem:[#allocation5 + $0x1f98] sm:$0xff]
    %v2915 = vld [vmem:[#allocation5 + $0x1fa0] sm:$0xff]
    %v2916 = vld [vmem:[#allocation5 + $0x1fa8] sm:$0xff]
    %v2917 = vld [vmem:[#allocation5 + $0x1fb0] sm:$0xff]
    %v2918 = vld [vmem:[#allocation5 + $0x1fb8] sm:$0xff]
    %v2919 = vld [vmem:[#allocation5 + $0x1fc0] sm:$0xff]
    %v2920 = vld [vmem:[#allocation5 + $0x1fc8] sm:$0xff]
    %v2921 = vld [vmem:[#allocation5 + $0x1fd0] sm:$0xff]
    %v2922 = vld [vmem:[#allocation5 + $0x1fd8] sm:$0xff]
    %v2923 = vld [vmem:[#allocation5 + $0x1fe0] sm:$0xff]
    %v2924 = vld [vmem:[#allocation5 + $0x1fe8] sm:$0xff]
    %2925 = vmatpush.msra.mxu0 %v2924
    %2926 = vmatpush.msra.mxu0 %v2923
    %2927 = vmatpush.msra.mxu0 %v2922
    %2928 = vmatpush.msra.mxu0 %v2921
    %2929 = vmatpush.msra.mxu0 %v2920
    %2930 = vmatpush.msra.mxu0 %v2919
    %2931 = vmatpush.msra.mxu0 %v2918
    %2932 = vmatpush.msra.mxu0 %v2917
    %2933 = vmatpush.msra.mxu0 %v2916
    %2934 = vmatpush.msra.mxu0 %v2915
    %2935 = vmatpush.msra.mxu0 %v2914
    %2936 = vmatpush.msra.mxu0 %v2913
    %2937 = vmatpush.msra.mxu0 %v2912
    %2938 = vmatpush.msra.mxu0 %v2911
    %2939 = vmatpush.msra.mxu0 %v2910
    %2940 = vmatpush.msra.mxu0 %v2909
    %2941 = vmatmul.f32.gmra.mxu0 %v2908
    %v2942 = vpop.f32.mrf.mxu0
    %v2943 = vadd.f32 0.0, %v2942
    %2944 = vdwg.mxu0
    %v2945 = vmul.f32 %v2943, %v1031
    %v2946 = vadd.f32 %v2851, %v2945
    %v2947 = vlaneseq
    %v2948 = vand.u32 %v2947, 127
    %vm2949 = vcmp.eq.s32.totalorder %v2948, 4
    %2951 = vset.pattern.permute.xlu0 0
    %2952 = vperm.xlu0 %2951, %v2477
    %v2953 = vpop.permute.xlu0 %2952
    %v2955 = vsel %vm2949, %v2953, 0.0
    %v2956 = vadd.f32 %v2946, %v2955
    %2957 = vst [vmem:[#allocation7] sm:$0xff] %v2956
    // Predicated region
    $region18: #{tpu_custom_call.1} parent=1 // pred_check
      _
    $region19: #{tpu_custom_call.1} parent=1 // pred_check_branch
      %2959 = sbr.rel (0) target = $region21
    $region20: #{tpu_custom_call.1} parent=1 // pred_region
      %2961 = vsyncadd [#allocation4], 0
      %s2963 = sshll.u32 [#allocation7], 4
      %s2964 = int_to_ptr.vmem [resolvable:$true] %s2963
      %s2965 = sshll.u32 %s2, 4
      %s2966 = int_to_ptr.hbm [resolvable:$true] %s2965
      %2968 = dma.vmem_to_hbm [thread:$0]  %s2964, 128, %s2966, [#allocation4]
    $region21: #{tpu_custom_call.1} parent=1 // pred_fallthru
      _
    // Predicated region
    $region22: #{tpu_custom_call.1} parent=1 // pred_check
      _
    $region23: #{tpu_custom_call.1} parent=1 // pred_check_branch
      %2970 = sbr.rel (0) target = $region25
    $region24: #{tpu_custom_call.1} parent=1 // pred_region
      %2972 = dma.done [#allocation4], 128
    $region25: #{tpu_custom_call.1} parent=1 // pred_fallthru
      _
    %2973 = vsyncpa [#allocation3], 1
    %2974 = vsyncpa [#allocation6], 1
    %2975 = vsyncpa [#allocation4], 1

</llo_original>
